<compile_context>
chip_gen: v6e
topology: v6e:2x2x1
jax: 0.10.0
libtpu: 0.0.40
codegen_flags: <defaults>
</compile_context>

<pallas_src>
import math
import jax
import jax.numpy as jnp
from jax.experimental import pallas as pl
from jax.experimental.pallas import tpu as pltpu

# ---- small, deterministic config -------------------------------------------------
LATENT_DIM  = 32
CHANNELS    = 1
IMG_SIZE    = 16
IMG_FLAT    = CHANNELS * IMG_SIZE * IMG_SIZE      # 256 (lane-dense: 2 x 128)
BATCH       = 8
BN_EPS      = 0.8
LRELU_SLOPE = 0.2

HIDDEN = [128, 256, 512, 1024]

# ---- packed small-vector buffer layout -------------------------------------------
# All segment lengths are multiples of 128, so every offset is a multiple of 128 and
# in-kernel lane slices stay aligned (no relayout).
VEC_SEGMENTS = (
    ("b1",  HIDDEN[0]),
    ("b2",  HIDDEN[1]), ("g2",  HIDDEN[1]), ("be2", HIDDEN[1]),
    ("b3",  HIDDEN[2]), ("g3",  HIDDEN[2]), ("be3", HIDDEN[2]),
    ("b4",  HIDDEN[3]), ("g4",  HIDDEN[3]), ("be4", HIDDEN[3]),
    ("b5",  IMG_FLAT),
)
VEC_OFFSETS = {}
_off = 0
for _name, _ln in VEC_SEGMENTS:
    VEC_OFFSETS[_name] = (_off, _ln)
    _off += _ln
VEC_TOTAL = _off  # 5760


def generator_kernel(z_ref, vec_ref,
                     w1_ref, w2_ref, w3_ref,
                     w4_hbm_ref, w5_hbm_ref,
                     out_ref,
                     w4_vmem, w5_vmem, dma_sems):
    """Whole MLP forward on one grid point.

    Small operands (z, packed vectors, w1..w3) arrive via VMEM in_specs; w4/w5 stay
    in HBM and are streamed with manual async copies overlapped with layers 1-3.
    """

    # --- kick off the big weight streams immediately ------------------------------
    cp4 = pltpu.make_async_copy(w4_hbm_ref, w4_vmem, dma_sems.at[0])
    cp5 = pltpu.make_async_copy(w5_hbm_ref, w5_vmem, dma_sems.at[1])
    cp4.start()
    cp5.start()

    def vec(name):
        off, ln = VEC_OFFSETS[name]
        return vec_ref[:, off:off + ln]          # (1, ln) f32, static 128-aligned slice

    def linear(x_f32, w_bf16, b_f32):
        # bf16 x bf16 on the MXU with f32 accumulation.
        return (jnp.dot(x_f32.astype(jnp.bfloat16), w_bf16,
                        preferred_element_type=jnp.float32) + b_f32)

    def lrelu(x):
        # single VALU op (slope < 1 makes max() equivalent to the where-form)
        return jnp.maximum(x, LRELU_SLOPE * x)

    def batchnorm(x, g, be):
        # Training-mode BN over the batch axis, biased variance, eps=0.8 (intentional).
        # One fused scale/shift pass; clamp var at 0 against f32 cancellation.
        mu = jnp.mean(x, axis=0, keepdims=True)
        var = jnp.maximum(jnp.mean(x * x, axis=0, keepdims=True) - mu * mu, 0.0)
        scale = g * jax.lax.rsqrt(var + BN_EPS)   # rsqrt -> EUP slot (free-ish)
        shift = be - mu * scale
        return x * scale + shift

    z = z_ref[...]                                                          # already f32

    h = lrelu(linear(z, w1_ref[...], vec("b1")))                            # block 1 (no norm)
    h = lrelu(batchnorm(linear(h, w2_ref[...], vec("b2")), vec("g2"), vec("be2")))
    h = lrelu(batchnorm(linear(h, w3_ref[...], vec("b3")), vec("g3"), vec("be3")))

    cp4.wait()                                                              # w4 now in VMEM
    h = lrelu(batchnorm(linear(h, w4_vmem[...], vec("b4")), vec("g4"), vec("be4")))

    cp5.wait()                                                              # w5 now in VMEM
    out_ref[...] = jnp.tanh(linear(h, w5_vmem[...], vec("b5")))


def init_params(key):
    """Deterministic param init mimicking PyTorch Linear default U(-1/sqrt(fan_in), +).

    Weights are stored in bfloat16 (bandwidth optimization); biases and BN affine
    parameters stay in float32.
    """
    dims = [LATENT_DIM] + HIDDEN + [IMG_FLAT]
    params = []
    for i in range(len(dims) - 1):
        fan_in, fan_out = dims[i], dims[i + 1]
        key, kw, kb = jax.random.split(key, 3)
        bound = 1.0 / math.sqrt(fan_in)
        w = jax.random.uniform(kw, (fan_in, fan_out), jnp.float32, -bound, bound)
        b = jax.random.uniform(kb, (1, fan_out), jnp.float32, -bound, bound)
        params.append((w.astype(jnp.bfloat16), b))
    # BN affine params (gamma=1, beta=0 -- PyTorch defaults) for layers 2..4
    bn_params = [(jnp.ones((1, d), jnp.float32), jnp.zeros((1, d), jnp.float32))
                 for d in HIDDEN[1:]]  # 256, 512, 1024
    return params, bn_params


def pack_vectors(params, bn_params):
    """Concatenate all biases + BN affine vectors into one (1, VEC_TOTAL) f32 buffer."""
    (_, b1), (_, b2), (_, b3), (_, b4), (_, b5) = params
    (g2, be2), (g3, be3), (g4, be4) = bn_params
    table = {"b1": b1, "b2": b2, "g2": g2, "be2": be2,
             "b3": b3, "g3": g3, "be3": be3,
             "b4": b4, "g4": g4, "be4": be4, "b5": b5}
    vec = jnp.concatenate([table[name] for name, _ in VEC_SEGMENTS], axis=-1)
    assert vec.shape == (1, VEC_TOTAL)
    return vec


# Advisory cost estimate (helps XLA schedule around this short DMA-bound call).
_MATMUL_MACS = (LATENT_DIM * HIDDEN[0] + HIDDEN[0] * HIDDEN[1] +
                HIDDEN[1] * HIDDEN[2] + HIDDEN[2] * HIDDEN[3] + HIDDEN[3] * IMG_FLAT)
_FLOPS = 2 * BATCH * _MATMUL_MACS                                  # ~15.3e6
_TRANSCENDENTALS = BATCH * IMG_FLAT + sum(HIDDEN[1:])              # tanh + rsqrt
_BYTES = (2 * _MATMUL_MACS                                         # bf16 weights
          + 4 * (VEC_TOTAL + BATCH * LATENT_DIM + BATCH * IMG_FLAT))


def generator_forward(z, weights, vec):
    w1, w2, w3, w4, w5 = weights

    vmem = pl.BlockSpec(memory_space=pltpu.MemorySpace.VMEM)
    hbm = pl.BlockSpec(memory_space=pl.ANY)     # raw HBM ref; DMA'd manually in-kernel

    flat = pl.pallas_call(
        generator_kernel,
        out_shape=jax.ShapeDtypeStruct((z.shape[0], IMG_FLAT), jnp.float32),
        in_specs=[vmem, vmem,            # z, packed vectors
                  vmem, vmem, vmem,      # w1, w2, w3 (small, let Pallas DMA them)
                  hbm, hbm],             # w4, w5 (big, overlapped manual DMA)
        out_specs=vmem,
        scratch_shapes=[
            pltpu.VMEM((HIDDEN[2], HIDDEN[3]), jnp.bfloat16),   # w4 landing buffer (1 MiB)
            pltpu.VMEM((HIDDEN[3], IMG_FLAT), jnp.bfloat16),    # w5 landing buffer (512 KiB)
            pltpu.SemaphoreType.DMA((2,)),
        ],
        # Footprint ~2 MiB; 16 MiB leaves ample headroom and is safe on v5e/v6e/v7x.
        compiler_params=pltpu.CompilerParams(vmem_limit_bytes=16 << 20),
        cost_estimate=pl.CostEstimate(flops=_FLOPS,
                                      transcendentals=_TRANSCENDENTALS,
                                      bytes_accessed=_BYTES),
    )(z, vec, w1, w2, w3, w4, w5)

    # reshape (B, C*H*W) -> (B, C, H, W) wrapper-side (keeps the kernel's output
    # write lane-dense), matching img.view(img.size(0), *img_shape).
    return flat.reshape(z.shape[0], CHANNELS, IMG_SIZE, IMG_SIZE)


def generator_reference(z, params, bn_params):
    """Pure-JAX reference using the same (bf16) weights, for a tolerance check."""
    def lrelu(x):
        return jnp.where(x > 0, x, LRELU_SLOPE * x)

    def bn(x, g, be):
        mu = jnp.mean(x, axis=0, keepdims=True)
        var = jnp.mean((x - mu) ** 2, axis=0, keepdims=True)
        return (x - mu) * jax.lax.rsqrt(var + BN_EPS) * g + be

    def lin(x, w, b):
        return jnp.dot(x.astype(jnp.bfloat16), w,
                       preferred_element_type=jnp.float32) + b

    (w1, b1), (w2, b2), (w3, b3), (w4, b4), (w5, b5) = params
    (g2, be2), (g3, be3), (g4, be4) = bn_params

    h = lrelu(lin(z, w1, b1))
    h = lrelu(bn(lin(h, w2, b2), g2, be2))
    h = lrelu(bn(lin(h, w3, b3), g3, be3))
    h = lrelu(bn(lin(h, w4, b4), g4, be4))
    out = jnp.tanh(lin(h, w5, b5))
    return out.reshape(z.shape[0], CHANNELS, IMG_SIZE, IMG_SIZE)


if __name__ == "__main__":
    key = jax.random.PRNGKey(0)
    key, zkey = jax.random.split(key)
    z = jax.random.normal(zkey, (BATCH, LATENT_DIM), jnp.float32)

    params, bn_params = init_params(key)
    weights = tuple(w for w, _ in params)
    vec = pack_vectors(params, bn_params)

    img = generator_forward(z, weights, vec)
    jax.block_until_ready(img)

    assert img.shape == (BATCH, CHANNELS, IMG_SIZE, IMG_SIZE)
    assert bool(jnp.all(jnp.isfinite(img)))
    assert bool(jnp.all(jnp.abs(img) <= 1.0))  # tanh range

    # bf16 weights introduce small drift vs an f32 reference; compare against a
    # reference computed with the same bf16 weights, loose tolerance for MXU
    # accumulation-order / one-pass-vs-two-pass BN differences.
    ref = generator_reference(z, params, bn_params)
    assert bool(jnp.allclose(img, ref, rtol=2e-2, atol=2e-2))

    print("KERNEL_OK")
</pallas_src>

<mosaic_0001>
module attributes {stable_mosaic.version = 11 : i64} {
  func.func @generator_kernel(%arg0: memref<8x32xf32, #tpu.memory_space<vmem>>, %arg1: memref<1x5760xf32, #tpu.memory_space<vmem>>, %arg2: memref<32x128xbf16, #tpu.memory_space<vmem>>, %arg3: memref<128x256xbf16, #tpu.memory_space<vmem>>, %arg4: memref<256x512xbf16, #tpu.memory_space<vmem>>, %arg5: memref<512x1024xbf16, #tpu.memory_space<any>>, %arg6: memref<1024x256xbf16, #tpu.memory_space<any>>, %arg7: memref<8x256xf32, #tpu.memory_space<vmem>>, %arg8: memref<512x1024xbf16, #tpu.memory_space<vmem>>, %arg9: memref<1024x256xbf16, #tpu.memory_space<vmem>>, %arg10: memref<2x!tpu.dma_semaphore, #tpu.memory_space<semaphore_mem>>) attributes {dimension_semantics = [], scalar_prefetch = 0 : i64, scratch_operands = 3 : i64, tpu.core_type = #tpu.core_type<tc>} {
    %c0_i32 = arith.constant 0 : i32
    %0 = tpu.memref_slice %arg10[%c0_i32] : memref<2x!tpu.dma_semaphore, #tpu.memory_space<semaphore_mem>> -> memref<1x!tpu.dma_semaphore, #tpu.memory_space<semaphore_mem>>
    %1 = tpu.memref_squeeze %0 : memref<1x!tpu.dma_semaphore, #tpu.memory_space<semaphore_mem>> -> memref<!tpu.dma_semaphore, #tpu.memory_space<semaphore_mem>>
    tpu.enqueue_dma source(%arg5 : memref<512x1024xbf16, #tpu.memory_space<any>>) target(%arg8 : memref<512x1024xbf16, #tpu.memory_space<vmem>>) target_semaphore(%1 : memref<!tpu.dma_semaphore, #tpu.memory_space<semaphore_mem>>)
    %c1_i32 = arith.constant 1 : i32
    %2 = tpu.memref_slice %arg10[%c1_i32] : memref<2x!tpu.dma_semaphore, #tpu.memory_space<semaphore_mem>> -> memref<1x!tpu.dma_semaphore, #tpu.memory_space<semaphore_mem>>
    %3 = tpu.memref_squeeze %2 : memref<1x!tpu.dma_semaphore, #tpu.memory_space<semaphore_mem>> -> memref<!tpu.dma_semaphore, #tpu.memory_space<semaphore_mem>>
    tpu.enqueue_dma source(%arg6 : memref<1024x256xbf16, #tpu.memory_space<any>>) target(%arg9 : memref<1024x256xbf16, #tpu.memory_space<vmem>>) target_semaphore(%3 : memref<!tpu.dma_semaphore, #tpu.memory_space<semaphore_mem>>)
    %c0 = arith.constant 0 : index
    %c0_0 = arith.constant 0 : index
    %4 = vector.load %arg0[%c0, %c0_0] : memref<8x32xf32, #tpu.memory_space<vmem>>, vector<8x32xf32>
    %c0_1 = arith.constant 0 : index
    %c0_2 = arith.constant 0 : index
    %5 = vector.load %arg2[%c0_1, %c0_2] : memref<32x128xbf16, #tpu.memory_space<vmem>>, vector<32x128xbf16>
    %c0_3 = arith.constant 0 : index
    %c0_4 = arith.constant 0 : index
    %6 = vector.load %arg1[%c0_3, %c0_4] : memref<1x5760xf32, #tpu.memory_space<vmem>>, vector<1x128xf32>
    %7 = arith.truncf %4 : vector<8x32xf32> to vector<8x32xbf16>
    %cst = arith.constant dense<0.000000e+00> : vector<8x128xf32>
    %8 = tpu.matmul %7, %5, %cst {dimension_numbers = #tpu.dot_dimension_numbers<[1], [0], [0], [1], [0, 0, 1, 1], [], []>} : vector<8x32xbf16>, vector<32x128xbf16>, vector<8x128xf32> -> vector<8x128xf32>
    %9 = vector.broadcast %6 : vector<1x128xf32> to vector<8x128xf32>
    %10 = arith.addf %8, %9 : vector<8x128xf32>
    %cst_5 = arith.constant 2.000000e-01 : f32
    %11 = vector.broadcast %cst_5 : f32 to vector<8x128xf32>
    %12 = arith.mulf %11, %10 : vector<8x128xf32>
    %13 = arith.maximumf %10, %12 : vector<8x128xf32>
    %c0_6 = arith.constant 0 : index
    %c0_7 = arith.constant 0 : index
    %14 = vector.load %arg3[%c0_6, %c0_7] : memref<128x256xbf16, #tpu.memory_space<vmem>>, vector<128x256xbf16>
    %c0_8 = arith.constant 0 : index
    %c128 = arith.constant 128 : index
    %15 = vector.load %arg1[%c0_8, %c128] : memref<1x5760xf32, #tpu.memory_space<vmem>>, vector<1x256xf32>
    %16 = arith.truncf %13 : vector<8x128xf32> to vector<8x128xbf16>
    %cst_9 = arith.constant dense<0.000000e+00> : vector<8x256xf32>
    %17 = tpu.matmul %16, %14, %cst_9 {dimension_numbers = #tpu.dot_dimension_numbers<[1], [0], [0], [1], [0, 0, 1, 1], [], []>} : vector<8x128xbf16>, vector<128x256xbf16>, vector<8x256xf32> -> vector<8x256xf32>
    %18 = vector.broadcast %15 : vector<1x256xf32> to vector<8x256xf32>
    %19 = arith.addf %17, %18 : vector<8x256xf32>
    %c0_10 = arith.constant 0 : index
    %c384 = arith.constant 384 : index
    %20 = vector.load %arg1[%c0_10, %c384] : memref<1x5760xf32, #tpu.memory_space<vmem>>, vector<1x256xf32>
    %c0_11 = arith.constant 0 : index
    %c640 = arith.constant 640 : index
    %21 = vector.load %arg1[%c0_11, %c640] : memref<1x5760xf32, #tpu.memory_space<vmem>>, vector<1x256xf32>
    %cst_12 = arith.constant dense<0.000000e+00> : vector<256xf32>
    %22 = vector.multi_reduction <add>, %19, %cst_12 [0] : vector<8x256xf32> to vector<256xf32>
    %23 = vector.shape_cast %22 : vector<256xf32> to vector<1x256xf32>
    %cst_13 = arith.constant 8.000000e+00 : f32
    %24 = vector.broadcast %cst_13 : f32 to vector<1x256xf32>
    %25 = arith.divf %23, %24 : vector<1x256xf32>
    %26 = arith.mulf %19, %19 : vector<8x256xf32>
    %cst_14 = arith.constant dense<0.000000e+00> : vector<256xf32>
    %27 = vector.multi_reduction <add>, %26, %cst_14 [0] : vector<8x256xf32> to vector<256xf32>
    %28 = vector.shape_cast %27 : vector<256xf32> to vector<1x256xf32>
    %cst_15 = arith.constant 8.000000e+00 : f32
    %29 = vector.broadcast %cst_15 : f32 to vector<1x256xf32>
    %30 = arith.divf %28, %29 : vector<1x256xf32>
    %31 = arith.mulf %25, %25 : vector<1x256xf32>
    %32 = arith.subf %30, %31 : vector<1x256xf32>
    %cst_16 = arith.constant 0.000000e+00 : f32
    %33 = vector.broadcast %cst_16 : f32 to vector<1x256xf32>
    %34 = arith.maximumf %32, %33 : vector<1x256xf32>
    %cst_17 = arith.constant 8.000000e-01 : f32
    %35 = vector.broadcast %cst_17 : f32 to vector<1x256xf32>
    %36 = arith.addf %34, %35 : vector<1x256xf32>
    %37 = math.rsqrt %36 : vector<1x256xf32>
    %38 = arith.mulf %20, %37 : vector<1x256xf32>
    %39 = arith.mulf %25, %38 : vector<1x256xf32>
    %40 = arith.subf %21, %39 : vector<1x256xf32>
    %41 = vector.broadcast %38 : vector<1x256xf32> to vector<8x256xf32>
    %42 = arith.mulf %19, %41 : vector<8x256xf32>
    %43 = vector.broadcast %40 : vector<1x256xf32> to vector<8x256xf32>
    %44 = arith.addf %42, %43 : vector<8x256xf32>
    %cst_18 = arith.constant 2.000000e-01 : f32
    %45 = vector.broadcast %cst_18 : f32 to vector<8x256xf32>
    %46 = arith.mulf %45, %44 : vector<8x256xf32>
    %47 = arith.maximumf %44, %46 : vector<8x256xf32>
    %c0_19 = arith.constant 0 : index
    %c0_20 = arith.constant 0 : index
    %48 = vector.load %arg4[%c0_19, %c0_20] : memref<256x512xbf16, #tpu.memory_space<vmem>>, vector<256x512xbf16>
    %c0_21 = arith.constant 0 : index
    %c896 = arith.constant 896 : index
    %49 = vector.load %arg1[%c0_21, %c896] : memref<1x5760xf32, #tpu.memory_space<vmem>>, vector<1x512xf32>
    %50 = arith.truncf %47 : vector<8x256xf32> to vector<8x256xbf16>
    %cst_22 = arith.constant dense<0.000000e+00> : vector<8x512xf32>
    %51 = tpu.matmul %50, %48, %cst_22 {dimension_numbers = #tpu.dot_dimension_numbers<[1], [0], [0], [1], [0, 0, 1, 1], [], []>} : vector<8x256xbf16>, vector<256x512xbf16>, vector<8x512xf32> -> vector<8x512xf32>
    %52 = vector.broadcast %49 : vector<1x512xf32> to vector<8x512xf32>
    %53 = arith.addf %51, %52 : vector<8x512xf32>
    %c0_23 = arith.constant 0 : index
    %c1408 = arith.constant 1408 : index
    %54 = vector.load %arg1[%c0_23, %c1408] : memref<1x5760xf32, #tpu.memory_space<vmem>>, vector<1x512xf32>
    %c0_24 = arith.constant 0 : index
    %c1920 = arith.constant 1920 : index
    %55 = vector.load %arg1[%c0_24, %c1920] : memref<1x5760xf32, #tpu.memory_space<vmem>>, vector<1x512xf32>
    %cst_25 = arith.constant dense<0.000000e+00> : vector<512xf32>
    %56 = vector.multi_reduction <add>, %53, %cst_25 [0] : vector<8x512xf32> to vector<512xf32>
    %57 = vector.shape_cast %56 : vector<512xf32> to vector<1x512xf32>
    %cst_26 = arith.constant 8.000000e+00 : f32
    %58 = vector.broadcast %cst_26 : f32 to vector<1x512xf32>
    %59 = arith.divf %57, %58 : vector<1x512xf32>
    %60 = arith.mulf %53, %53 : vector<8x512xf32>
    %cst_27 = arith.constant dense<0.000000e+00> : vector<512xf32>
    %61 = vector.multi_reduction <add>, %60, %cst_27 [0] : vector<8x512xf32> to vector<512xf32>
    %62 = vector.shape_cast %61 : vector<512xf32> to vector<1x512xf32>
    %cst_28 = arith.constant 8.000000e+00 : f32
    %63 = vector.broadcast %cst_28 : f32 to vector<1x512xf32>
    %64 = arith.divf %62, %63 : vector<1x512xf32>
    %65 = arith.mulf %59, %59 : vector<1x512xf32>
    %66 = arith.subf %64, %65 : vector<1x512xf32>
    %cst_29 = arith.constant 0.000000e+00 : f32
    %67 = vector.broadcast %cst_29 : f32 to vector<1x512xf32>
    %68 = arith.maximumf %66, %67 : vector<1x512xf32>
    %cst_30 = arith.constant 8.000000e-01 : f32
    %69 = vector.broadcast %cst_30 : f32 to vector<1x512xf32>
    %70 = arith.addf %68, %69 : vector<1x512xf32>
    %71 = math.rsqrt %70 : vector<1x512xf32>
    %72 = arith.mulf %54, %71 : vector<1x512xf32>
    %73 = arith.mulf %59, %72 : vector<1x512xf32>
    %74 = arith.subf %55, %73 : vector<1x512xf32>
    %75 = vector.broadcast %72 : vector<1x512xf32> to vector<8x512xf32>
    %76 = arith.mulf %53, %75 : vector<8x512xf32>
    %77 = vector.broadcast %74 : vector<1x512xf32> to vector<8x512xf32>
    %78 = arith.addf %76, %77 : vector<8x512xf32>
    %cst_31 = arith.constant 2.000000e-01 : f32
    %79 = vector.broadcast %cst_31 : f32 to vector<8x512xf32>
    %80 = arith.mulf %79, %78 : vector<8x512xf32>
    %81 = arith.maximumf %78, %80 : vector<8x512xf32>
    %c0_i32_32 = arith.constant 0 : i32
    %82 = tpu.memref_slice %arg10[%c0_i32_32] : memref<2x!tpu.dma_semaphore, #tpu.memory_space<semaphore_mem>> -> memref<1x!tpu.dma_semaphore, #tpu.memory_space<semaphore_mem>>
    %83 = tpu.memref_squeeze %82 : memref<1x!tpu.dma_semaphore, #tpu.memory_space<semaphore_mem>> -> memref<!tpu.dma_semaphore, #tpu.memory_space<semaphore_mem>>
    tpu.wait_dma2 semaphore(%83 : memref<!tpu.dma_semaphore, #tpu.memory_space<semaphore_mem>>) src(%arg5 : memref<512x1024xbf16, #tpu.memory_space<any>>) dst(%arg8 : memref<512x1024xbf16, #tpu.memory_space<vmem>>)
    %c0_33 = arith.constant 0 : index
    %c0_34 = arith.constant 0 : index
    %84 = vector.load %arg8[%c0_33, %c0_34] : memref<512x1024xbf16, #tpu.memory_space<vmem>>, vector<512x1024xbf16>
    %c0_35 = arith.constant 0 : index
    %c2432 = arith.constant 2432 : index
    %85 = vector.load %arg1[%c0_35, %c2432] : memref<1x5760xf32, #tpu.memory_space<vmem>>, vector<1x1024xf32>
    %86 = arith.truncf %81 : vector<8x512xf32> to vector<8x512xbf16>
    %cst_36 = arith.constant dense<0.000000e+00> : vector<8x1024xf32>
    %87 = tpu.matmul %86, %84, %cst_36 {dimension_numbers = #tpu.dot_dimension_numbers<[1], [0], [0], [1], [0, 0, 1, 1], [], []>} : vector<8x512xbf16>, vector<512x1024xbf16>, vector<8x1024xf32> -> vector<8x1024xf32>
    %88 = vector.broadcast %85 : vector<1x1024xf32> to vector<8x1024xf32>
    %89 = arith.addf %87, %88 : vector<8x1024xf32>
    %c0_37 = arith.constant 0 : index
    %c3456 = arith.constant 3456 : index
    %90 = vector.load %arg1[%c0_37, %c3456] : memref<1x5760xf32, #tpu.memory_space<vmem>>, vector<1x1024xf32>
    %c0_38 = arith.constant 0 : index
    %c4480 = arith.constant 4480 : index
    %91 = vector.load %arg1[%c0_38, %c4480] : memref<1x5760xf32, #tpu.memory_space<vmem>>, vector<1x1024xf32>
    %cst_39 = arith.constant dense<0.000000e+00> : vector<1024xf32>
    %92 = vector.multi_reduction <add>, %89, %cst_39 [0] : vector<8x1024xf32> to vector<1024xf32>
    %93 = vector.shape_cast %92 : vector<1024xf32> to vector<1x1024xf32>
    %cst_40 = arith.constant 8.000000e+00 : f32
    %94 = vector.broadcast %cst_40 : f32 to vector<1x1024xf32>
    %95 = arith.divf %93, %94 : vector<1x1024xf32>
    %96 = arith.mulf %89, %89 : vector<8x1024xf32>
    %cst_41 = arith.constant dense<0.000000e+00> : vector<1024xf32>
    %97 = vector.multi_reduction <add>, %96, %cst_41 [0] : vector<8x1024xf32> to vector<1024xf32>
    %98 = vector.shape_cast %97 : vector<1024xf32> to vector<1x1024xf32>
    %cst_42 = arith.constant 8.000000e+00 : f32
    %99 = vector.broadcast %cst_42 : f32 to vector<1x1024xf32>
    %100 = arith.divf %98, %99 : vector<1x1024xf32>
    %101 = arith.mulf %95, %95 : vector<1x1024xf32>
    %102 = arith.subf %100, %101 : vector<1x1024xf32>
    %cst_43 = arith.constant 0.000000e+00 : f32
    %103 = vector.broadcast %cst_43 : f32 to vector<1x1024xf32>
    %104 = arith.maximumf %102, %103 : vector<1x1024xf32>
    %cst_44 = arith.constant 8.000000e-01 : f32
    %105 = vector.broadcast %cst_44 : f32 to vector<1x1024xf32>
    %106 = arith.addf %104, %105 : vector<1x1024xf32>
    %107 = math.rsqrt %106 : vector<1x1024xf32>
    %108 = arith.mulf %90, %107 : vector<1x1024xf32>
    %109 = arith.mulf %95, %108 : vector<1x1024xf32>
    %110 = arith.subf %91, %109 : vector<1x1024xf32>
    %111 = vector.broadcast %108 : vector<1x1024xf32> to vector<8x1024xf32>
    %112 = arith.mulf %89, %111 : vector<8x1024xf32>
    %113 = vector.broadcast %110 : vector<1x1024xf32> to vector<8x1024xf32>
    %114 = arith.addf %112, %113 : vector<8x1024xf32>
    %cst_45 = arith.constant 2.000000e-01 : f32
    %115 = vector.broadcast %cst_45 : f32 to vector<8x1024xf32>
    %116 = arith.mulf %115, %114 : vector<8x1024xf32>
    %117 = arith.maximumf %114, %116 : vector<8x1024xf32>
    %c1_i32_46 = arith.constant 1 : i32
    %118 = tpu.memref_slice %arg10[%c1_i32_46] : memref<2x!tpu.dma_semaphore, #tpu.memory_space<semaphore_mem>> -> memref<1x!tpu.dma_semaphore, #tpu.memory_space<semaphore_mem>>
    %119 = tpu.memref_squeeze %118 : memref<1x!tpu.dma_semaphore, #tpu.memory_space<semaphore_mem>> -> memref<!tpu.dma_semaphore, #tpu.memory_space<semaphore_mem>>
    tpu.wait_dma2 semaphore(%119 : memref<!tpu.dma_semaphore, #tpu.memory_space<semaphore_mem>>) src(%arg6 : memref<1024x256xbf16, #tpu.memory_space<any>>) dst(%arg9 : memref<1024x256xbf16, #tpu.memory_space<vmem>>)
    %c0_47 = arith.constant 0 : index
    %c0_48 = arith.constant 0 : index
    %120 = vector.load %arg9[%c0_47, %c0_48] : memref<1024x256xbf16, #tpu.memory_space<vmem>>, vector<1024x256xbf16>
    %c0_49 = arith.constant 0 : index
    %c5504 = arith.constant 5504 : index
    %121 = vector.load %arg1[%c0_49, %c5504] : memref<1x5760xf32, #tpu.memory_space<vmem>>, vector<1x256xf32>
    %122 = arith.truncf %117 : vector<8x1024xf32> to vector<8x1024xbf16>
    %cst_50 = arith.constant dense<0.000000e+00> : vector<8x256xf32>
    %123 = tpu.matmul %122, %120, %cst_50 {dimension_numbers = #tpu.dot_dimension_numbers<[1], [0], [0], [1], [0, 0, 1, 1], [], []>} : vector<8x1024xbf16>, vector<1024x256xbf16>, vector<8x256xf32> -> vector<8x256xf32>
    %124 = vector.broadcast %121 : vector<1x256xf32> to vector<8x256xf32>
    %125 = arith.addf %123, %124 : vector<8x256xf32>
    %126 = math.tanh %125 : vector<8x256xf32>
    %c0_51 = arith.constant 0 : index
    %c0_52 = arith.constant 0 : index
    %127 = vector.load %arg7[%c0_51, %c0_52] : memref<8x256xf32, #tpu.memory_space<vmem>>, vector<8x256xf32>
    tpu.vector_store %arg7[%c0_51, %c0_52], %126 {strides = array<i32>} : memref<8x256xf32, #tpu.memory_space<vmem>>, vector<8x256xf32>,
    return
  }
}

</mosaic_0001>

<llo_original>
// kernel: tpu_custom_call.1
$region0: #{tpu_custom_call.1}
  #allocation0 [shape = 'u32[]', space=smem, size = 0x4, offset = 0x4, fixed_abs, tag = 'smem constant byte address 0x4 - core index']
  #allocation1 [shape = 'u32[144,128]{1,0:T(1,128)}', space=vmem, size = 0x12000, scoped, tag = 'internal scratch']
  #allocation2 [shape = 'bf16[512,1024]{1,0:T(8,128)(2,1)}', space=vmem, size = 0x100000, scoped, tag = 'scratch operand']
  #allocation3 [shape = 'bf16[1024,256]{1,0:T(8,128)(2,1)}', space=vmem, size = 0x80000, scoped, tag = 'scratch operand']
  #allocation4 [shape = 's32[2]{0}', space=sflag, size = 0x8, scoped, tag = 'scratch operand']
  #allocation15 [shape = 's32[]', space=sflag, size = 0x4, offset = 0, fixed_abs, tag = 'sflag constant byte address 0x0 - dummy sync flag']
  #allocation16 [shape = 's32[]', space=sflag, size = 0x4, offset = 0, fixed_abs, tag = 'sflag constant byte address 0x0 - dummy sync flag']
  #allocation17 [shape = 'u32[]', space=smem, size = 0x4, offset = 0x44, fixed_abs, tag = 'smem constant byte address 0x44 - assertion arg 0']
  #allocation18 [shape = 'u32[]', space=smem, size = 0x4, offset = 0x48, fixed_abs, tag = 'smem constant byte address 0x48 - assertion arg 1']
  #allocation19 [shape = 's32[]', space=sflag, size = 0x4, offset = 0, fixed_abs, tag = 'sflag constant byte address 0x0 - dummy sync flag']
  #allocation20 [shape = 's32[]', space=sflag, size = 0x4, offset = 0, fixed_abs, tag = 'sflag constant byte address 0x0 - dummy sync flag']
  %s0 = inlined_call_operand.hbm [shape: f32[8,32], index: 0, kind: input, shape index: {}]
  %s1 = inlined_call_operand.hbm [shape: f32[1,5760], index: 1, kind: input, shape index: {}]
  %s2 = inlined_call_operand.hbm [shape: bf16[32,128], index: 2, kind: input, shape index: {}]
  %s3 = inlined_call_operand.hbm [shape: bf16[128,256], index: 3, kind: input, shape index: {}]
  %s4 = inlined_call_operand.hbm [shape: bf16[256,512], index: 4, kind: input, shape index: {}]
  %s5 = inlined_call_operand.hbm [shape: bf16[512,1024], index: 5, kind: input, shape index: {}]
  %s6 = inlined_call_operand.hbm [shape: bf16[1024,256], index: 6, kind: input, shape index: {}]
  %s7 = inlined_call_operand.hbm [shape: f32[8,256], index: 7, kind: output, shape index: {}]
  %s8 = sld [smem:[#allocation0]]
  $region58: #{tpu_custom_call.1} parent=0
    _
  %s10 = ssub.s32 1, %s8
  %s11 = scalar_select 0, %s10, %s8
  $region1: #{tpu_custom_call.1} parent=0
    #allocation5 [shape = 'u8[4096]{0}', space=vmem, size = 0x1000, scoped, tag = 'input window, operand 0, single buffered']
    #allocation6 [shape = 's32[1]{0}', space=sflag, size = 0x4, scoped, tag = 'scoped memory for tpu_custom_call.1']
    #allocation7 [shape = 's32[1]{0}', space=sflag, size = 0x4, scoped, tag = 'scoped memory for tpu_custom_call.1']
    #allocation8 [shape = 'u8[23040]{0}', space=vmem, size = 0x5c00, scoped, tag = 'input window, operand 1, single buffered']
    #allocation9 [shape = 's32[1]{0}', space=sflag, size = 0x4, scoped, tag = 'scoped memory for tpu_custom_call.1']
    #allocation10 [shape = 'u8[8192]{0}', space=vmem, size = 0x2000, scoped, tag = 'input window, operand 2, single buffered']
    #allocation11 [shape = 'u8[65536]{0}', space=vmem, size = 0x10000, scoped, tag = 'input window, operand 3, single buffered']
    #allocation12 [shape = 's32[1]{0}', space=sflag, size = 0x4, scoped, tag = 'scoped memory for tpu_custom_call.1']
    #allocation13 [shape = 'u8[262144]{0}', space=vmem, size = 0x40000, scoped, tag = 'input window, operand 4, single buffered']
    #allocation14 [shape = 'u8[8192]{0}', space=vmem, size = 0x2000, scoped, tag = 'output window, operand 0, single buffered']
    %12 = vsyncpa [#allocation6], 0
    %13 = vsyncpa [#allocation9], 0
    %14 = vsyncpa [#allocation12], 0
    %15 = vsyncpa [#allocation7], 0
    // Predicated region
    $region2: #{tpu_custom_call.1} parent=1 // pred_check
      _
    $region3: #{tpu_custom_call.1} parent=1 // pred_check_branch
      %17 = sbr.rel (0) target = $region5
    $region4: #{tpu_custom_call.1} parent=1 // pred_region
      %s19 = ssub.s32 128, 128
      %20 = vsyncadd [#allocation6], %s19
      %s22 = sshll.u32 [#allocation5], 4
      %s23 = int_to_ptr.vmem [resolvable:$true] %s22
      %25 = dma.hbm_to_vmem [thread:$0]  %s0, 128, %s23, [#allocation6]
    $region5: #{tpu_custom_call.1} parent=1 // pred_fallthru
      _
    // Predicated region
    $region6: #{tpu_custom_call.1} parent=1 // pred_check
      _
    $region7: #{tpu_custom_call.1} parent=1 // pred_check_branch
      %27 = sbr.rel (0) target = $region9
    $region8: #{tpu_custom_call.1} parent=1 // pred_region
      %s29 = ssub.s32 720, 720
      %30 = vsyncadd [#allocation9], %s29
      %s32 = sshll.u32 [#allocation8], 4
      %s33 = int_to_ptr.vmem [resolvable:$true] %s32
      %35 = dma.hbm_to_vmem [thread:$0]  %s1, 720, %s33, [#allocation9]
    $region9: #{tpu_custom_call.1} parent=1 // pred_fallthru
      _
    // Predicated region
    $region10: #{tpu_custom_call.1} parent=1 // pred_check
      _
    $region11: #{tpu_custom_call.1} parent=1 // pred_check_branch
      %37 = sbr.rel (0) target = $region13
    $region12: #{tpu_custom_call.1} parent=1 // pred_region
      %s39 = ssub.s32 256, 256
      %40 = vsyncadd [#allocation9], %s39
      %s41 = sshll.u32 [#allocation10], 4
      %s42 = int_to_ptr.vmem [resolvable:$true] %s41
      %47 = dma.hbm_to_vmem [thread:$0]  %s2, 256, %s42, [#allocation9], 64, 64, 4
    $region13: #{tpu_custom_call.1} parent=1 // pred_fallthru
      _
    // Predicated region
    $region14: #{tpu_custom_call.1} parent=1 // pred_check
      _
    $region15: #{tpu_custom_call.1} parent=1 // pred_check_branch
      %49 = sbr.rel (0) target = $region17
    $region16: #{tpu_custom_call.1} parent=1 // pred_region
      %s51 = ssub.s32 2048, 2048
      %52 = vsyncadd [#allocation12], %s51
      %s53 = sshll.u32 [#allocation11], 4
      %s54 = int_to_ptr.vmem [resolvable:$true] %s53
      %59 = dma.hbm_to_vmem [thread:$0]  %s3, 2048, %s54, [#allocation12], 128, 128, 8
    $region17: #{tpu_custom_call.1} parent=1 // pred_fallthru
      _
    // Predicated region
    $region18: #{tpu_custom_call.1} parent=1 // pred_check
      _
    $region19: #{tpu_custom_call.1} parent=1 // pred_check_branch
      %61 = sbr.rel (0) target = $region21
    $region20: #{tpu_custom_call.1} parent=1 // pred_region
      %s63 = ssub.s32 8192, 8192
      %64 = vsyncadd [#allocation12], %s63
      %s65 = sshll.u32 [#allocation13], 4
      %s66 = int_to_ptr.vmem [resolvable:$true] %s65
      %71 = dma.hbm_to_vmem [thread:$0]  %s4, 8192, %s66, [#allocation12], 256, 256, 16
    $region21: #{tpu_custom_call.1} parent=1 // pred_fallthru
      _
    // Predicated region
    $region22: #{tpu_custom_call.1} parent=1 // pred_check
      _
    $region23: #{tpu_custom_call.1} parent=1 // pred_check_branch
      %73 = sbr.rel (0) target = $region25
    $region24: #{tpu_custom_call.1} parent=1 // pred_region
      %74 = dma.done [#allocation6], 128
    $region25: #{tpu_custom_call.1} parent=1 // pred_fallthru
      _
    // Predicated region
    $region26: #{tpu_custom_call.1} parent=1 // pred_check
      _
    $region27: #{tpu_custom_call.1} parent=1 // pred_check_branch
      %76 = sbr.rel (0) target = $region29
    $region28: #{tpu_custom_call.1} parent=1 // pred_region
      %77 = dma.done [#allocation9], 720
    $region29: #{tpu_custom_call.1} parent=1 // pred_fallthru
      _
    // Predicated region
    $region30: #{tpu_custom_call.1} parent=1 // pred_check
      _
    $region31: #{tpu_custom_call.1} parent=1 // pred_check_branch
      %79 = sbr.rel (0) target = $region33
    $region32: #{tpu_custom_call.1} parent=1 // pred_region
      %80 = dma.done [#allocation9], 256
    $region33: #{tpu_custom_call.1} parent=1 // pred_fallthru
      _
    // Predicated region
    $region34: #{tpu_custom_call.1} parent=1 // pred_check
      _
    $region35: #{tpu_custom_call.1} parent=1 // pred_check_branch
      %82 = sbr.rel (0) target = $region37
    $region36: #{tpu_custom_call.1} parent=1 // pred_region
      %83 = dma.done [#allocation12], 2048
    $region37: #{tpu_custom_call.1} parent=1 // pred_fallthru
      _
    // Predicated region
    $region38: #{tpu_custom_call.1} parent=1 // pred_check
      _
    $region39: #{tpu_custom_call.1} parent=1 // pred_check_branch
      %85 = sbr.rel (0) target = $region41
    $region40: #{tpu_custom_call.1} parent=1 // pred_region
      %86 = dma.done [#allocation12], 8192
    $region41: #{tpu_custom_call.1} parent=1 // pred_fallthru
      _
    // Predicated region
    $region42: #{tpu_custom_call.1} parent=1 // pred_check
      _
    $region43: #{tpu_custom_call.1} parent=1 // pred_check_branch
      %89 = sbr.rel target = $region45
    $region44: #{tpu_custom_call.1} parent=1 // pred_region
      %90 = sst [smem:[#allocation17]] [#allocation16]
      %91 = sst [smem:[#allocation18]] [#allocation15]
    $region45: #{tpu_custom_call.1} parent=1 // pred_fallthru
      _
    %93 = shalt.err (0)
    %s95 = sshll.u32 [#allocation2], 4
    %s96 = int_to_ptr.vmem [resolvable:$true] %s95
    %98 = dma.hbm_to_vmem [thread:$0]  %s5, 32768, %s96, [#allocation4]
    %s99 = scalar_lea.sflag [#allocation4], 1
    // Predicated region
    $region46: #{tpu_custom_call.1} parent=1 // pred_check
      _
    $region47: #{tpu_custom_call.1} parent=1 // pred_check_branch
      %101 = sbr.rel target = $region49
    $region48: #{tpu_custom_call.1} parent=1 // pred_region
      %102 = sst [smem:[#allocation17]] [#allocation20]
      %103 = sst [smem:[#allocation18]] [#allocation19]
    $region49: #{tpu_custom_call.1} parent=1 // pred_fallthru
      _
    %105 = shalt.err (0)
    %s107 = sshll.u32 [#allocation3], 4
    %s108 = int_to_ptr.vmem [resolvable:$true] %s107
    %110 = dma.hbm_to_vmem [thread:$0]  %s6, 16384, %s108, %s99
    %v111 = vld [vmem:[#allocation5] sm:$0xff]
    %v112 = vld [vmem:[#allocation10] sm:$0xf]
    %v113 = vld [vmem:[#allocation10 + $0x4] sm:$0xf]
    %v114 = vld [vmem:[#allocation10 + $0x8] sm:$0xf]
    %v115 = vld [vmem:[#allocation10 + $0xc] sm:$0xf]
    %v116 = vld [vmem:[#allocation8] sm:$0x1]
    %v117 = vpack.c.bf16 %v111, %v111
    %v119 = vlaneseq
    %v120 = vshrl.u32 %v119, 7
    %v121 = vsub.s32 0, %v120
    %v122 = vrot.slane %v116, %v121
    %v128 = vunpack.c.l.b16 %v112
    %v129 = vunpack.c.l.b16 %v113
    %v130 = vunpack.c.l.b16 %v114
    %v131 = vunpack.c.l.b16 %v115
    %v132 = vpack.c.b16 %v129, %v128
    %v133 = vpack.c.b16 %v131, %v130
    %vm136 = vcmask 261120
    %v138 = vsel %vm136, %v117, 0
    %140 = vmatprep.subr.bf16.mxu0 0
    %141 = vmatpush1.bf16.msra.mxu0 0
    %142 = vmatprep.subr.bf16.mxu0 0
    %143 = vmatpush1.bf16.msra.mxu0 0
    %144 = vmatprep.subr.bf16.mxu0 0
    %145 = vmatpush1.bf16.msra.mxu0 0
    %146 = vmatprep.subr.bf16.mxu0 0
    %147 = vmatpush1.bf16.msra.mxu0 0
    %148 = vmatprep.subr.bf16.mxu0 0
    %149 = vmatpush1.bf16.msra.mxu0 0
    %150 = vmatprep.subr.bf16.mxu0 0
    %151 = vmatpush1.bf16.msra.mxu0 0
    %152 = vmatprep.subr.bf16.mxu0 0
    %153 = vmatpush1.bf16.msra.mxu0 %v133
    %154 = vmatprep.subr.bf16.mxu0 0
    %155 = vmatpush1.bf16.msra.mxu0 %v132
    %156 = vmatprep.subr.bf16.mxu0 0
    %157 = vmatpush2.bf16.msra.mxu0 0
    %158 = vmatprep.subr.bf16.mxu0 0
    %159 = vmatpush2.bf16.msra.mxu0 0
    %160 = vmatprep.subr.bf16.mxu0 0
    %161 = vmatpush2.bf16.msra.mxu0 0
    %162 = vmatprep.subr.bf16.mxu0 0
    %163 = vmatpush2.bf16.msra.mxu0 0
    %164 = vmatprep.subr.bf16.mxu0 0
    %165 = vmatpush2.bf16.msra.mxu0 0
    %166 = vmatprep.subr.bf16.mxu0 0
    %167 = vmatpush2.bf16.msra.mxu0 0
    %168 = vmatprep.subr.bf16.mxu0 0
    %169 = vmatpush2.bf16.msra.mxu0 0
    %170 = vmatprep.subr.bf16.mxu0 0
    %171 = vmatpush2.bf16.msra.mxu0 0
    %172 = vmatprep.mubr.bf16.mxu0 0
    %173 = vmatmul.mubr.bf16.gmra.mxu0 %v138
    %v174 = vpop.f32.mrf.mxu0
    %v175 = vadd.f32 %v122, %v174
    %v176 = vpop.f32.mrf.mxu0
    %v177 = vpop.f32.mrf.mxu0
    %v178 = vpop.f32.mrf.mxu0
    %179 = vdwg.mxu0
    %v180 = vmul.f32 %v175, 0.2
    %v181 = vmax.f32 %v175, %v180
    %v182 = vld [vmem:[#allocation11] sm:$0xff]
    %v183 = vld [vmem:[#allocation11 + $0x8] sm:$0xff]
    %v184 = vld [vmem:[#allocation11 + $0x10] sm:$0xff]
    %v185 = vld [vmem:[#allocation11 + $0x18] sm:$0xff]
    %v186 = vld [vmem:[#allocation11 + $0x20] sm:$0xff]
    %v187 = vld [vmem:[#allocation11 + $0x28] sm:$0xff]
    %v188 = vld [vmem:[#allocation11 + $0x30] sm:$0xff]
    %v189 = vld [vmem:[#allocation11 + $0x38] sm:$0xff]
    %v190 = vld [vmem:[#allocation11 + $0x40] sm:$0xff]
    %v191 = vld [vmem:[#allocation11 + $0x48] sm:$0xff]
    %v192 = vld [vmem:[#allocation11 + $0x50] sm:$0xff]
    %v193 = vld [vmem:[#allocation11 + $0x58] sm:$0xff]
    %v194 = vld [vmem:[#allocation11 + $0x60] sm:$0xff]
    %v195 = vld [vmem:[#allocation11 + $0x68] sm:$0xff]
    %v196 = vld [vmem:[#allocation11 + $0x70] sm:$0xff]
    %v197 = vld [vmem:[#allocation11 + $0x78] sm:$0xff]
    %v198 = vld [vmem:[#allocation8 + $0x1] sm:$0x3]
    %v199 = vpack.c.bf16 %v181, %v181
    %v201 = vlaneseq
    %v202 = vshrl.u32 %v201, 7
    %v203 = vsub.s32 0, %v202
    %v204 = vrot.slane %v198, %v203
    %v205 = vlaneseq
    %v206 = vshrl.u32 %v205, 7
    %v207 = vsub.s32 1, %v206
    %v208 = vrot.slane %v198, %v207
    %v227 = vunpack.c.l.b16 %v182
    %v228 = vunpack.c.h.b16 %v182
    %v229 = vunpack.c.l.b16 %v183
    %v230 = vunpack.c.h.b16 %v183
    %v231 = vunpack.c.l.b16 %v184
    %v232 = vunpack.c.h.b16 %v184
    %v233 = vunpack.c.l.b16 %v185
    %v234 = vunpack.c.h.b16 %v185
    %v235 = vunpack.c.l.b16 %v186
    %v236 = vunpack.c.h.b16 %v186
    %v237 = vunpack.c.l.b16 %v187
    %v238 = vunpack.c.h.b16 %v187
    %v239 = vunpack.c.l.b16 %v188
    %v240 = vunpack.c.h.b16 %v188
    %v241 = vunpack.c.l.b16 %v189
    %v242 = vunpack.c.h.b16 %v189
    %v243 = vunpack.c.l.b16 %v190
    %v244 = vunpack.c.h.b16 %v190
    %v245 = vunpack.c.l.b16 %v191
    %v246 = vunpack.c.h.b16 %v191
    %v247 = vunpack.c.l.b16 %v192
    %v248 = vunpack.c.h.b16 %v192
    %v249 = vunpack.c.l.b16 %v193
    %v250 = vunpack.c.h.b16 %v193
    %v251 = vunpack.c.l.b16 %v194
    %v252 = vunpack.c.h.b16 %v194
    %v253 = vunpack.c.l.b16 %v195
    %v254 = vunpack.c.h.b16 %v195
    %v255 = vunpack.c.l.b16 %v196
    %v256 = vunpack.c.h.b16 %v196
    %v257 = vunpack.c.l.b16 %v197
    %v258 = vunpack.c.h.b16 %v197
    %v259 = vpack.c.b16 %v229, %v227
    %v260 = vpack.c.b16 %v230, %v228
    %v261 = vpack.c.b16 %v233, %v231
    %v262 = vpack.c.b16 %v234, %v232
    %v263 = vpack.c.b16 %v237, %v235
    %v264 = vpack.c.b16 %v238, %v236
    %v265 = vpack.c.b16 %v241, %v239
    %v266 = vpack.c.b16 %v242, %v240
    %v267 = vpack.c.b16 %v245, %v243
    %v268 = vpack.c.b16 %v246, %v244
    %v269 = vpack.c.b16 %v249, %v247
    %v270 = vpack.c.b16 %v250, %v248
    %v271 = vpack.c.b16 %v253, %v251
    %v272 = vpack.c.b16 %v254, %v252
    %v273 = vpack.c.b16 %v257, %v255
    %v274 = vpack.c.b16 %v258, %v256
    %291 = vmatprep.subr.bf16.mxu0 %v274
    %292 = vmatpush1.bf16.msra.mxu0 %v273
    %293 = vmatprep.subr.bf16.mxu0 %v272
    %294 = vmatpush1.bf16.msra.mxu0 %v271
    %295 = vmatprep.subr.bf16.mxu0 %v270
    %296 = vmatpush1.bf16.msra.mxu0 %v269
    %297 = vmatprep.subr.bf16.mxu0 %v268
    %298 = vmatpush1.bf16.msra.mxu0 %v267
    %299 = vmatprep.subr.bf16.mxu0 %v266
    %300 = vmatpush1.bf16.msra.mxu0 %v265
    %301 = vmatprep.subr.bf16.mxu0 %v264
    %302 = vmatpush1.bf16.msra.mxu0 %v263
    %303 = vmatprep.subr.bf16.mxu0 %v262
    %304 = vmatpush1.bf16.msra.mxu0 %v261
    %305 = vmatprep.subr.bf16.mxu0 %v260
    %306 = vmatpush1.bf16.msra.mxu0 %v259
    %307 = vmatprep.subr.bf16.mxu0 0
    %308 = vmatpush2.bf16.msra.mxu0 0
    %309 = vmatprep.subr.bf16.mxu0 0
    %310 = vmatpush2.bf16.msra.mxu0 0
    %311 = vmatprep.subr.bf16.mxu0 0
    %312 = vmatpush2.bf16.msra.mxu0 0
    %313 = vmatprep.subr.bf16.mxu0 0
    %314 = vmatpush2.bf16.msra.mxu0 0
    %315 = vmatprep.subr.bf16.mxu0 0
    %316 = vmatpush2.bf16.msra.mxu0 0
    %317 = vmatprep.subr.bf16.mxu0 0
    %318 = vmatpush2.bf16.msra.mxu0 0
    %319 = vmatprep.subr.bf16.mxu0 0
    %320 = vmatpush2.bf16.msra.mxu0 0
    %321 = vmatprep.subr.bf16.mxu0 0
    %322 = vmatpush2.bf16.msra.mxu0 0
    %323 = vmatprep.mubr.bf16.mxu0 0
    %324 = vmatmul.mubr.bf16.gmra.mxu0 %v199
    %v325 = vpop.f32.mrf.mxu0
    %v326 = vadd.f32 %v204, %v325
    %v327 = vpop.f32.mrf.mxu0
    %v328 = vadd.f32 %v208, %v327
    %v329 = vpop.f32.mrf.mxu0
    %v330 = vpop.f32.mrf.mxu0
    %331 = vdwg.mxu0
    %v332 = vld [vmem:[#allocation8 + $0x3] sm:$0x3]
    %v333 = vld [vmem:[#allocation8 + $0x5] sm:$0x3]
    %v334 = vrot.slane %v326, 4
    %v335 = vadd.f32 %v326, %v334
    %v336 = vrot.slane %v335, 2
    %v337 = vadd.f32 %v335, %v336
    %v338 = vrot.slane %v337, 1
    %v339 = vadd.f32 %v337, %v338
    %v340 = vrot.slane %v328, 4
    %v341 = vadd.f32 %v328, %v340
    %v342 = vrot.slane %v341, 2
    %v343 = vadd.f32 %v341, %v342
    %v344 = vrot.slane %v343, 1
    %v345 = vadd.f32 %v343, %v344
    %v346 = vrcp.pop 8.0
    %v347 = vmul.f32 %v339, %v346
    %v348 = vmul.f32 %v345, %v346
    %v349 = vmul.f32 %v326, %v326
    %v350 = vmul.f32 %v328, %v328
    %v351 = vrot.slane %v349, 4
    %v352 = vadd.f32 %v349, %v351
    %v353 = vrot.slane %v352, 2
    %v354 = vadd.f32 %v352, %v353
    %v355 = vrot.slane %v354, 1
    %v356 = vadd.f32 %v354, %v355
    %v357 = vrot.slane %v350, 4
    %v358 = vadd.f32 %v350, %v357
    %v359 = vrot.slane %v358, 2
    %v360 = vadd.f32 %v358, %v359
    %v361 = vrot.slane %v360, 1
    %v362 = vadd.f32 %v360, %v361
    %v363 = vmul.f32 %v356, %v346
    %v364 = vmul.f32 %v362, %v346
    %v365 = vmul.f32 %v347, %v347
    %v366 = vmul.f32 %v348, %v348
    %v367 = vsub.f32 %v363, %v365
    %v368 = vsub.f32 %v364, %v366
    %v369 = vmax.f32 %v367, 0.0
    %v370 = vmax.f32 %v368, 0.0
    %v371 = vadd.f32 %v369, 0.8
    %v372 = vadd.f32 %v370, 0.8
    %v373 = vrsqrt.pop %v371
    %v374 = vrsqrt.pop %v372
    %v377 = vcombine.low %v373, %v374
    %v379 = vunpack.c.l.s4 1966171168
    %v380 = vunpack.c.0.s8 %v379
    %v381 = vlaneseq
    %v382 = vshrl.u32 %v381, 7
    %v383 = vsub.s32 %v380, %v382
    %v384 = vrot.slane %v377, %v383
    %v386 = vunpack.c.l.s4 1966171168
    %v387 = vunpack.c.0.s8 %v386
    %v388 = vlaneseq
    %v389 = vshrl.u32 %v388, 7
    %v390 = vsub.s32 %v387, %v389
    %v391 = vrot.slane %v384, %v390
    %v393 = vmul.f32 %v332, %v391
    %v395 = vlaneseq
    %v396 = vshrl.u32 %v395, 7
    %v397 = vsub.s32 0, %v396
    %v398 = vrot.slane %v393, %v397
    %v399 = vlaneseq
    %v400 = vshrl.u32 %v399, 7
    %v401 = vsub.s32 1, %v400
    %v402 = vrot.slane %v393, %v401
    %v405 = vmul.f32 %v347, %v398
    %v406 = vmul.f32 %v348, %v402
    %v409 = vcombine.low %v405, %v406
    %v411 = vunpack.c.l.s4 1966171168
    %v412 = vunpack.c.0.s8 %v411
    %v413 = vlaneseq
    %v414 = vshrl.u32 %v413, 7
    %v415 = vsub.s32 %v412, %v414
    %v416 = vrot.slane %v409, %v415
    %v418 = vunpack.c.l.s4 1966171168
    %v419 = vunpack.c.0.s8 %v418
    %v420 = vlaneseq
    %v421 = vshrl.u32 %v420, 7
    %v422 = vsub.s32 %v419, %v421
    %v423 = vrot.slane %v416, %v422
    %v425 = vsub.f32 %v333, %v423
    %v426 = vmul.f32 %v326, %v398
    %v427 = vmul.f32 %v328, %v402
    %v429 = vlaneseq
    %v430 = vshrl.u32 %v429, 7
    %v431 = vsub.s32 0, %v430
    %v432 = vrot.slane %v425, %v431
    %v433 = vlaneseq
    %v434 = vshrl.u32 %v433, 7
    %v435 = vsub.s32 1, %v434
    %v436 = vrot.slane %v425, %v435
    %v439 = vadd.f32 %v426, %v432
    %v440 = vadd.f32 %v427, %v436
    %v441 = vmul.f32 %v439, 0.2
    %v442 = vmul.f32 %v440, 0.2
    %v443 = vmax.f32 %v439, %v441
    %v444 = vmax.f32 %v440, %v442
    %v445 = vld [vmem:[#allocation13] sm:$0xff]
    %v446 = vld [vmem:[#allocation13 + $0x8] sm:$0xff]
    %v447 = vld [vmem:[#allocation13 + $0x10] sm:$0xff]
    %v448 = vld [vmem:[#allocation13 + $0x18] sm:$0xff]
    %v449 = vld [vmem:[#allocation13 + $0x20] sm:$0xff]
    %v450 = vld [vmem:[#allocation13 + $0x28] sm:$0xff]
    %v451 = vld [vmem:[#allocation13 + $0x30] sm:$0xff]
    %v452 = vld [vmem:[#allocation13 + $0x38] sm:$0xff]
    %v453 = vld [vmem:[#allocation13 + $0x40] sm:$0xff]
    %v454 = vld [vmem:[#allocation13 + $0x48] sm:$0xff]
    %v455 = vld [vmem:[#allocation13 + $0x50] sm:$0xff]
    %v456 = vld [vmem:[#allocation13 + $0x58] sm:$0xff]
    %v457 = vld [vmem:[#allocation13 + $0x60] sm:$0xff]
    %v458 = vld [vmem:[#allocation13 + $0x68] sm:$0xff]
    %v459 = vld [vmem:[#allocation13 + $0x70] sm:$0xff]
    %v460 = vld [vmem:[#allocation13 + $0x78] sm:$0xff]
    %v461 = vld [vmem:[#allocation13 + $0x80] sm:$0xff]
    %v462 = vld [vmem:[#allocation13 + $0x88] sm:$0xff]
    %v463 = vld [vmem:[#allocation13 + $0x90] sm:$0xff]
    %v464 = vld [vmem:[#allocation13 + $0x98] sm:$0xff]
    %v465 = vld [vmem:[#allocation13 + $0xa0] sm:$0xff]
    %v466 = vld [vmem:[#allocation13 + $0xa8] sm:$0xff]
    %v467 = vld [vmem:[#allocation13 + $0xb0] sm:$0xff]
    %v468 = vld [vmem:[#allocation13 + $0xb8] sm:$0xff]
    %v469 = vld [vmem:[#allocation13 + $0xc0] sm:$0xff]
    %v470 = vld [vmem:[#allocation13 + $0xc8] sm:$0xff]
    %v471 = vld [vmem:[#allocation13 + $0xd0] sm:$0xff]
    %v472 = vld [vmem:[#allocation13 + $0xd8] sm:$0xff]
    %v473 = vld [vmem:[#allocation13 + $0xe0] sm:$0xff]
    %v474 = vld [vmem:[#allocation13 + $0xe8] sm:$0xff]
    %v475 = vld [vmem:[#allocation13 + $0xf0] sm:$0xff]
    %v476 = vld [vmem:[#allocation13 + $0xf8] sm:$0xff]
    %v477 = vld [vmem:[#allocation13 + $0x100] sm:$0xff]
    %v478 = vld [vmem:[#allocation13 + $0x108] sm:$0xff]
    %v479 = vld [vmem:[#allocation13 + $0x110] sm:$0xff]
    %v480 = vld [vmem:[#allocation13 + $0x118] sm:$0xff]
    %v481 = vld [vmem:[#allocation13 + $0x120] sm:$0xff]
    %v482 = vld [vmem:[#allocation13 + $0x128] sm:$0xff]
    %v483 = vld [vmem:[#allocation13 + $0x130] sm:$0xff]
    %v484 = vld [vmem:[#allocation13 + $0x138] sm:$0xff]
    %v485 = vld [vmem:[#allocation13 + $0x140] sm:$0xff]
    %v486 = vld [vmem:[#allocation13 + $0x148] sm:$0xff]
    %v487 = vld [vmem:[#allocation13 + $0x150] sm:$0xff]
    %v488 = vld [vmem:[#allocation13 + $0x158] sm:$0xff]
    %v489 = vld [vmem:[#allocation13 + $0x160] sm:$0xff]
    %v490 = vld [vmem:[#allocation13 + $0x168] sm:$0xff]
    %v491 = vld [vmem:[#allocation13 + $0x170] sm:$0xff]
    %v492 = vld [vmem:[#allocation13 + $0x178] sm:$0xff]
    %v493 = vld [vmem:[#allocation13 + $0x180] sm:$0xff]
    %v494 = vld [vmem:[#allocation13 + $0x188] sm:$0xff]
    %v495 = vld [vmem:[#allocation13 + $0x190] sm:$0xff]
    %v496 = vld [vmem:[#allocation13 + $0x198] sm:$0xff]
    %v497 = vld [vmem:[#allocation13 + $0x1a0] sm:$0xff]
    %v498 = vld [vmem:[#allocation13 + $0x1a8] sm:$0xff]
    %v499 = vld [vmem:[#allocation13 + $0x1b0] sm:$0xff]
    %v500 = vld [vmem:[#allocation13 + $0x1b8] sm:$0xff]
    %v501 = vld [vmem:[#allocation13 + $0x1c0] sm:$0xff]
    %v502 = vld [vmem:[#allocation13 + $0x1c8] sm:$0xff]
    %v503 = vld [vmem:[#allocation13 + $0x1d0] sm:$0xff]
    %v504 = vld [vmem:[#allocation13 + $0x1d8] sm:$0xff]
    %v505 = vld [vmem:[#allocation13 + $0x1e0] sm:$0xff]
    %v506 = vld [vmem:[#allocation13 + $0x1e8] sm:$0xff]
    %v507 = vld [vmem:[#allocation13 + $0x1f0] sm:$0xff]
    %v508 = vld [vmem:[#allocation13 + $0x1f8] sm:$0xff]
    %v509 = vld [vmem:[#allocation8 + $0x7] sm:$0xf]
    %v510 = vpack.c.bf16 %v443, %v443
    %v511 = vpack.c.bf16 %v444, %v444
    %v513 = vlaneseq
    %v514 = vshrl.u32 %v513, 7
    %v515 = vsub.s32 0, %v514
    %v516 = vrot.slane %v509, %v515
    %v517 = vlaneseq
    %v518 = vshrl.u32 %v517, 7
    %v519 = vsub.s32 1, %v518
    %v520 = vrot.slane %v509, %v519
    %v521 = vlaneseq
    %v522 = vshrl.u32 %v521, 7
    %v523 = vsub.s32 2, %v522
    %v524 = vrot.slane %v509, %v523
    %v525 = vlaneseq
    %v526 = vshrl.u32 %v525, 7
    %v527 = vsub.s32 3, %v526
    %v528 = vrot.slane %v509, %v527
    %v597 = vunpack.c.l.b16 %v445
    %v598 = vunpack.c.h.b16 %v445
    %v599 = vunpack.c.l.b16 %v446
    %v600 = vunpack.c.h.b16 %v446
    %v601 = vunpack.c.l.b16 %v447
    %v602 = vunpack.c.h.b16 %v447
    %v603 = vunpack.c.l.b16 %v448
    %v604 = vunpack.c.h.b16 %v448
    %v605 = vunpack.c.l.b16 %v449
    %v606 = vunpack.c.h.b16 %v449
    %v607 = vunpack.c.l.b16 %v450
    %v608 = vunpack.c.h.b16 %v450
    %v609 = vunpack.c.l.b16 %v451
    %v610 = vunpack.c.h.b16 %v451
    %v611 = vunpack.c.l.b16 %v452
    %v612 = vunpack.c.h.b16 %v452
    %v613 = vunpack.c.l.b16 %v453
    %v614 = vunpack.c.h.b16 %v453
    %v615 = vunpack.c.l.b16 %v454
    %v616 = vunpack.c.h.b16 %v454
    %v617 = vunpack.c.l.b16 %v455
    %v618 = vunpack.c.h.b16 %v455
    %v619 = vunpack.c.l.b16 %v456
    %v620 = vunpack.c.h.b16 %v456
    %v621 = vunpack.c.l.b16 %v457
    %v622 = vunpack.c.h.b16 %v457
    %v623 = vunpack.c.l.b16 %v458
    %v624 = vunpack.c.h.b16 %v458
    %v625 = vunpack.c.l.b16 %v459
    %v626 = vunpack.c.h.b16 %v459
    %v627 = vunpack.c.l.b16 %v460
    %v628 = vunpack.c.h.b16 %v460
    %v629 = vunpack.c.l.b16 %v461
    %v630 = vunpack.c.h.b16 %v461
    %v631 = vunpack.c.l.b16 %v462
    %v632 = vunpack.c.h.b16 %v462
    %v633 = vunpack.c.l.b16 %v463
    %v634 = vunpack.c.h.b16 %v463
    %v635 = vunpack.c.l.b16 %v464
    %v636 = vunpack.c.h.b16 %v464
    %v637 = vunpack.c.l.b16 %v465
    %v638 = vunpack.c.h.b16 %v465
    %v639 = vunpack.c.l.b16 %v466
    %v640 = vunpack.c.h.b16 %v466
    %v641 = vunpack.c.l.b16 %v467
    %v642 = vunpack.c.h.b16 %v467
    %v643 = vunpack.c.l.b16 %v468
    %v644 = vunpack.c.h.b16 %v468
    %v645 = vunpack.c.l.b16 %v469
    %v646 = vunpack.c.h.b16 %v469
    %v647 = vunpack.c.l.b16 %v470
    %v648 = vunpack.c.h.b16 %v470
    %v649 = vunpack.c.l.b16 %v471
    %v650 = vunpack.c.h.b16 %v471
    %v651 = vunpack.c.l.b16 %v472
    %v652 = vunpack.c.h.b16 %v472
    %v653 = vunpack.c.l.b16 %v473
    %v654 = vunpack.c.h.b16 %v473
    %v655 = vunpack.c.l.b16 %v474
    %v656 = vunpack.c.h.b16 %v474
    %v657 = vunpack.c.l.b16 %v475
    %v658 = vunpack.c.h.b16 %v475
    %v659 = vunpack.c.l.b16 %v476
    %v660 = vunpack.c.h.b16 %v476
    %v661 = vunpack.c.l.b16 %v477
    %v662 = vunpack.c.h.b16 %v477
    %v663 = vunpack.c.l.b16 %v478
    %v664 = vunpack.c.h.b16 %v478
    %v665 = vunpack.c.l.b16 %v479
    %v666 = vunpack.c.h.b16 %v479
    %v667 = vunpack.c.l.b16 %v480
    %v668 = vunpack.c.h.b16 %v480
    %v669 = vunpack.c.l.b16 %v481
    %v670 = vunpack.c.h.b16 %v481
    %v671 = vunpack.c.l.b16 %v482
    %v672 = vunpack.c.h.b16 %v482
    %v673 = vunpack.c.l.b16 %v483
    %v674 = vunpack.c.h.b16 %v483
    %v675 = vunpack.c.l.b16 %v484
    %v676 = vunpack.c.h.b16 %v484
    %v677 = vunpack.c.l.b16 %v485
    %v678 = vunpack.c.h.b16 %v485
    %v679 = vunpack.c.l.b16 %v486
    %v680 = vunpack.c.h.b16 %v486
    %v681 = vunpack.c.l.b16 %v487
    %v682 = vunpack.c.h.b16 %v487
    %v683 = vunpack.c.l.b16 %v488
    %v684 = vunpack.c.h.b16 %v488
    %v685 = vunpack.c.l.b16 %v489
    %v686 = vunpack.c.h.b16 %v489
    %v687 = vunpack.c.l.b16 %v490
    %v688 = vunpack.c.h.b16 %v490
    %v689 = vunpack.c.l.b16 %v491
    %v690 = vunpack.c.h.b16 %v491
    %v691 = vunpack.c.l.b16 %v492
    %v692 = vunpack.c.h.b16 %v492
    %v693 = vunpack.c.l.b16 %v493
    %v694 = vunpack.c.h.b16 %v493
    %v695 = vunpack.c.l.b16 %v494
    %v696 = vunpack.c.h.b16 %v494
    %v697 = vunpack.c.l.b16 %v495
    %v698 = vunpack.c.h.b16 %v495
    %v699 = vunpack.c.l.b16 %v496
    %v700 = vunpack.c.h.b16 %v496
    %v701 = vunpack.c.l.b16 %v497
    %v702 = vunpack.c.h.b16 %v497
    %v703 = vunpack.c.l.b16 %v498
    %v704 = vunpack.c.h.b16 %v498
    %v705 = vunpack.c.l.b16 %v499
    %v706 = vunpack.c.h.b16 %v499
    %v707 = vunpack.c.l.b16 %v500
    %v708 = vunpack.c.h.b16 %v500
    %v709 = vunpack.c.l.b16 %v501
    %v710 = vunpack.c.h.b16 %v501
    %v711 = vunpack.c.l.b16 %v502
    %v712 = vunpack.c.h.b16 %v502
    %v713 = vunpack.c.l.b16 %v503
    %v714 = vunpack.c.h.b16 %v503
    %v715 = vunpack.c.l.b16 %v504
    %v716 = vunpack.c.h.b16 %v504
    %v717 = vunpack.c.l.b16 %v505
    %v718 = vunpack.c.h.b16 %v505
    %v719 = vunpack.c.l.b16 %v506
    %v720 = vunpack.c.h.b16 %v506
    %v721 = vunpack.c.l.b16 %v507
    %v722 = vunpack.c.h.b16 %v507
    %v723 = vunpack.c.l.b16 %v508
    %v724 = vunpack.c.h.b16 %v508
    %v725 = vpack.c.b16 %v601, %v597
    %v726 = vpack.c.b16 %v602, %v598
    %v727 = vpack.c.b16 %v603, %v599
    %v728 = vpack.c.b16 %v604, %v600
    %v729 = vpack.c.b16 %v609, %v605
    %v730 = vpack.c.b16 %v610, %v606
    %v731 = vpack.c.b16 %v611, %v607
    %v732 = vpack.c.b16 %v612, %v608
    %v733 = vpack.c.b16 %v617, %v613
    %v734 = vpack.c.b16 %v618, %v614
    %v735 = vpack.c.b16 %v619, %v615
    %v736 = vpack.c.b16 %v620, %v616
    %v737 = vpack.c.b16 %v625, %v621
    %v738 = vpack.c.b16 %v626, %v622
    %v739 = vpack.c.b16 %v627, %v623
    %v740 = vpack.c.b16 %v628, %v624
    %v741 = vpack.c.b16 %v633, %v629
    %v742 = vpack.c.b16 %v634, %v630
    %v743 = vpack.c.b16 %v635, %v631
    %v744 = vpack.c.b16 %v636, %v632
    %v745 = vpack.c.b16 %v641, %v637
    %v746 = vpack.c.b16 %v642, %v638
    %v747 = vpack.c.b16 %v643, %v639
    %v748 = vpack.c.b16 %v644, %v640
    %v749 = vpack.c.b16 %v649, %v645
    %v750 = vpack.c.b16 %v650, %v646
    %v751 = vpack.c.b16 %v651, %v647
    %v752 = vpack.c.b16 %v652, %v648
    %v753 = vpack.c.b16 %v657, %v653
    %v754 = vpack.c.b16 %v658, %v654
    %v755 = vpack.c.b16 %v659, %v655
    %v756 = vpack.c.b16 %v660, %v656
    %v757 = vpack.c.b16 %v665, %v661
    %v758 = vpack.c.b16 %v666, %v662
    %v759 = vpack.c.b16 %v667, %v663
    %v760 = vpack.c.b16 %v668, %v664
    %v761 = vpack.c.b16 %v673, %v669
    %v762 = vpack.c.b16 %v674, %v670
    %v763 = vpack.c.b16 %v675, %v671
    %v764 = vpack.c.b16 %v676, %v672
    %v765 = vpack.c.b16 %v681, %v677
    %v766 = vpack.c.b16 %v682, %v678
    %v767 = vpack.c.b16 %v683, %v679
    %v768 = vpack.c.b16 %v684, %v680
    %v769 = vpack.c.b16 %v689, %v685
    %v770 = vpack.c.b16 %v690, %v686
    %v771 = vpack.c.b16 %v691, %v687
    %v772 = vpack.c.b16 %v692, %v688
    %v773 = vpack.c.b16 %v697, %v693
    %v774 = vpack.c.b16 %v698, %v694
    %v775 = vpack.c.b16 %v699, %v695
    %v776 = vpack.c.b16 %v700, %v696
    %v777 = vpack.c.b16 %v705, %v701
    %v778 = vpack.c.b16 %v706, %v702
    %v779 = vpack.c.b16 %v707, %v703
    %v780 = vpack.c.b16 %v708, %v704
    %v781 = vpack.c.b16 %v713, %v709
    %v782 = vpack.c.b16 %v714, %v710
    %v783 = vpack.c.b16 %v715, %v711
    %v784 = vpack.c.b16 %v716, %v712
    %v785 = vpack.c.b16 %v721, %v717
    %v786 = vpack.c.b16 %v722, %v718
    %v787 = vpack.c.b16 %v723, %v719
    %v788 = vpack.c.b16 %v724, %v720
    %853 = vmatprep.subr.bf16.mxu0 %v754
    %854 = vmatpush1.bf16.msra.mxu0 %v753
    %855 = vmatprep.subr.bf16.mxu0 %v750
    %856 = vmatpush1.bf16.msra.mxu0 %v749
    %857 = vmatprep.subr.bf16.mxu0 %v746
    %858 = vmatpush1.bf16.msra.mxu0 %v745
    %859 = vmatprep.subr.bf16.mxu0 %v742
    %860 = vmatpush1.bf16.msra.mxu0 %v741
    %861 = vmatprep.subr.bf16.mxu0 %v738
    %862 = vmatpush1.bf16.msra.mxu0 %v737
    %863 = vmatprep.subr.bf16.mxu0 %v734
    %864 = vmatpush1.bf16.msra.mxu0 %v733
    %865 = vmatprep.subr.bf16.mxu0 %v730
    %866 = vmatpush1.bf16.msra.mxu0 %v729
    %867 = vmatprep.subr.bf16.mxu0 %v726
    %868 = vmatpush1.bf16.msra.mxu0 %v725
    %869 = vmatprep.subr.bf16.mxu0 %v786
    %870 = vmatpush2.bf16.msra.mxu0 %v785
    %871 = vmatprep.subr.bf16.mxu0 %v782
    %872 = vmatpush2.bf16.msra.mxu0 %v781
    %873 = vmatprep.subr.bf16.mxu0 %v778
    %874 = vmatpush2.bf16.msra.mxu0 %v777
    %875 = vmatprep.subr.bf16.mxu0 %v774
    %876 = vmatpush2.bf16.msra.mxu0 %v773
    %877 = vmatprep.subr.bf16.mxu0 %v770
    %878 = vmatpush2.bf16.msra.mxu0 %v769
    %879 = vmatprep.subr.bf16.mxu0 %v766
    %880 = vmatpush2.bf16.msra.mxu0 %v765
    %881 = vmatprep.subr.bf16.mxu0 %v762
    %882 = vmatpush2.bf16.msra.mxu0 %v761
    %883 = vmatprep.subr.bf16.mxu0 %v758
    %884 = vmatpush2.bf16.msra.mxu0 %v757
    %885 = vmatprep.mubr.bf16.mxu0 %v511
    %886 = vmatmul.mubr.bf16.gmra.mxu0 %v510
    %v887 = vpop.f32.mrf.mxu0
    %v888 = vadd.f32 %v516, %v887
    %v889 = vpop.f32.mrf.mxu0
    %v890 = vadd.f32 %v520, %v889
    %v891 = vpop.f32.mrf.mxu0
    %v892 = vpop.f32.mrf.mxu0
    %893 = vdwg.mxu0
    %894 = vmatprep.subr.bf16.mxu0 %v756
    %895 = vmatpush1.bf16.msra.mxu0 %v755
    %896 = vmatprep.subr.bf16.mxu0 %v752
    %897 = vmatpush1.bf16.msra.mxu0 %v751
    %898 = vmatprep.subr.bf16.mxu0 %v748
    %899 = vmatpush1.bf16.msra.mxu0 %v747
    %900 = vmatprep.subr.bf16.mxu0 %v744
    %901 = vmatpush1.bf16.msra.mxu0 %v743
    %902 = vmatprep.subr.bf16.mxu0 %v740
    %903 = vmatpush1.bf16.msra.mxu0 %v739
    %904 = vmatprep.subr.bf16.mxu0 %v736
    %905 = vmatpush1.bf16.msra.mxu0 %v735
    %906 = vmatprep.subr.bf16.mxu0 %v732
    %907 = vmatpush1.bf16.msra.mxu0 %v731
    %908 = vmatprep.subr.bf16.mxu0 %v728
    %909 = vmatpush1.bf16.msra.mxu0 %v727
    %910 = vmatprep.subr.bf16.mxu0 %v788
    %911 = vmatpush2.bf16.msra.mxu0 %v787
    %912 = vmatprep.subr.bf16.mxu0 %v784
    %913 = vmatpush2.bf16.msra.mxu0 %v783
    %914 = vmatprep.subr.bf16.mxu0 %v780
    %915 = vmatpush2.bf16.msra.mxu0 %v779
    %916 = vmatprep.subr.bf16.mxu0 %v776
    %917 = vmatpush2.bf16.msra.mxu0 %v775
    %918 = vmatprep.subr.bf16.mxu0 %v772
    %919 = vmatpush2.bf16.msra.mxu0 %v771
    %920 = vmatprep.subr.bf16.mxu0 %v768
    %921 = vmatpush2.bf16.msra.mxu0 %v767
    %922 = vmatprep.subr.bf16.mxu0 %v764
    %923 = vmatpush2.bf16.msra.mxu0 %v763
    %924 = vmatprep.subr.bf16.mxu0 %v760
    %925 = vmatpush2.bf16.msra.mxu0 %v759
    %926 = vmatprep.mubr.bf16.mxu0 %v511
    %927 = vmatmul.mubr.bf16.gmra.mxu0 %v510
    %v928 = vpop.f32.mrf.mxu0
    %v929 = vadd.f32 %v524, %v928
    %v930 = vpop.f32.mrf.mxu0
    %v931 = vadd.f32 %v528, %v930
    %v932 = vpop.f32.mrf.mxu0
    %v933 = vpop.f32.mrf.mxu0
    %934 = vdwg.mxu0
    %v935 = vld [vmem:[#allocation8 + $0xb] sm:$0xf]
    %v936 = vld [vmem:[#allocation8 + $0xf] sm:$0xf]
    %v937 = vrot.slane %v888, 4
    %v938 = vadd.f32 %v888, %v937
    %v939 = vrot.slane %v938, 2
    %v940 = vadd.f32 %v938, %v939
    %v941 = vrot.slane %v940, 1
    %v942 = vadd.f32 %v940, %v941
    %v943 = vrot.slane %v890, 4
    %v944 = vadd.f32 %v890, %v943
    %v945 = vrot.slane %v944, 2
    %v946 = vadd.f32 %v944, %v945
    %v947 = vrot.slane %v946, 1
    %v948 = vadd.f32 %v946, %v947
    %v949 = vrot.slane %v929, 4
    %v950 = vadd.f32 %v929, %v949
    %v951 = vrot.slane %v950, 2
    %v952 = vadd.f32 %v950, %v951
    %v953 = vrot.slane %v952, 1
    %v954 = vadd.f32 %v952, %v953
    %v955 = vrot.slane %v931, 4
    %v956 = vadd.f32 %v931, %v955
    %v957 = vrot.slane %v956, 2
    %v958 = vadd.f32 %v956, %v957
    %v959 = vrot.slane %v958, 1
    %v960 = vadd.f32 %v958, %v959
    %v961 = vmul.f32 %v942, %v346
    %v962 = vmul.f32 %v948, %v346
    %v963 = vmul.f32 %v954, %v346
    %v964 = vmul.f32 %v960, %v346
    %v965 = vmul.f32 %v888, %v888
    %v966 = vmul.f32 %v890, %v890
    %v967 = vmul.f32 %v929, %v929
    %v968 = vmul.f32 %v931, %v931
    %v969 = vrot.slane %v965, 4
    %v970 = vadd.f32 %v965, %v969
    %v971 = vrot.slane %v970, 2
    %v972 = vadd.f32 %v970, %v971
    %v973 = vrot.slane %v972, 1
    %v974 = vadd.f32 %v972, %v973
    %v975 = vrot.slane %v966, 4
    %v976 = vadd.f32 %v966, %v975
    %v977 = vrot.slane %v976, 2
    %v978 = vadd.f32 %v976, %v977
    %v979 = vrot.slane %v978, 1
    %v980 = vadd.f32 %v978, %v979
    %v981 = vrot.slane %v967, 4
    %v982 = vadd.f32 %v967, %v981
    %v983 = vrot.slane %v982, 2
    %v984 = vadd.f32 %v982, %v983
    %v985 = vrot.slane %v984, 1
    %v986 = vadd.f32 %v984, %v985
    %v987 = vrot.slane %v968, 4
    %v988 = vadd.f32 %v968, %v987
    %v989 = vrot.slane %v988, 2
    %v990 = vadd.f32 %v988, %v989
    %v991 = vrot.slane %v990, 1
    %v992 = vadd.f32 %v990, %v991
    %v993 = vmul.f32 %v974, %v346
    %v994 = vmul.f32 %v980, %v346
    %v995 = vmul.f32 %v986, %v346
    %v996 = vmul.f32 %v992, %v346
    %v997 = vmul.f32 %v961, %v961
    %v998 = vmul.f32 %v962, %v962
    %v999 = vmul.f32 %v963, %v963
    %v1000 = vmul.f32 %v964, %v964
    %v1001 = vsub.f32 %v993, %v997
    %v1002 = vsub.f32 %v994, %v998
    %v1003 = vsub.f32 %v995, %v999
    %v1004 = vsub.f32 %v996, %v1000
    %v1005 = vmax.f32 %v1001, 0.0
    %v1006 = vmax.f32 %v1002, 0.0
    %v1007 = vmax.f32 %v1003, 0.0
    %v1008 = vmax.f32 %v1004, 0.0
    %v1009 = vadd.f32 %v1005, 0.8
    %v1010 = vadd.f32 %v1006, 0.8
    %v1011 = vadd.f32 %v1007, 0.8
    %v1012 = vadd.f32 %v1008, 0.8
    %v1013 = vrsqrt.pop %v1009
    %v1014 = vrsqrt.pop %v1010
    %v1015 = vrsqrt.pop %v1011
    %v1016 = vrsqrt.pop %v1012
    %v1021 = vcombine.low %v1013, %v1014
    %v1022 = vcombine.low %v1015, %v1016
    %v1024 = vunpack.c.l.s4 1966171168
    %v1025 = vunpack.c.0.s8 %v1024
    %v1026 = vlaneseq
    %v1027 = vshrl.u32 %v1026, 7
    %v1028 = vsub.s32 %v1025, %v1027
    %v1029 = vrot.slane %v1021, %v1028
    %v1031 = vunpack.c.l.s4 1966171168
    %v1032 = vunpack.c.0.s8 %v1031
    %v1033 = vlaneseq
    %v1034 = vshrl.u32 %v1033, 7
    %v1035 = vsub.s32 %v1032, %v1034
    %v1036 = vrot.slane %v1022, %v1035
    %v1037 = vcombine.low %v1029, %v1036
    %v1039 = vunpack.c.l.s4 1966171168
    %v1040 = vunpack.c.0.s8 %v1039
    %v1041 = vlaneseq
    %v1042 = vshrl.u32 %v1041, 7
    %v1043 = vsub.s32 %v1040, %v1042
    %v1044 = vrot.slane %v1037, %v1043
    %v1046 = vmul.f32 %v935, %v1044
    %v1048 = vlaneseq
    %v1049 = vshrl.u32 %v1048, 7
    %v1050 = vsub.s32 0, %v1049
    %v1051 = vrot.slane %v1046, %v1050
    %v1052 = vlaneseq
    %v1053 = vshrl.u32 %v1052, 7
    %v1054 = vsub.s32 1, %v1053
    %v1055 = vrot.slane %v1046, %v1054
    %v1056 = vlaneseq
    %v1057 = vshrl.u32 %v1056, 7
    %v1058 = vsub.s32 2, %v1057
    %v1059 = vrot.slane %v1046, %v1058
    %v1060 = vlaneseq
    %v1061 = vshrl.u32 %v1060, 7
    %v1062 = vsub.s32 3, %v1061
    %v1063 = vrot.slane %v1046, %v1062
    %v1068 = vmul.f32 %v961, %v1051
    %v1069 = vmul.f32 %v962, %v1055
    %v1070 = vmul.f32 %v963, %v1059
    %v1071 = vmul.f32 %v964, %v1063
    %v1076 = vcombine.low %v1068, %v1069
    %v1077 = vcombine.low %v1070, %v1071
    %v1079 = vunpack.c.l.s4 1966171168
    %v1080 = vunpack.c.0.s8 %v1079
    %v1081 = vlaneseq
    %v1082 = vshrl.u32 %v1081, 7
    %v1083 = vsub.s32 %v1080, %v1082
    %v1084 = vrot.slane %v1076, %v1083
    %v1086 = vunpack.c.l.s4 1966171168
    %v1087 = vunpack.c.0.s8 %v1086
    %v1088 = vlaneseq
    %v1089 = vshrl.u32 %v1088, 7
    %v1090 = vsub.s32 %v1087, %v1089
    %v1091 = vrot.slane %v1077, %v1090
    %v1092 = vcombine.low %v1084, %v1091
    %v1094 = vunpack.c.l.s4 1966171168
    %v1095 = vunpack.c.0.s8 %v1094
    %v1096 = vlaneseq
    %v1097 = vshrl.u32 %v1096, 7
    %v1098 = vsub.s32 %v1095, %v1097
    %v1099 = vrot.slane %v1092, %v1098
    %v1101 = vsub.f32 %v936, %v1099
    %v1102 = vmul.f32 %v888, %v1051
    %v1103 = vmul.f32 %v890, %v1055
    %v1104 = vmul.f32 %v929, %v1059
    %v1105 = vmul.f32 %v931, %v1063
    %v1107 = vlaneseq
    %v1108 = vshrl.u32 %v1107, 7
    %v1109 = vsub.s32 0, %v1108
    %v1110 = vrot.slane %v1101, %v1109
    %v1111 = vlaneseq
    %v1112 = vshrl.u32 %v1111, 7
    %v1113 = vsub.s32 1, %v1112
    %v1114 = vrot.slane %v1101, %v1113
    %v1115 = vlaneseq
    %v1116 = vshrl.u32 %v1115, 7
    %v1117 = vsub.s32 2, %v1116
    %v1118 = vrot.slane %v1101, %v1117
    %v1119 = vlaneseq
    %v1120 = vshrl.u32 %v1119, 7
    %v1121 = vsub.s32 3, %v1120
    %v1122 = vrot.slane %v1101, %v1121
    %v1127 = vadd.f32 %v1102, %v1110
    %v1128 = vadd.f32 %v1103, %v1114
    %v1129 = vadd.f32 %v1104, %v1118
    %v1130 = vadd.f32 %v1105, %v1122
    %v1131 = vmul.f32 %v1127, 0.2
    %v1132 = vmul.f32 %v1128, 0.2
    %v1133 = vmul.f32 %v1129, 0.2
    %v1134 = vmul.f32 %v1130, 0.2
    %v1135 = vmax.f32 %v1127, %v1131
    %v1136 = vmax.f32 %v1128, %v1132
    %v1137 = vmax.f32 %v1129, %v1133
    %v1138 = vmax.f32 %v1130, %v1134
    %s1139 = smul.u32 4, 64
    %s1140 = smul.u32 %s1139, 8
    %s1141 = sshll.u32 %s1140, 4
    %1142 = dma.done [#allocation4], %s1141
    %v1143 = vld [vmem:[#allocation2] sm:$0xff]
    %v1144 = vld [vmem:[#allocation2 + $0x8] sm:$0xff]
    %v1145 = vld [vmem:[#allocation2 + $0x10] sm:$0xff]
    %v1146 = vld [vmem:[#allocation2 + $0x18] sm:$0xff]
    %v1147 = vld [vmem:[#allocation2 + $0x20] sm:$0xff]
    %v1148 = vld [vmem:[#allocation2 + $0x28] sm:$0xff]
    %v1149 = vld [vmem:[#allocation2 + $0x30] sm:$0xff]
    %v1150 = vld [vmem:[#allocation2 + $0x38] sm:$0xff]
    %v1151 = vld [vmem:[#allocation2 + $0x40] sm:$0xff]
    %v1152 = vld [vmem:[#allocation2 + $0x48] sm:$0xff]
    %v1153 = vld [vmem:[#allocation2 + $0x50] sm:$0xff]
    %v1154 = vld [vmem:[#allocation2 + $0x58] sm:$0xff]
    %v1155 = vld [vmem:[#allocation2 + $0x60] sm:$0xff]
    %v1156 = vld [vmem:[#allocation2 + $0x68] sm:$0xff]
    %v1157 = vld [vmem:[#allocation2 + $0x70] sm:$0xff]
    %v1158 = vld [vmem:[#allocation2 + $0x78] sm:$0xff]
    %v1159 = vld [vmem:[#allocation2 + $0x80] sm:$0xff]
    %v1160 = vld [vmem:[#allocation2 + $0x88] sm:$0xff]
    %v1161 = vld [vmem:[#allocation2 + $0x90] sm:$0xff]
    %v1162 = vld [vmem:[#allocation2 + $0x98] sm:$0xff]
    %v1163 = vld [vmem:[#allocation2 + $0xa0] sm:$0xff]
    %v1164 = vld [vmem:[#allocation2 + $0xa8] sm:$0xff]
    %v1165 = vld [vmem:[#allocation2 + $0xb0] sm:$0xff]
    %v1166 = vld [vmem:[#allocation2 + $0xb8] sm:$0xff]
    %v1167 = vld [vmem:[#allocation2 + $0xc0] sm:$0xff]
    %v1168 = vld [vmem:[#allocation2 + $0xc8] sm:$0xff]
    %v1169 = vld [vmem:[#allocation2 + $0xd0] sm:$0xff]
    %v1170 = vld [vmem:[#allocation2 + $0xd8] sm:$0xff]
    %v1171 = vld [vmem:[#allocation2 + $0xe0] sm:$0xff]
    %v1172 = vld [vmem:[#allocation2 + $0xe8] sm:$0xff]
    %v1173 = vld [vmem:[#allocation2 + $0xf0] sm:$0xff]
    %v1174 = vld [vmem:[#allocation2 + $0xf8] sm:$0xff]
    %v1175 = vld [vmem:[#allocation2 + $0x100] sm:$0xff]
    %v1176 = vld [vmem:[#allocation2 + $0x108] sm:$0xff]
    %v1177 = vld [vmem:[#allocation2 + $0x110] sm:$0xff]
    %v1178 = vld [vmem:[#allocation2 + $0x118] sm:$0xff]
    %v1179 = vld [vmem:[#allocation2 + $0x120] sm:$0xff]
    %v1180 = vld [vmem:[#allocation2 + $0x128] sm:$0xff]
    %v1181 = vld [vmem:[#allocation2 + $0x130] sm:$0xff]
    %v1182 = vld [vmem:[#allocation2 + $0x138] sm:$0xff]
    %v1183 = vld [vmem:[#allocation2 + $0x140] sm:$0xff]
    %v1184 = vld [vmem:[#allocation2 + $0x148] sm:$0xff]
    %v1185 = vld [vmem:[#allocation2 + $0x150] sm:$0xff]
    %v1186 = vld [vmem:[#allocation2 + $0x158] sm:$0xff]
    %v1187 = vld [vmem:[#allocation2 + $0x160] sm:$0xff]
    %v1188 = vld [vmem:[#allocation2 + $0x168] sm:$0xff]
    %v1189 = vld [vmem:[#allocation2 + $0x170] sm:$0xff]
    %v1190 = vld [vmem:[#allocation2 + $0x178] sm:$0xff]
    %v1191 = vld [vmem:[#allocation2 + $0x180] sm:$0xff]
    %v1192 = vld [vmem:[#allocation2 + $0x188] sm:$0xff]
    %v1193 = vld [vmem:[#allocation2 + $0x190] sm:$0xff]
    %v1194 = vld [vmem:[#allocation2 + $0x198] sm:$0xff]
    %v1195 = vld [vmem:[#allocation2 + $0x1a0] sm:$0xff]
    %v1196 = vld [vmem:[#allocation2 + $0x1a8] sm:$0xff]
    %v1197 = vld [vmem:[#allocation2 + $0x1b0] sm:$0xff]
    %v1198 = vld [vmem:[#allocation2 + $0x1b8] sm:$0xff]
    %v1199 = vld [vmem:[#allocation2 + $0x1c0] sm:$0xff]
    %v1200 = vld [vmem:[#allocation2 + $0x1c8] sm:$0xff]
    %v1201 = vld [vmem:[#allocation2 + $0x1d0] sm:$0xff]
    %v1202 = vld [vmem:[#allocation2 + $0x1d8] sm:$0xff]
    %v1203 = vld [vmem:[#allocation2 + $0x1e0] sm:$0xff]
    %v1204 = vld [vmem:[#allocation2 + $0x1e8] sm:$0xff]
    %v1205 = vld [vmem:[#allocation2 + $0x1f0] sm:$0xff]
    %v1206 = vld [vmem:[#allocation2 + $0x1f8] sm:$0xff]
    %v1207 = vld [vmem:[#allocation2 + $0x200] sm:$0xff]
    %v1208 = vld [vmem:[#allocation2 + $0x208] sm:$0xff]
    %v1209 = vld [vmem:[#allocation2 + $0x210] sm:$0xff]
    %v1210 = vld [vmem:[#allocation2 + $0x218] sm:$0xff]
    %v1211 = vld [vmem:[#allocation2 + $0x220] sm:$0xff]
    %v1212 = vld [vmem:[#allocation2 + $0x228] sm:$0xff]
    %v1213 = vld [vmem:[#allocation2 + $0x230] sm:$0xff]
    %v1214 = vld [vmem:[#allocation2 + $0x238] sm:$0xff]
    %v1215 = vld [vmem:[#allocation2 + $0x240] sm:$0xff]
    %v1216 = vld [vmem:[#allocation2 + $0x248] sm:$0xff]
    %v1217 = vld [vmem:[#allocation2 + $0x250] sm:$0xff]
    %v1218 = vld [vmem:[#allocation2 + $0x258] sm:$0xff]
    %v1219 = vld [vmem:[#allocation2 + $0x260] sm:$0xff]
    %v1220 = vld [vmem:[#allocation2 + $0x268] sm:$0xff]
    %v1221 = vld [vmem:[#allocation2 + $0x270] sm:$0xff]
    %v1222 = vld [vmem:[#allocation2 + $0x278] sm:$0xff]
    %v1223 = vld [vmem:[#allocation2 + $0x280] sm:$0xff]
    %v1224 = vld [vmem:[#allocation2 + $0x288] sm:$0xff]
    %v1225 = vld [vmem:[#allocation2 + $0x290] sm:$0xff]
    %v1226 = vld [vmem:[#allocation2 + $0x298] sm:$0xff]
    %v1227 = vld [vmem:[#allocation2 + $0x2a0] sm:$0xff]
    %v1228 = vld [vmem:[#allocation2 + $0x2a8] sm:$0xff]
    %v1229 = vld [vmem:[#allocation2 + $0x2b0] sm:$0xff]
    %v1230 = vld [vmem:[#allocation2 + $0x2b8] sm:$0xff]
    %v1231 = vld [vmem:[#allocation2 + $0x2c0] sm:$0xff]
    %v1232 = vld [vmem:[#allocation2 + $0x2c8] sm:$0xff]
    %v1233 = vld [vmem:[#allocation2 + $0x2d0] sm:$0xff]
    %v1234 = vld [vmem:[#allocation2 + $0x2d8] sm:$0xff]
    %v1235 = vld [vmem:[#allocation2 + $0x2e0] sm:$0xff]
    %v1236 = vld [vmem:[#allocation2 + $0x2e8] sm:$0xff]
    %v1237 = vld [vmem:[#allocation2 + $0x2f0] sm:$0xff]
    %v1238 = vld [vmem:[#allocation2 + $0x2f8] sm:$0xff]
    %v1239 = vld [vmem:[#allocation2 + $0x300] sm:$0xff]
    %v1240 = vld [vmem:[#allocation2 + $0x308] sm:$0xff]
    %v1241 = vld [vmem:[#allocation2 + $0x310] sm:$0xff]
    %v1242 = vld [vmem:[#allocation2 + $0x318] sm:$0xff]
    %v1243 = vld [vmem:[#allocation2 + $0x320] sm:$0xff]
    %v1244 = vld [vmem:[#allocation2 + $0x328] sm:$0xff]
    %v1245 = vld [vmem:[#allocation2 + $0x330] sm:$0xff]
    %v1246 = vld [vmem:[#allocation2 + $0x338] sm:$0xff]
    %v1247 = vld [vmem:[#allocation2 + $0x340] sm:$0xff]
    %v1248 = vld [vmem:[#allocation2 + $0x348] sm:$0xff]
    %v1249 = vld [vmem:[#allocation2 + $0x350] sm:$0xff]
    %v1250 = vld [vmem:[#allocation2 + $0x358] sm:$0xff]
    %v1251 = vld [vmem:[#allocation2 + $0x360] sm:$0xff]
    %v1252 = vld [vmem:[#allocation2 + $0x368] sm:$0xff]
    %v1253 = vld [vmem:[#allocation2 + $0x370] sm:$0xff]
    %v1254 = vld [vmem:[#allocation2 + $0x378] sm:$0xff]
    %v1255 = vld [vmem:[#allocation2 + $0x380] sm:$0xff]
    %v1256 = vld [vmem:[#allocation2 + $0x388] sm:$0xff]
    %v1257 = vld [vmem:[#allocation2 + $0x390] sm:$0xff]
    %v1258 = vld [vmem:[#allocation2 + $0x398] sm:$0xff]
    %v1259 = vld [vmem:[#allocation2 + $0x3a0] sm:$0xff]
    %v1260 = vld [vmem:[#allocation2 + $0x3a8] sm:$0xff]
    %v1261 = vld [vmem:[#allocation2 + $0x3b0] sm:$0xff]
    %v1262 = vld [vmem:[#allocation2 + $0x3b8] sm:$0xff]
    %v1263 = vld [vmem:[#allocation2 + $0x3c0] sm:$0xff]
    %v1264 = vld [vmem:[#allocation2 + $0x3c8] sm:$0xff]
    %v1265 = vld [vmem:[#allocation2 + $0x3d0] sm:$0xff]
    %v1266 = vld [vmem:[#allocation2 + $0x3d8] sm:$0xff]
    %v1267 = vld [vmem:[#allocation2 + $0x3e0] sm:$0xff]
    %v1268 = vld [vmem:[#allocation2 + $0x3e8] sm:$0xff]
    %v1269 = vld [vmem:[#allocation2 + $0x3f0] sm:$0xff]
    %v1270 = vld [vmem:[#allocation2 + $0x3f8] sm:$0xff]
    %v1271 = vld [vmem:[#allocation2 + $0x400] sm:$0xff]
    %v1272 = vld [vmem:[#allocation2 + $0x408] sm:$0xff]
    %v1273 = vld [vmem:[#allocation2 + $0x410] sm:$0xff]
    %v1274 = vld [vmem:[#allocation2 + $0x418] sm:$0xff]
    %v1275 = vld [vmem:[#allocation2 + $0x420] sm:$0xff]
    %v1276 = vld [vmem:[#allocation2 + $0x428] sm:$0xff]
    %v1277 = vld [vmem:[#allocation2 + $0x430] sm:$0xff]
    %v1278 = vld [vmem:[#allocation2 + $0x438] sm:$0xff]
    %v1279 = vld [vmem:[#allocation2 + $0x440] sm:$0xff]
    %v1280 = vld [vmem:[#allocation2 + $0x448] sm:$0xff]
    %v1281 = vld [vmem:[#allocation2 + $0x450] sm:$0xff]
    %v1282 = vld [vmem:[#allocation2 + $0x458] sm:$0xff]
    %v1283 = vld [vmem:[#allocation2 + $0x460] sm:$0xff]
    %v1284 = vld [vmem:[#allocation2 + $0x468] sm:$0xff]
    %v1285 = vld [vmem:[#allocation2 + $0x470] sm:$0xff]
    %v1286 = vld [vmem:[#allocation2 + $0x478] sm:$0xff]
    %v1287 = vld [vmem:[#allocation2 + $0x480] sm:$0xff]
    %v1288 = vld [vmem:[#allocation2 + $0x488] sm:$0xff]
    %v1289 = vld [vmem:[#allocation2 + $0x490] sm:$0xff]
    %v1290 = vld [vmem:[#allocation2 + $0x498] sm:$0xff]
    %v1291 = vld [vmem:[#allocation2 + $0x4a0] sm:$0xff]
    %v1292 = vld [vmem:[#allocation2 + $0x4a8] sm:$0xff]
    %v1293 = vld [vmem:[#allocation2 + $0x4b0] sm:$0xff]
    %v1294 = vld [vmem:[#allocation2 + $0x4b8] sm:$0xff]
    %v1295 = vld [vmem:[#allocation2 + $0x4c0] sm:$0xff]
    %v1296 = vld [vmem:[#allocation2 + $0x4c8] sm:$0xff]
    %v1297 = vld [vmem:[#allocation2 + $0x4d0] sm:$0xff]
    %v1298 = vld [vmem:[#allocation2 + $0x4d8] sm:$0xff]
    %v1299 = vld [vmem:[#allocation2 + $0x4e0] sm:$0xff]
    %v1300 = vld [vmem:[#allocation2 + $0x4e8] sm:$0xff]
    %v1301 = vld [vmem:[#allocation2 + $0x4f0] sm:$0xff]
    %v1302 = vld [vmem:[#allocation2 + $0x4f8] sm:$0xff]
    %v1303 = vld [vmem:[#allocation2 + $0x500] sm:$0xff]
    %v1304 = vld [vmem:[#allocation2 + $0x508] sm:$0xff]
    %v1305 = vld [vmem:[#allocation2 + $0x510] sm:$0xff]
    %v1306 = vld [vmem:[#allocation2 + $0x518] sm:$0xff]
    %v1307 = vld [vmem:[#allocation2 + $0x520] sm:$0xff]
    %v1308 = vld [vmem:[#allocation2 + $0x528] sm:$0xff]
    %v1309 = vld [vmem:[#allocation2 + $0x530] sm:$0xff]
    %v1310 = vld [vmem:[#allocation2 + $0x538] sm:$0xff]
    %v1311 = vld [vmem:[#allocation2 + $0x540] sm:$0xff]
    %v1312 = vld [vmem:[#allocation2 + $0x548] sm:$0xff]
    %v1313 = vld [vmem:[#allocation2 + $0x550] sm:$0xff]
    %v1314 = vld [vmem:[#allocation2 + $0x558] sm:$0xff]
    %v1315 = vld [vmem:[#allocation2 + $0x560] sm:$0xff]
    %v1316 = vld [vmem:[#allocation2 + $0x568] sm:$0xff]
    %v1317 = vld [vmem:[#allocation2 + $0x570] sm:$0xff]
    %v1318 = vld [vmem:[#allocation2 + $0x578] sm:$0xff]
    %v1319 = vld [vmem:[#allocation2 + $0x580] sm:$0xff]
    %v1320 = vld [vmem:[#allocation2 + $0x588] sm:$0xff]
    %v1321 = vld [vmem:[#allocation2 + $0x590] sm:$0xff]
    %v1322 = vld [vmem:[#allocation2 + $0x598] sm:$0xff]
    %v1323 = vld [vmem:[#allocation2 + $0x5a0] sm:$0xff]
    %v1324 = vld [vmem:[#allocation2 + $0x5a8] sm:$0xff]
    %v1325 = vld [vmem:[#allocation2 + $0x5b0] sm:$0xff]
    %v1326 = vld [vmem:[#allocation2 + $0x5b8] sm:$0xff]
    %v1327 = vld [vmem:[#allocation2 + $0x5c0] sm:$0xff]
    %v1328 = vld [vmem:[#allocation2 + $0x5c8] sm:$0xff]
    %v1329 = vld [vmem:[#allocation2 + $0x5d0] sm:$0xff]
    %v1330 = vld [vmem:[#allocation2 + $0x5d8] sm:$0xff]
    %v1331 = vld [vmem:[#allocation2 + $0x5e0] sm:$0xff]
    %v1332 = vld [vmem:[#allocation2 + $0x5e8] sm:$0xff]
    %v1333 = vld [vmem:[#allocation2 + $0x5f0] sm:$0xff]
    %v1334 = vld [vmem:[#allocation2 + $0x5f8] sm:$0xff]
    %v1335 = vld [vmem:[#allocation2 + $0x600] sm:$0xff]
    %v1336 = vld [vmem:[#allocation2 + $0x608] sm:$0xff]
    %v1337 = vld [vmem:[#allocation2 + $0x610] sm:$0xff]
    %v1338 = vld [vmem:[#allocation2 + $0x618] sm:$0xff]
    %v1339 = vld [vmem:[#allocation2 + $0x620] sm:$0xff]
    %v1340 = vld [vmem:[#allocation2 + $0x628] sm:$0xff]
    %v1341 = vld [vmem:[#allocation2 + $0x630] sm:$0xff]
    %v1342 = vld [vmem:[#allocation2 + $0x638] sm:$0xff]
    %v1343 = vld [vmem:[#allocation2 + $0x640] sm:$0xff]
    %v1344 = vld [vmem:[#allocation2 + $0x648] sm:$0xff]
    %v1345 = vld [vmem:[#allocation2 + $0x650] sm:$0xff]
    %v1346 = vld [vmem:[#allocation2 + $0x658] sm:$0xff]
    %v1347 = vld [vmem:[#allocation2 + $0x660] sm:$0xff]
    %v1348 = vld [vmem:[#allocation2 + $0x668] sm:$0xff]
    %v1349 = vld [vmem:[#allocation2 + $0x670] sm:$0xff]
    %v1350 = vld [vmem:[#allocation2 + $0x678] sm:$0xff]
    %v1351 = vld [vmem:[#allocation2 + $0x680] sm:$0xff]
    %v1352 = vld [vmem:[#allocation2 + $0x688] sm:$0xff]
    %v1353 = vld [vmem:[#allocation2 + $0x690] sm:$0xff]
    %v1354 = vld [vmem:[#allocation2 + $0x698] sm:$0xff]
    %v1355 = vld [vmem:[#allocation2 + $0x6a0] sm:$0xff]
    %v1356 = vld [vmem:[#allocation2 + $0x6a8] sm:$0xff]
    %v1357 = vld [vmem:[#allocation2 + $0x6b0] sm:$0xff]
    %v1358 = vld [vmem:[#allocation2 + $0x6b8] sm:$0xff]
    %v1359 = vld [vmem:[#allocation2 + $0x6c0] sm:$0xff]
    %v1360 = vld [vmem:[#allocation2 + $0x6c8] sm:$0xff]
    %v1361 = vld [vmem:[#allocation2 + $0x6d0] sm:$0xff]
    %v1362 = vld [vmem:[#allocation2 + $0x6d8] sm:$0xff]
    %v1363 = vld [vmem:[#allocation2 + $0x6e0] sm:$0xff]
    %v1364 = vld [vmem:[#allocation2 + $0x6e8] sm:$0xff]
    %v1365 = vld [vmem:[#allocation2 + $0x6f0] sm:$0xff]
    %v1366 = vld [vmem:[#allocation2 + $0x6f8] sm:$0xff]
    %v1367 = vld [vmem:[#allocation2 + $0x700] sm:$0xff]
    %v1368 = vld [vmem:[#allocation2 + $0x708] sm:$0xff]
    %v1369 = vld [vmem:[#allocation2 + $0x710] sm:$0xff]
    %v1370 = vld [vmem:[#allocation2 + $0x718] sm:$0xff]
    %v1371 = vld [vmem:[#allocation2 + $0x720] sm:$0xff]
    %v1372 = vld [vmem:[#allocation2 + $0x728] sm:$0xff]
    %v1373 = vld [vmem:[#allocation2 + $0x730] sm:$0xff]
    %v1374 = vld [vmem:[#allocation2 + $0x738] sm:$0xff]
    %v1375 = vld [vmem:[#allocation2 + $0x740] sm:$0xff]
    %v1376 = vld [vmem:[#allocation2 + $0x748] sm:$0xff]
    %v1377 = vld [vmem:[#allocation2 + $0x750] sm:$0xff]
    %v1378 = vld [vmem:[#allocation2 + $0x758] sm:$0xff]
    %v1379 = vld [vmem:[#allocation2 + $0x760] sm:$0xff]
    %v1380 = vld [vmem:[#allocation2 + $0x768] sm:$0xff]
    %v1381 = vld [vmem:[#allocation2 + $0x770] sm:$0xff]
    %v1382 = vld [vmem:[#allocation2 + $0x778] sm:$0xff]
    %v1383 = vld [vmem:[#allocation2 + $0x780] sm:$0xff]
    %v1384 = vld [vmem:[#allocation2 + $0x788] sm:$0xff]
    %v1385 = vld [vmem:[#allocation2 + $0x790] sm:$0xff]
    %v1386 = vld [vmem:[#allocation2 + $0x798] sm:$0xff]
    %v1387 = vld [vmem:[#allocation2 + $0x7a0] sm:$0xff]
    %v1388 = vld [vmem:[#allocation2 + $0x7a8] sm:$0xff]
    %v1389 = vld [vmem:[#allocation2 + $0x7b0] sm:$0xff]
    %v1390 = vld [vmem:[#allocation2 + $0x7b8] sm:$0xff]
    %v1391 = vld [vmem:[#allocation2 + $0x7c0] sm:$0xff]
    %v1392 = vld [vmem:[#allocation2 + $0x7c8] sm:$0xff]
    %v1393 = vld [vmem:[#allocation2 + $0x7d0] sm:$0xff]
    %v1394 = vld [vmem:[#allocation2 + $0x7d8] sm:$0xff]
    %v1395 = vld [vmem:[#allocation2 + $0x7e0] sm:$0xff]
    %v1396 = vld [vmem:[#allocation2 + $0x7e8] sm:$0xff]
    %v1397 = vld [vmem:[#allocation2 + $0x7f0] sm:$0xff]
    %v1398 = vld [vmem:[#allocation2 + $0x7f8] sm:$0xff]
    %v1399 = vld [vmem:[#allocation8 + $0x13] sm:$0xff]
    %v1400 = vpack.c.bf16 %v1135, %v1135
    %v1401 = vpack.c.bf16 %v1136, %v1136
    %v1402 = vpack.c.bf16 %v1137, %v1137
    %v1403 = vpack.c.bf16 %v1138, %v1138
    %v1405 = vlaneseq
    %v1406 = vshrl.u32 %v1405, 7
    %v1407 = vsub.s32 0, %v1406
    %v1408 = vrot.slane %v1399, %v1407
    %v1409 = vlaneseq
    %v1410 = vshrl.u32 %v1409, 7
    %v1411 = vsub.s32 1, %v1410
    %v1412 = vrot.slane %v1399, %v1411
    %v1413 = vlaneseq
    %v1414 = vshrl.u32 %v1413, 7
    %v1415 = vsub.s32 2, %v1414
    %v1416 = vrot.slane %v1399, %v1415
    %v1417 = vlaneseq
    %v1418 = vshrl.u32 %v1417, 7
    %v1419 = vsub.s32 3, %v1418
    %v1420 = vrot.slane %v1399, %v1419
    %v1421 = vlaneseq
    %v1422 = vshrl.u32 %v1421, 7
    %v1423 = vsub.s32 4, %v1422
    %v1424 = vrot.slane %v1399, %v1423
    %v1425 = vlaneseq
    %v1426 = vshrl.u32 %v1425, 7
    %v1427 = vsub.s32 5, %v1426
    %v1428 = vrot.slane %v1399, %v1427
    %v1429 = vlaneseq
    %v1430 = vshrl.u32 %v1429, 7
    %v1431 = vsub.s32 6, %v1430
    %v1432 = vrot.slane %v1399, %v1431
    %v1433 = vlaneseq
    %v1434 = vshrl.u32 %v1433, 7
    %v1435 = vsub.s32 7, %v1434
    %v1436 = vrot.slane %v1399, %v1435
    %v1701 = vunpack.c.l.b16 %v1143
    %v1702 = vunpack.c.h.b16 %v1143
    %v1703 = vunpack.c.l.b16 %v1144
    %v1704 = vunpack.c.h.b16 %v1144
    %v1705 = vunpack.c.l.b16 %v1145
    %v1706 = vunpack.c.h.b16 %v1145
    %v1707 = vunpack.c.l.b16 %v1146
    %v1708 = vunpack.c.h.b16 %v1146
    %v1709 = vunpack.c.l.b16 %v1147
    %v1710 = vunpack.c.h.b16 %v1147
    %v1711 = vunpack.c.l.b16 %v1148
    %v1712 = vunpack.c.h.b16 %v1148
    %v1713 = vunpack.c.l.b16 %v1149
    %v1714 = vunpack.c.h.b16 %v1149
    %v1715 = vunpack.c.l.b16 %v1150
    %v1716 = vunpack.c.h.b16 %v1150
    %v1717 = vunpack.c.l.b16 %v1151
    %v1718 = vunpack.c.h.b16 %v1151
    %v1719 = vunpack.c.l.b16 %v1152
    %v1720 = vunpack.c.h.b16 %v1152
    %v1721 = vunpack.c.l.b16 %v1153
    %v1722 = vunpack.c.h.b16 %v1153
    %v1723 = vunpack.c.l.b16 %v1154
    %v1724 = vunpack.c.h.b16 %v1154
    %v1725 = vunpack.c.l.b16 %v1155
    %v1726 = vunpack.c.h.b16 %v1155
    %v1727 = vunpack.c.l.b16 %v1156
    %v1728 = vunpack.c.h.b16 %v1156
    %v1729 = vunpack.c.l.b16 %v1157
    %v1730 = vunpack.c.h.b16 %v1157
    %v1731 = vunpack.c.l.b16 %v1158
    %v1732 = vunpack.c.h.b16 %v1158
    %v1733 = vunpack.c.l.b16 %v1159
    %v1734 = vunpack.c.h.b16 %v1159
    %v1735 = vunpack.c.l.b16 %v1160
    %v1736 = vunpack.c.h.b16 %v1160
    %v1737 = vunpack.c.l.b16 %v1161
    %v1738 = vunpack.c.h.b16 %v1161
    %v1739 = vunpack.c.l.b16 %v1162
    %v1740 = vunpack.c.h.b16 %v1162
    %v1741 = vunpack.c.l.b16 %v1163
    %v1742 = vunpack.c.h.b16 %v1163
    %v1743 = vunpack.c.l.b16 %v1164
    %v1744 = vunpack.c.h.b16 %v1164
    %v1745 = vunpack.c.l.b16 %v1165
    %v1746 = vunpack.c.h.b16 %v1165
    %v1747 = vunpack.c.l.b16 %v1166
    %v1748 = vunpack.c.h.b16 %v1166
    %v1749 = vunpack.c.l.b16 %v1167
    %v1750 = vunpack.c.h.b16 %v1167
    %v1751 = vunpack.c.l.b16 %v1168
    %v1752 = vunpack.c.h.b16 %v1168
    %v1753 = vunpack.c.l.b16 %v1169
    %v1754 = vunpack.c.h.b16 %v1169
    %v1755 = vunpack.c.l.b16 %v1170
    %v1756 = vunpack.c.h.b16 %v1170
    %v1757 = vunpack.c.l.b16 %v1171
    %v1758 = vunpack.c.h.b16 %v1171
    %v1759 = vunpack.c.l.b16 %v1172
    %v1760 = vunpack.c.h.b16 %v1172
    %v1761 = vunpack.c.l.b16 %v1173
    %v1762 = vunpack.c.h.b16 %v1173
    %v1763 = vunpack.c.l.b16 %v1174
    %v1764 = vunpack.c.h.b16 %v1174
    %v1765 = vunpack.c.l.b16 %v1175
    %v1766 = vunpack.c.h.b16 %v1175
    %v1767 = vunpack.c.l.b16 %v1176
    %v1768 = vunpack.c.h.b16 %v1176
    %v1769 = vunpack.c.l.b16 %v1177
    %v1770 = vunpack.c.h.b16 %v1177
    %v1771 = vunpack.c.l.b16 %v1178
    %v1772 = vunpack.c.h.b16 %v1178
    %v1773 = vunpack.c.l.b16 %v1179
    %v1774 = vunpack.c.h.b16 %v1179
    %v1775 = vunpack.c.l.b16 %v1180
    %v1776 = vunpack.c.h.b16 %v1180
    %v1777 = vunpack.c.l.b16 %v1181
    %v1778 = vunpack.c.h.b16 %v1181
    %v1779 = vunpack.c.l.b16 %v1182
    %v1780 = vunpack.c.h.b16 %v1182
    %v1781 = vunpack.c.l.b16 %v1183
    %v1782 = vunpack.c.h.b16 %v1183
    %v1783 = vunpack.c.l.b16 %v1184
    %v1784 = vunpack.c.h.b16 %v1184
    %v1785 = vunpack.c.l.b16 %v1185
    %v1786 = vunpack.c.h.b16 %v1185
    %v1787 = vunpack.c.l.b16 %v1186
    %v1788 = vunpack.c.h.b16 %v1186
    %v1789 = vunpack.c.l.b16 %v1187
    %v1790 = vunpack.c.h.b16 %v1187
    %v1791 = vunpack.c.l.b16 %v1188
    %v1792 = vunpack.c.h.b16 %v1188
    %v1793 = vunpack.c.l.b16 %v1189
    %v1794 = vunpack.c.h.b16 %v1189
    %v1795 = vunpack.c.l.b16 %v1190
    %v1796 = vunpack.c.h.b16 %v1190
    %v1797 = vunpack.c.l.b16 %v1191
    %v1798 = vunpack.c.h.b16 %v1191
    %v1799 = vunpack.c.l.b16 %v1192
    %v1800 = vunpack.c.h.b16 %v1192
    %v1801 = vunpack.c.l.b16 %v1193
    %v1802 = vunpack.c.h.b16 %v1193
    %v1803 = vunpack.c.l.b16 %v1194
    %v1804 = vunpack.c.h.b16 %v1194
    %v1805 = vunpack.c.l.b16 %v1195
    %v1806 = vunpack.c.h.b16 %v1195
    %v1807 = vunpack.c.l.b16 %v1196
    %v1808 = vunpack.c.h.b16 %v1196
    %v1809 = vunpack.c.l.b16 %v1197
    %v1810 = vunpack.c.h.b16 %v1197
    %v1811 = vunpack.c.l.b16 %v1198
    %v1812 = vunpack.c.h.b16 %v1198
    %v1813 = vunpack.c.l.b16 %v1199
    %v1814 = vunpack.c.h.b16 %v1199
    %v1815 = vunpack.c.l.b16 %v1200
    %v1816 = vunpack.c.h.b16 %v1200
    %v1817 = vunpack.c.l.b16 %v1201
    %v1818 = vunpack.c.h.b16 %v1201
    %v1819 = vunpack.c.l.b16 %v1202
    %v1820 = vunpack.c.h.b16 %v1202
    %v1821 = vunpack.c.l.b16 %v1203
    %v1822 = vunpack.c.h.b16 %v1203
    %v1823 = vunpack.c.l.b16 %v1204
    %v1824 = vunpack.c.h.b16 %v1204
    %v1825 = vunpack.c.l.b16 %v1205
    %v1826 = vunpack.c.h.b16 %v1205
    %v1827 = vunpack.c.l.b16 %v1206
    %v1828 = vunpack.c.h.b16 %v1206
    %v1829 = vunpack.c.l.b16 %v1207
    %v1830 = vunpack.c.h.b16 %v1207
    %v1831 = vunpack.c.l.b16 %v1208
    %v1832 = vunpack.c.h.b16 %v1208
    %v1833 = vunpack.c.l.b16 %v1209
    %v1834 = vunpack.c.h.b16 %v1209
    %v1835 = vunpack.c.l.b16 %v1210
    %v1836 = vunpack.c.h.b16 %v1210
    %v1837 = vunpack.c.l.b16 %v1211
    %v1838 = vunpack.c.h.b16 %v1211
    %v1839 = vunpack.c.l.b16 %v1212
    %v1840 = vunpack.c.h.b16 %v1212
    %v1841 = vunpack.c.l.b16 %v1213
    %v1842 = vunpack.c.h.b16 %v1213
    %v1843 = vunpack.c.l.b16 %v1214
    %v1844 = vunpack.c.h.b16 %v1214
    %v1845 = vunpack.c.l.b16 %v1215
    %v1846 = vunpack.c.h.b16 %v1215
    %v1847 = vunpack.c.l.b16 %v1216
    %v1848 = vunpack.c.h.b16 %v1216
    %v1849 = vunpack.c.l.b16 %v1217
    %v1850 = vunpack.c.h.b16 %v1217
    %v1851 = vunpack.c.l.b16 %v1218
    %v1852 = vunpack.c.h.b16 %v1218
    %v1853 = vunpack.c.l.b16 %v1219
    %v1854 = vunpack.c.h.b16 %v1219
    %v1855 = vunpack.c.l.b16 %v1220
    %v1856 = vunpack.c.h.b16 %v1220
    %v1857 = vunpack.c.l.b16 %v1221
    %v1858 = vunpack.c.h.b16 %v1221
    %v1859 = vunpack.c.l.b16 %v1222
    %v1860 = vunpack.c.h.b16 %v1222
    %v1861 = vunpack.c.l.b16 %v1223
    %v1862 = vunpack.c.h.b16 %v1223
    %v1863 = vunpack.c.l.b16 %v1224
    %v1864 = vunpack.c.h.b16 %v1224
    %v1865 = vunpack.c.l.b16 %v1225
    %v1866 = vunpack.c.h.b16 %v1225
    %v1867 = vunpack.c.l.b16 %v1226
    %v1868 = vunpack.c.h.b16 %v1226
    %v1869 = vunpack.c.l.b16 %v1227
    %v1870 = vunpack.c.h.b16 %v1227
    %v1871 = vunpack.c.l.b16 %v1228
    %v1872 = vunpack.c.h.b16 %v1228
    %v1873 = vunpack.c.l.b16 %v1229
    %v1874 = vunpack.c.h.b16 %v1229
    %v1875 = vunpack.c.l.b16 %v1230
    %v1876 = vunpack.c.h.b16 %v1230
    %v1877 = vunpack.c.l.b16 %v1231
    %v1878 = vunpack.c.h.b16 %v1231
    %v1879 = vunpack.c.l.b16 %v1232
    %v1880 = vunpack.c.h.b16 %v1232
    %v1881 = vunpack.c.l.b16 %v1233
    %v1882 = vunpack.c.h.b16 %v1233
    %v1883 = vunpack.c.l.b16 %v1234
    %v1884 = vunpack.c.h.b16 %v1234
    %v1885 = vunpack.c.l.b16 %v1235
    %v1886 = vunpack.c.h.b16 %v1235
    %v1887 = vunpack.c.l.b16 %v1236
    %v1888 = vunpack.c.h.b16 %v1236
    %v1889 = vunpack.c.l.b16 %v1237
    %v1890 = vunpack.c.h.b16 %v1237
    %v1891 = vunpack.c.l.b16 %v1238
    %v1892 = vunpack.c.h.b16 %v1238
    %v1893 = vunpack.c.l.b16 %v1239
    %v1894 = vunpack.c.h.b16 %v1239
    %v1895 = vunpack.c.l.b16 %v1240
    %v1896 = vunpack.c.h.b16 %v1240
    %v1897 = vunpack.c.l.b16 %v1241
    %v1898 = vunpack.c.h.b16 %v1241
    %v1899 = vunpack.c.l.b16 %v1242
    %v1900 = vunpack.c.h.b16 %v1242
    %v1901 = vunpack.c.l.b16 %v1243
    %v1902 = vunpack.c.h.b16 %v1243
    %v1903 = vunpack.c.l.b16 %v1244
    %v1904 = vunpack.c.h.b16 %v1244
    %v1905 = vunpack.c.l.b16 %v1245
    %v1906 = vunpack.c.h.b16 %v1245
    %v1907 = vunpack.c.l.b16 %v1246
    %v1908 = vunpack.c.h.b16 %v1246
    %v1909 = vunpack.c.l.b16 %v1247
    %v1910 = vunpack.c.h.b16 %v1247
    %v1911 = vunpack.c.l.b16 %v1248
    %v1912 = vunpack.c.h.b16 %v1248
    %v1913 = vunpack.c.l.b16 %v1249
    %v1914 = vunpack.c.h.b16 %v1249
    %v1915 = vunpack.c.l.b16 %v1250
    %v1916 = vunpack.c.h.b16 %v1250
    %v1917 = vunpack.c.l.b16 %v1251
    %v1918 = vunpack.c.h.b16 %v1251
    %v1919 = vunpack.c.l.b16 %v1252
    %v1920 = vunpack.c.h.b16 %v1252
    %v1921 = vunpack.c.l.b16 %v1253
    %v1922 = vunpack.c.h.b16 %v1253
    %v1923 = vunpack.c.l.b16 %v1254
    %v1924 = vunpack.c.h.b16 %v1254
    %v1925 = vunpack.c.l.b16 %v1255
    %v1926 = vunpack.c.h.b16 %v1255
    %v1927 = vunpack.c.l.b16 %v1256
    %v1928 = vunpack.c.h.b16 %v1256
    %v1929 = vunpack.c.l.b16 %v1257
    %v1930 = vunpack.c.h.b16 %v1257
    %v1931 = vunpack.c.l.b16 %v1258
    %v1932 = vunpack.c.h.b16 %v1258
    %v1933 = vunpack.c.l.b16 %v1259
    %v1934 = vunpack.c.h.b16 %v1259
    %v1935 = vunpack.c.l.b16 %v1260
    %v1936 = vunpack.c.h.b16 %v1260
    %v1937 = vunpack.c.l.b16 %v1261
    %v1938 = vunpack.c.h.b16 %v1261
    %v1939 = vunpack.c.l.b16 %v1262
    %v1940 = vunpack.c.h.b16 %v1262
    %v1941 = vunpack.c.l.b16 %v1263
    %v1942 = vunpack.c.h.b16 %v1263
    %v1943 = vunpack.c.l.b16 %v1264
    %v1944 = vunpack.c.h.b16 %v1264
    %v1945 = vunpack.c.l.b16 %v1265
    %v1946 = vunpack.c.h.b16 %v1265
    %v1947 = vunpack.c.l.b16 %v1266
    %v1948 = vunpack.c.h.b16 %v1266
    %v1949 = vunpack.c.l.b16 %v1267
    %v1950 = vunpack.c.h.b16 %v1267
    %v1951 = vunpack.c.l.b16 %v1268
    %v1952 = vunpack.c.h.b16 %v1268
    %v1953 = vunpack.c.l.b16 %v1269
    %v1954 = vunpack.c.h.b16 %v1269
    %v1955 = vunpack.c.l.b16 %v1270
    %v1956 = vunpack.c.h.b16 %v1270
    %v1957 = vunpack.c.l.b16 %v1271
    %v1958 = vunpack.c.h.b16 %v1271
    %v1959 = vunpack.c.l.b16 %v1272
    %v1960 = vunpack.c.h.b16 %v1272
    %v1961 = vunpack.c.l.b16 %v1273
    %v1962 = vunpack.c.h.b16 %v1273
    %v1963 = vunpack.c.l.b16 %v1274
    %v1964 = vunpack.c.h.b16 %v1274
    %v1965 = vunpack.c.l.b16 %v1275
    %v1966 = vunpack.c.h.b16 %v1275
    %v1967 = vunpack.c.l.b16 %v1276
    %v1968 = vunpack.c.h.b16 %v1276
    %v1969 = vunpack.c.l.b16 %v1277
    %v1970 = vunpack.c.h.b16 %v1277
    %v1971 = vunpack.c.l.b16 %v1278
    %v1972 = vunpack.c.h.b16 %v1278
    %v1973 = vunpack.c.l.b16 %v1279
    %v1974 = vunpack.c.h.b16 %v1279
    %v1975 = vunpack.c.l.b16 %v1280
    %v1976 = vunpack.c.h.b16 %v1280
    %v1977 = vunpack.c.l.b16 %v1281
    %v1978 = vunpack.c.h.b16 %v1281
    %v1979 = vunpack.c.l.b16 %v1282
    %v1980 = vunpack.c.h.b16 %v1282
    %v1981 = vunpack.c.l.b16 %v1283
    %v1982 = vunpack.c.h.b16 %v1283
    %v1983 = vunpack.c.l.b16 %v1284
    %v1984 = vunpack.c.h.b16 %v1284
    %v1985 = vunpack.c.l.b16 %v1285
    %v1986 = vunpack.c.h.b16 %v1285
    %v1987 = vunpack.c.l.b16 %v1286
    %v1988 = vunpack.c.h.b16 %v1286
    %v1989 = vunpack.c.l.b16 %v1287
    %v1990 = vunpack.c.h.b16 %v1287
    %v1991 = vunpack.c.l.b16 %v1288
    %v1992 = vunpack.c.h.b16 %v1288
    %v1993 = vunpack.c.l.b16 %v1289
    %v1994 = vunpack.c.h.b16 %v1289
    %v1995 = vunpack.c.l.b16 %v1290
    %v1996 = vunpack.c.h.b16 %v1290
    %v1997 = vunpack.c.l.b16 %v1291
    %v1998 = vunpack.c.h.b16 %v1291
    %v1999 = vunpack.c.l.b16 %v1292
    %v2000 = vunpack.c.h.b16 %v1292
    %v2001 = vunpack.c.l.b16 %v1293
    %v2002 = vunpack.c.h.b16 %v1293
    %v2003 = vunpack.c.l.b16 %v1294
    %v2004 = vunpack.c.h.b16 %v1294
    %v2005 = vunpack.c.l.b16 %v1295
    %v2006 = vunpack.c.h.b16 %v1295
    %v2007 = vunpack.c.l.b16 %v1296
    %v2008 = vunpack.c.h.b16 %v1296
    %v2009 = vunpack.c.l.b16 %v1297
    %v2010 = vunpack.c.h.b16 %v1297
    %v2011 = vunpack.c.l.b16 %v1298
    %v2012 = vunpack.c.h.b16 %v1298
    %v2013 = vunpack.c.l.b16 %v1299
    %v2014 = vunpack.c.h.b16 %v1299
    %v2015 = vunpack.c.l.b16 %v1300
    %v2016 = vunpack.c.h.b16 %v1300
    %v2017 = vunpack.c.l.b16 %v1301
    %v2018 = vunpack.c.h.b16 %v1301
    %v2019 = vunpack.c.l.b16 %v1302
    %v2020 = vunpack.c.h.b16 %v1302
    %v2021 = vunpack.c.l.b16 %v1303
    %v2022 = vunpack.c.h.b16 %v1303
    %v2023 = vunpack.c.l.b16 %v1304
    %v2024 = vunpack.c.h.b16 %v1304
    %v2025 = vunpack.c.l.b16 %v1305
    %v2026 = vunpack.c.h.b16 %v1305
    %v2027 = vunpack.c.l.b16 %v1306
    %v2028 = vunpack.c.h.b16 %v1306
    %v2029 = vunpack.c.l.b16 %v1307
    %v2030 = vunpack.c.h.b16 %v1307
    %v2031 = vunpack.c.l.b16 %v1308
    %v2032 = vunpack.c.h.b16 %v1308
    %v2033 = vunpack.c.l.b16 %v1309
    %v2034 = vunpack.c.h.b16 %v1309
    %v2035 = vunpack.c.l.b16 %v1310
    %v2036 = vunpack.c.h.b16 %v1310
    %v2037 = vunpack.c.l.b16 %v1311
    %v2038 = vunpack.c.h.b16 %v1311
    %v2039 = vunpack.c.l.b16 %v1312
    %v2040 = vunpack.c.h.b16 %v1312
    %v2041 = vunpack.c.l.b16 %v1313
    %v2042 = vunpack.c.h.b16 %v1313
    %v2043 = vunpack.c.l.b16 %v1314
    %v2044 = vunpack.c.h.b16 %v1314
    %v2045 = vunpack.c.l.b16 %v1315
    %v2046 = vunpack.c.h.b16 %v1315
    %v2047 = vunpack.c.l.b16 %v1316
    %v2048 = vunpack.c.h.b16 %v1316
    %v2049 = vunpack.c.l.b16 %v1317
    %v2050 = vunpack.c.h.b16 %v1317
    %v2051 = vunpack.c.l.b16 %v1318
    %v2052 = vunpack.c.h.b16 %v1318
    %v2053 = vunpack.c.l.b16 %v1319
    %v2054 = vunpack.c.h.b16 %v1319
    %v2055 = vunpack.c.l.b16 %v1320
    %v2056 = vunpack.c.h.b16 %v1320
    %v2057 = vunpack.c.l.b16 %v1321
    %v2058 = vunpack.c.h.b16 %v1321
    %v2059 = vunpack.c.l.b16 %v1322
    %v2060 = vunpack.c.h.b16 %v1322
    %v2061 = vunpack.c.l.b16 %v1323
    %v2062 = vunpack.c.h.b16 %v1323
    %v2063 = vunpack.c.l.b16 %v1324
    %v2064 = vunpack.c.h.b16 %v1324
    %v2065 = vunpack.c.l.b16 %v1325
    %v2066 = vunpack.c.h.b16 %v1325
    %v2067 = vunpack.c.l.b16 %v1326
    %v2068 = vunpack.c.h.b16 %v1326
    %v2069 = vunpack.c.l.b16 %v1327
    %v2070 = vunpack.c.h.b16 %v1327
    %v2071 = vunpack.c.l.b16 %v1328
    %v2072 = vunpack.c.h.b16 %v1328
    %v2073 = vunpack.c.l.b16 %v1329
    %v2074 = vunpack.c.h.b16 %v1329
    %v2075 = vunpack.c.l.b16 %v1330
    %v2076 = vunpack.c.h.b16 %v1330
    %v2077 = vunpack.c.l.b16 %v1331
    %v2078 = vunpack.c.h.b16 %v1331
    %v2079 = vunpack.c.l.b16 %v1332
    %v2080 = vunpack.c.h.b16 %v1332
    %v2081 = vunpack.c.l.b16 %v1333
    %v2082 = vunpack.c.h.b16 %v1333
    %v2083 = vunpack.c.l.b16 %v1334
    %v2084 = vunpack.c.h.b16 %v1334
    %v2085 = vunpack.c.l.b16 %v1335
    %v2086 = vunpack.c.h.b16 %v1335
    %v2087 = vunpack.c.l.b16 %v1336
    %v2088 = vunpack.c.h.b16 %v1336
    %v2089 = vunpack.c.l.b16 %v1337
    %v2090 = vunpack.c.h.b16 %v1337
    %v2091 = vunpack.c.l.b16 %v1338
    %v2092 = vunpack.c.h.b16 %v1338
    %v2093 = vunpack.c.l.b16 %v1339
    %v2094 = vunpack.c.h.b16 %v1339
    %v2095 = vunpack.c.l.b16 %v1340
    %v2096 = vunpack.c.h.b16 %v1340
    %v2097 = vunpack.c.l.b16 %v1341
    %v2098 = vunpack.c.h.b16 %v1341
    %v2099 = vunpack.c.l.b16 %v1342
    %v2100 = vunpack.c.h.b16 %v1342
    %v2101 = vunpack.c.l.b16 %v1343
    %v2102 = vunpack.c.h.b16 %v1343
    %v2103 = vunpack.c.l.b16 %v1344
    %v2104 = vunpack.c.h.b16 %v1344
    %v2105 = vunpack.c.l.b16 %v1345
    %v2106 = vunpack.c.h.b16 %v1345
    %v2107 = vunpack.c.l.b16 %v1346
    %v2108 = vunpack.c.h.b16 %v1346
    %v2109 = vunpack.c.l.b16 %v1347
    %v2110 = vunpack.c.h.b16 %v1347
    %v2111 = vunpack.c.l.b16 %v1348
    %v2112 = vunpack.c.h.b16 %v1348
    %v2113 = vunpack.c.l.b16 %v1349
    %v2114 = vunpack.c.h.b16 %v1349
    %v2115 = vunpack.c.l.b16 %v1350
    %v2116 = vunpack.c.h.b16 %v1350
    %v2117 = vunpack.c.l.b16 %v1351
    %v2118 = vunpack.c.h.b16 %v1351
    %v2119 = vunpack.c.l.b16 %v1352
    %v2120 = vunpack.c.h.b16 %v1352
    %v2121 = vunpack.c.l.b16 %v1353
    %v2122 = vunpack.c.h.b16 %v1353
    %v2123 = vunpack.c.l.b16 %v1354
    %v2124 = vunpack.c.h.b16 %v1354
    %v2125 = vunpack.c.l.b16 %v1355
    %v2126 = vunpack.c.h.b16 %v1355
    %v2127 = vunpack.c.l.b16 %v1356
    %v2128 = vunpack.c.h.b16 %v1356
    %v2129 = vunpack.c.l.b16 %v1357
    %v2130 = vunpack.c.h.b16 %v1357
    %v2131 = vunpack.c.l.b16 %v1358
    %v2132 = vunpack.c.h.b16 %v1358
    %v2133 = vunpack.c.l.b16 %v1359
    %v2134 = vunpack.c.h.b16 %v1359
    %v2135 = vunpack.c.l.b16 %v1360
    %v2136 = vunpack.c.h.b16 %v1360
    %v2137 = vunpack.c.l.b16 %v1361
    %v2138 = vunpack.c.h.b16 %v1361
    %v2139 = vunpack.c.l.b16 %v1362
    %v2140 = vunpack.c.h.b16 %v1362
    %v2141 = vunpack.c.l.b16 %v1363
    %v2142 = vunpack.c.h.b16 %v1363
    %v2143 = vunpack.c.l.b16 %v1364
    %v2144 = vunpack.c.h.b16 %v1364
    %v2145 = vunpack.c.l.b16 %v1365
    %v2146 = vunpack.c.h.b16 %v1365
    %v2147 = vunpack.c.l.b16 %v1366
    %v2148 = vunpack.c.h.b16 %v1366
    %v2149 = vunpack.c.l.b16 %v1367
    %v2150 = vunpack.c.h.b16 %v1367
    %v2151 = vunpack.c.l.b16 %v1368
    %v2152 = vunpack.c.h.b16 %v1368
    %v2153 = vunpack.c.l.b16 %v1369
    %v2154 = vunpack.c.h.b16 %v1369
    %v2155 = vunpack.c.l.b16 %v1370
    %v2156 = vunpack.c.h.b16 %v1370
    %v2157 = vunpack.c.l.b16 %v1371
    %v2158 = vunpack.c.h.b16 %v1371
    %v2159 = vunpack.c.l.b16 %v1372
    %v2160 = vunpack.c.h.b16 %v1372
    %v2161 = vunpack.c.l.b16 %v1373
    %v2162 = vunpack.c.h.b16 %v1373
    %v2163 = vunpack.c.l.b16 %v1374
    %v2164 = vunpack.c.h.b16 %v1374
    %v2165 = vunpack.c.l.b16 %v1375
    %v2166 = vunpack.c.h.b16 %v1375
    %v2167 = vunpack.c.l.b16 %v1376
    %v2168 = vunpack.c.h.b16 %v1376
    %v2169 = vunpack.c.l.b16 %v1377
    %v2170 = vunpack.c.h.b16 %v1377
    %v2171 = vunpack.c.l.b16 %v1378
    %v2172 = vunpack.c.h.b16 %v1378
    %v2173 = vunpack.c.l.b16 %v1379
    %v2174 = vunpack.c.h.b16 %v1379
    %v2175 = vunpack.c.l.b16 %v1380
    %v2176 = vunpack.c.h.b16 %v1380
    %v2177 = vunpack.c.l.b16 %v1381
    %v2178 = vunpack.c.h.b16 %v1381
    %v2179 = vunpack.c.l.b16 %v1382
    %v2180 = vunpack.c.h.b16 %v1382
    %v2181 = vunpack.c.l.b16 %v1383
    %v2182 = vunpack.c.h.b16 %v1383
    %v2183 = vunpack.c.l.b16 %v1384
    %v2184 = vunpack.c.h.b16 %v1384
    %v2185 = vunpack.c.l.b16 %v1385
    %v2186 = vunpack.c.h.b16 %v1385
    %v2187 = vunpack.c.l.b16 %v1386
    %v2188 = vunpack.c.h.b16 %v1386
    %v2189 = vunpack.c.l.b16 %v1387
    %v2190 = vunpack.c.h.b16 %v1387
    %v2191 = vunpack.c.l.b16 %v1388
    %v2192 = vunpack.c.h.b16 %v1388
    %v2193 = vunpack.c.l.b16 %v1389
    %v2194 = vunpack.c.h.b16 %v1389
    %v2195 = vunpack.c.l.b16 %v1390
    %v2196 = vunpack.c.h.b16 %v1390
    %v2197 = vunpack.c.l.b16 %v1391
    %v2198 = vunpack.c.h.b16 %v1391
    %v2199 = vunpack.c.l.b16 %v1392
    %v2200 = vunpack.c.h.b16 %v1392
    %v2201 = vunpack.c.l.b16 %v1393
    %v2202 = vunpack.c.h.b16 %v1393
    %v2203 = vunpack.c.l.b16 %v1394
    %v2204 = vunpack.c.h.b16 %v1394
    %v2205 = vunpack.c.l.b16 %v1395
    %v2206 = vunpack.c.h.b16 %v1395
    %v2207 = vunpack.c.l.b16 %v1396
    %v2208 = vunpack.c.h.b16 %v1396
    %v2209 = vunpack.c.l.b16 %v1397
    %v2210 = vunpack.c.h.b16 %v1397
    %v2211 = vunpack.c.l.b16 %v1398
    %v2212 = vunpack.c.h.b16 %v1398
    %v2213 = vpack.c.b16 %v1709, %v1701
    %v2214 = vpack.c.b16 %v1710, %v1702
    %v2215 = vpack.c.b16 %v1711, %v1703
    %v2216 = vpack.c.b16 %v1712, %v1704
    %v2217 = vpack.c.b16 %v1713, %v1705
    %v2218 = vpack.c.b16 %v1714, %v1706
    %v2219 = vpack.c.b16 %v1715, %v1707
    %v2220 = vpack.c.b16 %v1716, %v1708
    %v2221 = vpack.c.b16 %v1725, %v1717
    %v2222 = vpack.c.b16 %v1726, %v1718
    %v2223 = vpack.c.b16 %v1727, %v1719
    %v2224 = vpack.c.b16 %v1728, %v1720
    %v2225 = vpack.c.b16 %v1729, %v1721
    %v2226 = vpack.c.b16 %v1730, %v1722
    %v2227 = vpack.c.b16 %v1731, %v1723
    %v2228 = vpack.c.b16 %v1732, %v1724
    %v2229 = vpack.c.b16 %v1741, %v1733
    %v2230 = vpack.c.b16 %v1742, %v1734
    %v2231 = vpack.c.b16 %v1743, %v1735
    %v2232 = vpack.c.b16 %v1744, %v1736
    %v2233 = vpack.c.b16 %v1745, %v1737
    %v2234 = vpack.c.b16 %v1746, %v1738
    %v2235 = vpack.c.b16 %v1747, %v1739
    %v2236 = vpack.c.b16 %v1748, %v1740
    %v2237 = vpack.c.b16 %v1757, %v1749
    %v2238 = vpack.c.b16 %v1758, %v1750
    %v2239 = vpack.c.b16 %v1759, %v1751
    %v2240 = vpack.c.b16 %v1760, %v1752
    %v2241 = vpack.c.b16 %v1761, %v1753
    %v2242 = vpack.c.b16 %v1762, %v1754
    %v2243 = vpack.c.b16 %v1763, %v1755
    %v2244 = vpack.c.b16 %v1764, %v1756
    %v2245 = vpack.c.b16 %v1773, %v1765
    %v2246 = vpack.c.b16 %v1774, %v1766
    %v2247 = vpack.c.b16 %v1775, %v1767
    %v2248 = vpack.c.b16 %v1776, %v1768
    %v2249 = vpack.c.b16 %v1777, %v1769
    %v2250 = vpack.c.b16 %v1778, %v1770
    %v2251 = vpack.c.b16 %v1779, %v1771
    %v2252 = vpack.c.b16 %v1780, %v1772
    %v2253 = vpack.c.b16 %v1789, %v1781
    %v2254 = vpack.c.b16 %v1790, %v1782
    %v2255 = vpack.c.b16 %v1791, %v1783
    %v2256 = vpack.c.b16 %v1792, %v1784
    %v2257 = vpack.c.b16 %v1793, %v1785
    %v2258 = vpack.c.b16 %v1794, %v1786
    %v2259 = vpack.c.b16 %v1795, %v1787
    %v2260 = vpack.c.b16 %v1796, %v1788
    %v2261 = vpack.c.b16 %v1805, %v1797
    %v2262 = vpack.c.b16 %v1806, %v1798
    %v2263 = vpack.c.b16 %v1807, %v1799
    %v2264 = vpack.c.b16 %v1808, %v1800
    %v2265 = vpack.c.b16 %v1809, %v1801
    %v2266 = vpack.c.b16 %v1810, %v1802
    %v2267 = vpack.c.b16 %v1811, %v1803
    %v2268 = vpack.c.b16 %v1812, %v1804
    %v2269 = vpack.c.b16 %v1821, %v1813
    %v2270 = vpack.c.b16 %v1822, %v1814
    %v2271 = vpack.c.b16 %v1823, %v1815
    %v2272 = vpack.c.b16 %v1824, %v1816
    %v2273 = vpack.c.b16 %v1825, %v1817
    %v2274 = vpack.c.b16 %v1826, %v1818
    %v2275 = vpack.c.b16 %v1827, %v1819
    %v2276 = vpack.c.b16 %v1828, %v1820
    %v2277 = vpack.c.b16 %v1837, %v1829
    %v2278 = vpack.c.b16 %v1838, %v1830
    %v2279 = vpack.c.b16 %v1839, %v1831
    %v2280 = vpack.c.b16 %v1840, %v1832
    %v2281 = vpack.c.b16 %v1841, %v1833
    %v2282 = vpack.c.b16 %v1842, %v1834
    %v2283 = vpack.c.b16 %v1843, %v1835
    %v2284 = vpack.c.b16 %v1844, %v1836
    %v2285 = vpack.c.b16 %v1853, %v1845
    %v2286 = vpack.c.b16 %v1854, %v1846
    %v2287 = vpack.c.b16 %v1855, %v1847
    %v2288 = vpack.c.b16 %v1856, %v1848
    %v2289 = vpack.c.b16 %v1857, %v1849
    %v2290 = vpack.c.b16 %v1858, %v1850
    %v2291 = vpack.c.b16 %v1859, %v1851
    %v2292 = vpack.c.b16 %v1860, %v1852
    %v2293 = vpack.c.b16 %v1869, %v1861
    %v2294 = vpack.c.b16 %v1870, %v1862
    %v2295 = vpack.c.b16 %v1871, %v1863
    %v2296 = vpack.c.b16 %v1872, %v1864
    %v2297 = vpack.c.b16 %v1873, %v1865
    %v2298 = vpack.c.b16 %v1874, %v1866
    %v2299 = vpack.c.b16 %v1875, %v1867
    %v2300 = vpack.c.b16 %v1876, %v1868
    %v2301 = vpack.c.b16 %v1885, %v1877
    %v2302 = vpack.c.b16 %v1886, %v1878
    %v2303 = vpack.c.b16 %v1887, %v1879
    %v2304 = vpack.c.b16 %v1888, %v1880
    %v2305 = vpack.c.b16 %v1889, %v1881
    %v2306 = vpack.c.b16 %v1890, %v1882
    %v2307 = vpack.c.b16 %v1891, %v1883
    %v2308 = vpack.c.b16 %v1892, %v1884
    %v2309 = vpack.c.b16 %v1901, %v1893
    %v2310 = vpack.c.b16 %v1902, %v1894
    %v2311 = vpack.c.b16 %v1903, %v1895
    %v2312 = vpack.c.b16 %v1904, %v1896
    %v2313 = vpack.c.b16 %v1905, %v1897
    %v2314 = vpack.c.b16 %v1906, %v1898
    %v2315 = vpack.c.b16 %v1907, %v1899
    %v2316 = vpack.c.b16 %v1908, %v1900
    %v2317 = vpack.c.b16 %v1917, %v1909
    %v2318 = vpack.c.b16 %v1918, %v1910
    %v2319 = vpack.c.b16 %v1919, %v1911
    %v2320 = vpack.c.b16 %v1920, %v1912
    %v2321 = vpack.c.b16 %v1921, %v1913
    %v2322 = vpack.c.b16 %v1922, %v1914
    %v2323 = vpack.c.b16 %v1923, %v1915
    %v2324 = vpack.c.b16 %v1924, %v1916
    %v2325 = vpack.c.b16 %v1933, %v1925
    %v2326 = vpack.c.b16 %v1934, %v1926
    %v2327 = vpack.c.b16 %v1935, %v1927
    %v2328 = vpack.c.b16 %v1936, %v1928
    %v2329 = vpack.c.b16 %v1937, %v1929
    %v2330 = vpack.c.b16 %v1938, %v1930
    %v2331 = vpack.c.b16 %v1939, %v1931
    %v2332 = vpack.c.b16 %v1940, %v1932
    %v2333 = vpack.c.b16 %v1949, %v1941
    %v2334 = vpack.c.b16 %v1950, %v1942
    %v2335 = vpack.c.b16 %v1951, %v1943
    %v2336 = vpack.c.b16 %v1952, %v1944
    %v2337 = vpack.c.b16 %v1953, %v1945
    %v2338 = vpack.c.b16 %v1954, %v1946
    %v2339 = vpack.c.b16 %v1955, %v1947
    %v2340 = vpack.c.b16 %v1956, %v1948
    %v2341 = vpack.c.b16 %v1965, %v1957
    %v2342 = vpack.c.b16 %v1966, %v1958
    %v2343 = vpack.c.b16 %v1967, %v1959
    %v2344 = vpack.c.b16 %v1968, %v1960
    %v2345 = vpack.c.b16 %v1969, %v1961
    %v2346 = vpack.c.b16 %v1970, %v1962
    %v2347 = vpack.c.b16 %v1971, %v1963
    %v2348 = vpack.c.b16 %v1972, %v1964
    %v2349 = vpack.c.b16 %v1981, %v1973
    %v2350 = vpack.c.b16 %v1982, %v1974
    %v2351 = vpack.c.b16 %v1983, %v1975
    %v2352 = vpack.c.b16 %v1984, %v1976
    %v2353 = vpack.c.b16 %v1985, %v1977
    %v2354 = vpack.c.b16 %v1986, %v1978
    %v2355 = vpack.c.b16 %v1987, %v1979
    %v2356 = vpack.c.b16 %v1988, %v1980
    %v2357 = vpack.c.b16 %v1997, %v1989
    %v2358 = vpack.c.b16 %v1998, %v1990
    %v2359 = vpack.c.b16 %v1999, %v1991
    %v2360 = vpack.c.b16 %v2000, %v1992
    %v2361 = vpack.c.b16 %v2001, %v1993
    %v2362 = vpack.c.b16 %v2002, %v1994
    %v2363 = vpack.c.b16 %v2003, %v1995
    %v2364 = vpack.c.b16 %v2004, %v1996
    %v2365 = vpack.c.b16 %v2013, %v2005
    %v2366 = vpack.c.b16 %v2014, %v2006
    %v2367 = vpack.c.b16 %v2015, %v2007
    %v2368 = vpack.c.b16 %v2016, %v2008
    %v2369 = vpack.c.b16 %v2017, %v2009
    %v2370 = vpack.c.b16 %v2018, %v2010
    %v2371 = vpack.c.b16 %v2019, %v2011
    %v2372 = vpack.c.b16 %v2020, %v2012
    %v2373 = vpack.c.b16 %v2029, %v2021
    %v2374 = vpack.c.b16 %v2030, %v2022
    %v2375 = vpack.c.b16 %v2031, %v2023
    %v2376 = vpack.c.b16 %v2032, %v2024
    %v2377 = vpack.c.b16 %v2033, %v2025
    %v2378 = vpack.c.b16 %v2034, %v2026
    %v2379 = vpack.c.b16 %v2035, %v2027
    %v2380 = vpack.c.b16 %v2036, %v2028
    %v2381 = vpack.c.b16 %v2045, %v2037
    %v2382 = vpack.c.b16 %v2046, %v2038
    %v2383 = vpack.c.b16 %v2047, %v2039
    %v2384 = vpack.c.b16 %v2048, %v2040
    %v2385 = vpack.c.b16 %v2049, %v2041
    %v2386 = vpack.c.b16 %v2050, %v2042
    %v2387 = vpack.c.b16 %v2051, %v2043
    %v2388 = vpack.c.b16 %v2052, %v2044
    %v2389 = vpack.c.b16 %v2061, %v2053
    %v2390 = vpack.c.b16 %v2062, %v2054
    %v2391 = vpack.c.b16 %v2063, %v2055
    %v2392 = vpack.c.b16 %v2064, %v2056
    %v2393 = vpack.c.b16 %v2065, %v2057
    %v2394 = vpack.c.b16 %v2066, %v2058
    %v2395 = vpack.c.b16 %v2067, %v2059
    %v2396 = vpack.c.b16 %v2068, %v2060
    %v2397 = vpack.c.b16 %v2077, %v2069
    %v2398 = vpack.c.b16 %v2078, %v2070
    %v2399 = vpack.c.b16 %v2079, %v2071
    %v2400 = vpack.c.b16 %v2080, %v2072
    %v2401 = vpack.c.b16 %v2081, %v2073
    %v2402 = vpack.c.b16 %v2082, %v2074
    %v2403 = vpack.c.b16 %v2083, %v2075
    %v2404 = vpack.c.b16 %v2084, %v2076
    %v2405 = vpack.c.b16 %v2093, %v2085
    %v2406 = vpack.c.b16 %v2094, %v2086
    %v2407 = vpack.c.b16 %v2095, %v2087
    %v2408 = vpack.c.b16 %v2096, %v2088
    %v2409 = vpack.c.b16 %v2097, %v2089
    %v2410 = vpack.c.b16 %v2098, %v2090
    %v2411 = vpack.c.b16 %v2099, %v2091
    %v2412 = vpack.c.b16 %v2100, %v2092
    %v2413 = vpack.c.b16 %v2109, %v2101
    %v2414 = vpack.c.b16 %v2110, %v2102
    %v2415 = vpack.c.b16 %v2111, %v2103
    %v2416 = vpack.c.b16 %v2112, %v2104
    %v2417 = vpack.c.b16 %v2113, %v2105
    %v2418 = vpack.c.b16 %v2114, %v2106
    %v2419 = vpack.c.b16 %v2115, %v2107
    %v2420 = vpack.c.b16 %v2116, %v2108
    %v2421 = vpack.c.b16 %v2125, %v2117
    %v2422 = vpack.c.b16 %v2126, %v2118
    %v2423 = vpack.c.b16 %v2127, %v2119
    %v2424 = vpack.c.b16 %v2128, %v2120
    %v2425 = vpack.c.b16 %v2129, %v2121
    %v2426 = vpack.c.b16 %v2130, %v2122
    %v2427 = vpack.c.b16 %v2131, %v2123
    %v2428 = vpack.c.b16 %v2132, %v2124
    %v2429 = vpack.c.b16 %v2141, %v2133
    %v2430 = vpack.c.b16 %v2142, %v2134
    %v2431 = vpack.c.b16 %v2143, %v2135
    %v2432 = vpack.c.b16 %v2144, %v2136
    %v2433 = vpack.c.b16 %v2145, %v2137
    %v2434 = vpack.c.b16 %v2146, %v2138
    %v2435 = vpack.c.b16 %v2147, %v2139
    %v2436 = vpack.c.b16 %v2148, %v2140
    %v2437 = vpack.c.b16 %v2157, %v2149
    %v2438 = vpack.c.b16 %v2158, %v2150
    %v2439 = vpack.c.b16 %v2159, %v2151
    %v2440 = vpack.c.b16 %v2160, %v2152
    %v2441 = vpack.c.b16 %v2161, %v2153
    %v2442 = vpack.c.b16 %v2162, %v2154
    %v2443 = vpack.c.b16 %v2163, %v2155
    %v2444 = vpack.c.b16 %v2164, %v2156
    %v2445 = vpack.c.b16 %v2173, %v2165
    %v2446 = vpack.c.b16 %v2174, %v2166
    %v2447 = vpack.c.b16 %v2175, %v2167
    %v2448 = vpack.c.b16 %v2176, %v2168
    %v2449 = vpack.c.b16 %v2177, %v2169
    %v2450 = vpack.c.b16 %v2178, %v2170
    %v2451 = vpack.c.b16 %v2179, %v2171
    %v2452 = vpack.c.b16 %v2180, %v2172
    %v2453 = vpack.c.b16 %v2189, %v2181
    %v2454 = vpack.c.b16 %v2190, %v2182
    %v2455 = vpack.c.b16 %v2191, %v2183
    %v2456 = vpack.c.b16 %v2192, %v2184
    %v2457 = vpack.c.b16 %v2193, %v2185
    %v2458 = vpack.c.b16 %v2194, %v2186
    %v2459 = vpack.c.b16 %v2195, %v2187
    %v2460 = vpack.c.b16 %v2196, %v2188
    %v2461 = vpack.c.b16 %v2205, %v2197
    %v2462 = vpack.c.b16 %v2206, %v2198
    %v2463 = vpack.c.b16 %v2207, %v2199
    %v2464 = vpack.c.b16 %v2208, %v2200
    %v2465 = vpack.c.b16 %v2209, %v2201
    %v2466 = vpack.c.b16 %v2210, %v2202
    %v2467 = vpack.c.b16 %v2211, %v2203
    %v2468 = vpack.c.b16 %v2212, %v2204
    %2725 = vmatprep.subr.bf16.mxu0 %v2270
    %2726 = vmatpush1.bf16.msra.mxu0 %v2269
    %2727 = vmatprep.subr.bf16.mxu0 %v2262
    %2728 = vmatpush1.bf16.msra.mxu0 %v2261
    %2729 = vmatprep.subr.bf16.mxu0 %v2254
    %2730 = vmatpush1.bf16.msra.mxu0 %v2253
    %2731 = vmatprep.subr.bf16.mxu0 %v2246
    %2732 = vmatpush1.bf16.msra.mxu0 %v2245
    %2733 = vmatprep.subr.bf16.mxu0 %v2238
    %2734 = vmatpush1.bf16.msra.mxu0 %v2237
    %2735 = vmatprep.subr.bf16.mxu0 %v2230
    %2736 = vmatpush1.bf16.msra.mxu0 %v2229
    %2737 = vmatprep.subr.bf16.mxu0 %v2222
    %2738 = vmatpush1.bf16.msra.mxu0 %v2221
    %2739 = vmatprep.subr.bf16.mxu0 %v2214
    %2740 = vmatpush1.bf16.msra.mxu0 %v2213
    %2741 = vmatprep.subr.bf16.mxu0 %v2334
    %2742 = vmatpush2.bf16.msra.mxu0 %v2333
    %2743 = vmatprep.subr.bf16.mxu0 %v2326
    %2744 = vmatpush2.bf16.msra.mxu0 %v2325
    %2745 = vmatprep.subr.bf16.mxu0 %v2318
    %2746 = vmatpush2.bf16.msra.mxu0 %v2317
    %2747 = vmatprep.subr.bf16.mxu0 %v2310
    %2748 = vmatpush2.bf16.msra.mxu0 %v2309
    %2749 = vmatprep.subr.bf16.mxu0 %v2302
    %2750 = vmatpush2.bf16.msra.mxu0 %v2301
    %2751 = vmatprep.subr.bf16.mxu0 %v2294
    %2752 = vmatpush2.bf16.msra.mxu0 %v2293
    %2753 = vmatprep.subr.bf16.mxu0 %v2286
    %2754 = vmatpush2.bf16.msra.mxu0 %v2285
    %2755 = vmatprep.subr.bf16.mxu0 %v2278
    %2756 = vmatpush2.bf16.msra.mxu0 %v2277
    %2757 = vmatprep.mubr.bf16.mxu0 %v1401
    %2758 = vmatmul.mubr.bf16.gmra.mxu0 %v1400
    %v2759 = vpop.f32.mrf.mxu0
    %v2760 = vadd.f32 %v1408, %v2759
    %v2761 = vpop.f32.mrf.mxu0
    %v2762 = vadd.f32 %v1412, %v2761
    %v2763 = vpop.f32.mrf.mxu0
    %v2764 = vpop.f32.mrf.mxu0
    %2765 = vdwg.mxu0
    %2766 = vmatprep.subr.bf16.mxu0 %v2398
    %2767 = vmatpush1.bf16.msra.mxu0 %v2397
    %2768 = vmatprep.subr.bf16.mxu0 %v2390
    %2769 = vmatpush1.bf16.msra.mxu0 %v2389
    %2770 = vmatprep.subr.bf16.mxu0 %v2382
    %2771 = vmatpush1.bf16.msra.mxu0 %v2381
    %2772 = vmatprep.subr.bf16.mxu0 %v2374
    %2773 = vmatpush1.bf16.msra.mxu0 %v2373
    %2774 = vmatprep.subr.bf16.mxu0 %v2366
    %2775 = vmatpush1.bf16.msra.mxu0 %v2365
    %2776 = vmatprep.subr.bf16.mxu0 %v2358
    %2777 = vmatpush1.bf16.msra.mxu0 %v2357
    %2778 = vmatprep.subr.bf16.mxu0 %v2350
    %2779 = vmatpush1.bf16.msra.mxu0 %v2349
    %2780 = vmatprep.subr.bf16.mxu0 %v2342
    %2781 = vmatpush1.bf16.msra.mxu0 %v2341
    %2782 = vmatprep.subr.bf16.mxu0 %v2462
    %2783 = vmatpush2.bf16.msra.mxu0 %v2461
    %2784 = vmatprep.subr.bf16.mxu0 %v2454
    %2785 = vmatpush2.bf16.msra.mxu0 %v2453
    %2786 = vmatprep.subr.bf16.mxu0 %v2446
    %2787 = vmatpush2.bf16.msra.mxu0 %v2445
    %2788 = vmatprep.subr.bf16.mxu0 %v2438
    %2789 = vmatpush2.bf16.msra.mxu0 %v2437
    %2790 = vmatprep.subr.bf16.mxu0 %v2430
    %2791 = vmatpush2.bf16.msra.mxu0 %v2429
    %2792 = vmatprep.subr.bf16.mxu0 %v2422
    %2793 = vmatpush2.bf16.msra.mxu0 %v2421
    %2794 = vmatprep.subr.bf16.mxu0 %v2414
    %2795 = vmatpush2.bf16.msra.mxu0 %v2413
    %2796 = vmatprep.subr.bf16.mxu0 %v2406
    %2797 = vmatpush2.bf16.msra.mxu0 %v2405
    %2798 = vmatprep.mubr.bf16.mxu0 %v1403
    %2799 = vmatmul.mubr.bf16.gmra.mxu0 %v1402
    %v2800 = vpop.f32.mrf.mxu0
    %v2801 = vadd.f32 %v2760, %v2800
    %v2802 = vpop.f32.mrf.mxu0
    %v2803 = vadd.f32 %v2762, %v2802
    %v2804 = vpop.f32.mrf.mxu0
    %v2805 = vpop.f32.mrf.mxu0
    %2806 = vdwg.mxu0
    %2807 = vmatprep.subr.bf16.mxu0 %v2272
    %2808 = vmatpush1.bf16.msra.mxu0 %v2271
    %2809 = vmatprep.subr.bf16.mxu0 %v2264
    %2810 = vmatpush1.bf16.msra.mxu0 %v2263
    %2811 = vmatprep.subr.bf16.mxu0 %v2256
    %2812 = vmatpush1.bf16.msra.mxu0 %v2255
    %2813 = vmatprep.subr.bf16.mxu0 %v2248
    %2814 = vmatpush1.bf16.msra.mxu0 %v2247
    %2815 = vmatprep.subr.bf16.mxu0 %v2240
    %2816 = vmatpush1.bf16.msra.mxu0 %v2239
    %2817 = vmatprep.subr.bf16.mxu0 %v2232
    %2818 = vmatpush1.bf16.msra.mxu0 %v2231
    %2819 = vmatprep.subr.bf16.mxu0 %v2224
    %2820 = vmatpush1.bf16.msra.mxu0 %v2223
    %2821 = vmatprep.subr.bf16.mxu0 %v2216
    %2822 = vmatpush1.bf16.msra.mxu0 %v2215
    %2823 = vmatprep.subr.bf16.mxu0 %v2336
    %2824 = vmatpush2.bf16.msra.mxu0 %v2335
    %2825 = vmatprep.subr.bf16.mxu0 %v2328
    %2826 = vmatpush2.bf16.msra.mxu0 %v2327
    %2827 = vmatprep.subr.bf16.mxu0 %v2320
    %2828 = vmatpush2.bf16.msra.mxu0 %v2319
    %2829 = vmatprep.subr.bf16.mxu0 %v2312
    %2830 = vmatpush2.bf16.msra.mxu0 %v2311
    %2831 = vmatprep.subr.bf16.mxu0 %v2304
    %2832 = vmatpush2.bf16.msra.mxu0 %v2303
    %2833 = vmatprep.subr.bf16.mxu0 %v2296
    %2834 = vmatpush2.bf16.msra.mxu0 %v2295
    %2835 = vmatprep.subr.bf16.mxu0 %v2288
    %2836 = vmatpush2.bf16.msra.mxu0 %v2287
    %2837 = vmatprep.subr.bf16.mxu0 %v2280
    %2838 = vmatpush2.bf16.msra.mxu0 %v2279
    %2839 = vmatprep.mubr.bf16.mxu0 %v1401
    %2840 = vmatmul.mubr.bf16.gmra.mxu0 %v1400
    %v2841 = vpop.f32.mrf.mxu0
    %v2842 = vadd.f32 %v1416, %v2841
    %v2843 = vpop.f32.mrf.mxu0
    %v2844 = vadd.f32 %v1420, %v2843
    %v2845 = vpop.f32.mrf.mxu0
    %v2846 = vpop.f32.mrf.mxu0
    %2847 = vdwg.mxu0
    %2848 = vmatprep.subr.bf16.mxu0 %v2400
    %2849 = vmatpush1.bf16.msra.mxu0 %v2399
    %2850 = vmatprep.subr.bf16.mxu0 %v2392
    %2851 = vmatpush1.bf16.msra.mxu0 %v2391
    %2852 = vmatprep.subr.bf16.mxu0 %v2384
    %2853 = vmatpush1.bf16.msra.mxu0 %v2383
    %2854 = vmatprep.subr.bf16.mxu0 %v2376
    %2855 = vmatpush1.bf16.msra.mxu0 %v2375
    %2856 = vmatprep.subr.bf16.mxu0 %v2368
    %2857 = vmatpush1.bf16.msra.mxu0 %v2367
    %2858 = vmatprep.subr.bf16.mxu0 %v2360
    %2859 = vmatpush1.bf16.msra.mxu0 %v2359
    %2860 = vmatprep.subr.bf16.mxu0 %v2352
    %2861 = vmatpush1.bf16.msra.mxu0 %v2351
    %2862 = vmatprep.subr.bf16.mxu0 %v2344
    %2863 = vmatpush1.bf16.msra.mxu0 %v2343
    %2864 = vmatprep.subr.bf16.mxu0 %v2464
    %2865 = vmatpush2.bf16.msra.mxu0 %v2463
    %2866 = vmatprep.subr.bf16.mxu0 %v2456
    %2867 = vmatpush2.bf16.msra.mxu0 %v2455
    %2868 = vmatprep.subr.bf16.mxu0 %v2448
    %2869 = vmatpush2.bf16.msra.mxu0 %v2447
    %2870 = vmatprep.subr.bf16.mxu0 %v2440
    %2871 = vmatpush2.bf16.msra.mxu0 %v2439
    %2872 = vmatprep.subr.bf16.mxu0 %v2432
    %2873 = vmatpush2.bf16.msra.mxu0 %v2431
    %2874 = vmatprep.subr.bf16.mxu0 %v2424
    %2875 = vmatpush2.bf16.msra.mxu0 %v2423
    %2876 = vmatprep.subr.bf16.mxu0 %v2416
    %2877 = vmatpush2.bf16.msra.mxu0 %v2415
    %2878 = vmatprep.subr.bf16.mxu0 %v2408
    %2879 = vmatpush2.bf16.msra.mxu0 %v2407
    %2880 = vmatprep.mubr.bf16.mxu0 %v1403
    %2881 = vmatmul.mubr.bf16.gmra.mxu0 %v1402
    %v2882 = vpop.f32.mrf.mxu0
    %v2883 = vadd.f32 %v2842, %v2882
    %v2884 = vpop.f32.mrf.mxu0
    %v2885 = vadd.f32 %v2844, %v2884
    %v2886 = vpop.f32.mrf.mxu0
    %v2887 = vpop.f32.mrf.mxu0
    %2888 = vdwg.mxu0
    %2889 = vmatprep.subr.bf16.mxu0 %v2274
    %2890 = vmatpush1.bf16.msra.mxu0 %v2273
    %2891 = vmatprep.subr.bf16.mxu0 %v2266
    %2892 = vmatpush1.bf16.msra.mxu0 %v2265
    %2893 = vmatprep.subr.bf16.mxu0 %v2258
    %2894 = vmatpush1.bf16.msra.mxu0 %v2257
    %2895 = vmatprep.subr.bf16.mxu0 %v2250
    %2896 = vmatpush1.bf16.msra.mxu0 %v2249
    %2897 = vmatprep.subr.bf16.mxu0 %v2242
    %2898 = vmatpush1.bf16.msra.mxu0 %v2241
    %2899 = vmatprep.subr.bf16.mxu0 %v2234
    %2900 = vmatpush1.bf16.msra.mxu0 %v2233
    %2901 = vmatprep.subr.bf16.mxu0 %v2226
    %2902 = vmatpush1.bf16.msra.mxu0 %v2225
    %2903 = vmatprep.subr.bf16.mxu0 %v2218
    %2904 = vmatpush1.bf16.msra.mxu0 %v2217
    %2905 = vmatprep.subr.bf16.mxu0 %v2338
    %2906 = vmatpush2.bf16.msra.mxu0 %v2337
    %2907 = vmatprep.subr.bf16.mxu0 %v2330
    %2908 = vmatpush2.bf16.msra.mxu0 %v2329
    %2909 = vmatprep.subr.bf16.mxu0 %v2322
    %2910 = vmatpush2.bf16.msra.mxu0 %v2321
    %2911 = vmatprep.subr.bf16.mxu0 %v2314
    %2912 = vmatpush2.bf16.msra.mxu0 %v2313
    %2913 = vmatprep.subr.bf16.mxu0 %v2306
    %2914 = vmatpush2.bf16.msra.mxu0 %v2305
    %2915 = vmatprep.subr.bf16.mxu0 %v2298
    %2916 = vmatpush2.bf16.msra.mxu0 %v2297
    %2917 = vmatprep.subr.bf16.mxu0 %v2290
    %2918 = vmatpush2.bf16.msra.mxu0 %v2289
    %2919 = vmatprep.subr.bf16.mxu0 %v2282
    %2920 = vmatpush2.bf16.msra.mxu0 %v2281
    %2921 = vmatprep.mubr.bf16.mxu0 %v1401
    %2922 = vmatmul.mubr.bf16.gmra.mxu0 %v1400
    %v2923 = vpop.f32.mrf.mxu0
    %v2924 = vadd.f32 %v1424, %v2923
    %v2925 = vpop.f32.mrf.mxu0
    %v2926 = vadd.f32 %v1428, %v2925
    %v2927 = vpop.f32.mrf.mxu0
    %v2928 = vpop.f32.mrf.mxu0
    %2929 = vdwg.mxu0
    %2930 = vmatprep.subr.bf16.mxu0 %v2402
    %2931 = vmatpush1.bf16.msra.mxu0 %v2401
    %2932 = vmatprep.subr.bf16.mxu0 %v2394
    %2933 = vmatpush1.bf16.msra.mxu0 %v2393
    %2934 = vmatprep.subr.bf16.mxu0 %v2386
    %2935 = vmatpush1.bf16.msra.mxu0 %v2385
    %2936 = vmatprep.subr.bf16.mxu0 %v2378
    %2937 = vmatpush1.bf16.msra.mxu0 %v2377
    %2938 = vmatprep.subr.bf16.mxu0 %v2370
    %2939 = vmatpush1.bf16.msra.mxu0 %v2369
    %2940 = vmatprep.subr.bf16.mxu0 %v2362
    %2941 = vmatpush1.bf16.msra.mxu0 %v2361
    %2942 = vmatprep.subr.bf16.mxu0 %v2354
    %2943 = vmatpush1.bf16.msra.mxu0 %v2353
    %2944 = vmatprep.subr.bf16.mxu0 %v2346
    %2945 = vmatpush1.bf16.msra.mxu0 %v2345
    %2946 = vmatprep.subr.bf16.mxu0 %v2466
    %2947 = vmatpush2.bf16.msra.mxu0 %v2465
    %2948 = vmatprep.subr.bf16.mxu0 %v2458
    %2949 = vmatpush2.bf16.msra.mxu0 %v2457
    %2950 = vmatprep.subr.bf16.mxu0 %v2450
    %2951 = vmatpush2.bf16.msra.mxu0 %v2449
    %2952 = vmatprep.subr.bf16.mxu0 %v2442
    %2953 = vmatpush2.bf16.msra.mxu0 %v2441
    %2954 = vmatprep.subr.bf16.mxu0 %v2434
    %2955 = vmatpush2.bf16.msra.mxu0 %v2433
    %2956 = vmatprep.subr.bf16.mxu0 %v2426
    %2957 = vmatpush2.bf16.msra.mxu0 %v2425
    %2958 = vmatprep.subr.bf16.mxu0 %v2418
    %2959 = vmatpush2.bf16.msra.mxu0 %v2417
    %2960 = vmatprep.subr.bf16.mxu0 %v2410
    %2961 = vmatpush2.bf16.msra.mxu0 %v2409
    %2962 = vmatprep.mubr.bf16.mxu0 %v1403
    %2963 = vmatmul.mubr.bf16.gmra.mxu0 %v1402
    %v2964 = vpop.f32.mrf.mxu0
    %v2965 = vadd.f32 %v2924, %v2964
    %v2966 = vpop.f32.mrf.mxu0
    %v2967 = vadd.f32 %v2926, %v2966
    %v2968 = vpop.f32.mrf.mxu0
    %v2969 = vpop.f32.mrf.mxu0
    %2970 = vdwg.mxu0
    %2971 = vmatprep.subr.bf16.mxu0 %v2276
    %2972 = vmatpush1.bf16.msra.mxu0 %v2275
    %2973 = vmatprep.subr.bf16.mxu0 %v2268
    %2974 = vmatpush1.bf16.msra.mxu0 %v2267
    %2975 = vmatprep.subr.bf16.mxu0 %v2260
    %2976 = vmatpush1.bf16.msra.mxu0 %v2259
    %2977 = vmatprep.subr.bf16.mxu0 %v2252
    %2978 = vmatpush1.bf16.msra.mxu0 %v2251
    %2979 = vmatprep.subr.bf16.mxu0 %v2244
    %2980 = vmatpush1.bf16.msra.mxu0 %v2243
    %2981 = vmatprep.subr.bf16.mxu0 %v2236
    %2982 = vmatpush1.bf16.msra.mxu0 %v2235
    %2983 = vmatprep.subr.bf16.mxu0 %v2228
    %2984 = vmatpush1.bf16.msra.mxu0 %v2227
    %2985 = vmatprep.subr.bf16.mxu0 %v2220
    %2986 = vmatpush1.bf16.msra.mxu0 %v2219
    %2987 = vmatprep.subr.bf16.mxu0 %v2340
    %2988 = vmatpush2.bf16.msra.mxu0 %v2339
    %2989 = vmatprep.subr.bf16.mxu0 %v2332
    %2990 = vmatpush2.bf16.msra.mxu0 %v2331
    %2991 = vmatprep.subr.bf16.mxu0 %v2324
    %2992 = vmatpush2.bf16.msra.mxu0 %v2323
    %2993 = vmatprep.subr.bf16.mxu0 %v2316
    %2994 = vmatpush2.bf16.msra.mxu0 %v2315
    %2995 = vmatprep.subr.bf16.mxu0 %v2308
    %2996 = vmatpush2.bf16.msra.mxu0 %v2307
    %2997 = vmatprep.subr.bf16.mxu0 %v2300
    %2998 = vmatpush2.bf16.msra.mxu0 %v2299
    %2999 = vmatprep.subr.bf16.mxu0 %v2292
    %3000 = vmatpush2.bf16.msra.mxu0 %v2291
    %3001 = vmatprep.subr.bf16.mxu0 %v2284
    %3002 = vmatpush2.bf16.msra.mxu0 %v2283
    %3003 = vmatprep.mubr.bf16.mxu0 %v1401
    %3004 = vmatmul.mubr.bf16.gmra.mxu0 %v1400
    %v3005 = vpop.f32.mrf.mxu0
    %v3006 = vadd.f32 %v1432, %v3005
    %v3007 = vpop.f32.mrf.mxu0
    %v3008 = vadd.f32 %v1436, %v3007
    %v3009 = vpop.f32.mrf.mxu0
    %v3010 = vpop.f32.mrf.mxu0
    %3011 = vdwg.mxu0
    %3012 = vmatprep.subr.bf16.mxu0 %v2404
    %3013 = vmatpush1.bf16.msra.mxu0 %v2403
    %3014 = vmatprep.subr.bf16.mxu0 %v2396
    %3015 = vmatpush1.bf16.msra.mxu0 %v2395
    %3016 = vmatprep.subr.bf16.mxu0 %v2388
    %3017 = vmatpush1.bf16.msra.mxu0 %v2387
    %3018 = vmatprep.subr.bf16.mxu0 %v2380
    %3019 = vmatpush1.bf16.msra.mxu0 %v2379
    %3020 = vmatprep.subr.bf16.mxu0 %v2372
    %3021 = vmatpush1.bf16.msra.mxu0 %v2371
    %3022 = vmatprep.subr.bf16.mxu0 %v2364
    %3023 = vmatpush1.bf16.msra.mxu0 %v2363
    %3024 = vmatprep.subr.bf16.mxu0 %v2356
    %3025 = vmatpush1.bf16.msra.mxu0 %v2355
    %3026 = vmatprep.subr.bf16.mxu0 %v2348
    %3027 = vmatpush1.bf16.msra.mxu0 %v2347
    %3028 = vmatprep.subr.bf16.mxu0 %v2468
    %3029 = vmatpush2.bf16.msra.mxu0 %v2467
    %3030 = vmatprep.subr.bf16.mxu0 %v2460
    %3031 = vmatpush2.bf16.msra.mxu0 %v2459
    %3032 = vmatprep.subr.bf16.mxu0 %v2452
    %3033 = vmatpush2.bf16.msra.mxu0 %v2451
    %3034 = vmatprep.subr.bf16.mxu0 %v2444
    %3035 = vmatpush2.bf16.msra.mxu0 %v2443
    %3036 = vmatprep.subr.bf16.mxu0 %v2436
    %3037 = vmatpush2.bf16.msra.mxu0 %v2435
    %3038 = vmatprep.subr.bf16.mxu0 %v2428
    %3039 = vmatpush2.bf16.msra.mxu0 %v2427
    %3040 = vmatprep.subr.bf16.mxu0 %v2420
    %3041 = vmatpush2.bf16.msra.mxu0 %v2419
    %3042 = vmatprep.subr.bf16.mxu0 %v2412
    %3043 = vmatpush2.bf16.msra.mxu0 %v2411
    %3044 = vmatprep.mubr.bf16.mxu0 %v1403
    %3045 = vmatmul.mubr.bf16.gmra.mxu0 %v1402
    %v3046 = vpop.f32.mrf.mxu0
    %v3047 = vadd.f32 %v3006, %v3046
    %v3048 = vpop.f32.mrf.mxu0
    %v3049 = vadd.f32 %v3008, %v3048
    %v3050 = vpop.f32.mrf.mxu0
    %v3051 = vpop.f32.mrf.mxu0
    %3052 = vdwg.mxu0
    %v3053 = vld [vmem:[#allocation8 + $0x1b] sm:$0xff]
    %v3054 = vld [vmem:[#allocation8 + $0x23] sm:$0xff]
    %v3055 = vrot.slane %v2801, 4
    %v3056 = vadd.f32 %v2801, %v3055
    %v3057 = vrot.slane %v3056, 2
    %v3058 = vadd.f32 %v3056, %v3057
    %v3059 = vrot.slane %v3058, 1
    %v3060 = vadd.f32 %v3058, %v3059
    %v3061 = vrot.slane %v2803, 4
    %v3062 = vadd.f32 %v2803, %v3061
    %v3063 = vrot.slane %v3062, 2
    %v3064 = vadd.f32 %v3062, %v3063
    %v3065 = vrot.slane %v3064, 1
    %v3066 = vadd.f32 %v3064, %v3065
    %v3067 = vrot.slane %v2883, 4
    %v3068 = vadd.f32 %v2883, %v3067
    %v3069 = vrot.slane %v3068, 2
    %v3070 = vadd.f32 %v3068, %v3069
    %v3071 = vrot.slane %v3070, 1
    %v3072 = vadd.f32 %v3070, %v3071
    %v3073 = vrot.slane %v2885, 4
    %v3074 = vadd.f32 %v2885, %v3073
    %v3075 = vrot.slane %v3074, 2
    %v3076 = vadd.f32 %v3074, %v3075
    %v3077 = vrot.slane %v3076, 1
    %v3078 = vadd.f32 %v3076, %v3077
    %v3079 = vrot.slane %v2965, 4
    %v3080 = vadd.f32 %v2965, %v3079
    %v3081 = vrot.slane %v3080, 2
    %v3082 = vadd.f32 %v3080, %v3081
    %v3083 = vrot.slane %v3082, 1
    %v3084 = vadd.f32 %v3082, %v3083
    %v3085 = vrot.slane %v2967, 4
    %v3086 = vadd.f32 %v2967, %v3085
    %v3087 = vrot.slane %v3086, 2
    %v3088 = vadd.f32 %v3086, %v3087
    %v3089 = vrot.slane %v3088, 1
    %v3090 = vadd.f32 %v3088, %v3089
    %v3091 = vrot.slane %v3047, 4
    %v3092 = vadd.f32 %v3047, %v3091
    %v3093 = vrot.slane %v3092, 2
    %v3094 = vadd.f32 %v3092, %v3093
    %v3095 = vrot.slane %v3094, 1
    %v3096 = vadd.f32 %v3094, %v3095
    %v3097 = vrot.slane %v3049, 4
    %v3098 = vadd.f32 %v3049, %v3097
    %v3099 = vrot.slane %v3098, 2
    %v3100 = vadd.f32 %v3098, %v3099
    %v3101 = vrot.slane %v3100, 1
    %v3102 = vadd.f32 %v3100, %v3101
    %v3103 = vmul.f32 %v3060, %v346
    %v3104 = vmul.f32 %v3066, %v346
    %v3105 = vmul.f32 %v3072, %v346
    %v3106 = vmul.f32 %v3078, %v346
    %v3107 = vmul.f32 %v3084, %v346
    %v3108 = vmul.f32 %v3090, %v346
    %v3109 = vmul.f32 %v3096, %v346
    %v3110 = vmul.f32 %v3102, %v346
    %v3111 = vmul.f32 %v2801, %v2801
    %v3112 = vmul.f32 %v2803, %v2803
    %v3113 = vmul.f32 %v2883, %v2883
    %v3114 = vmul.f32 %v2885, %v2885
    %v3115 = vmul.f32 %v2965, %v2965
    %v3116 = vmul.f32 %v2967, %v2967
    %v3117 = vmul.f32 %v3047, %v3047
    %v3118 = vmul.f32 %v3049, %v3049
    %v3119 = vrot.slane %v3111, 4
    %v3120 = vadd.f32 %v3111, %v3119
    %v3121 = vrot.slane %v3120, 2
    %v3122 = vadd.f32 %v3120, %v3121
    %v3123 = vrot.slane %v3122, 1
    %v3124 = vadd.f32 %v3122, %v3123
    %v3125 = vrot.slane %v3112, 4
    %v3126 = vadd.f32 %v3112, %v3125
    %v3127 = vrot.slane %v3126, 2
    %v3128 = vadd.f32 %v3126, %v3127
    %v3129 = vrot.slane %v3128, 1
    %v3130 = vadd.f32 %v3128, %v3129
    %v3131 = vrot.slane %v3113, 4
    %v3132 = vadd.f32 %v3113, %v3131
    %v3133 = vrot.slane %v3132, 2
    %v3134 = vadd.f32 %v3132, %v3133
    %v3135 = vrot.slane %v3134, 1
    %v3136 = vadd.f32 %v3134, %v3135
    %v3137 = vrot.slane %v3114, 4
    %v3138 = vadd.f32 %v3114, %v3137
    %v3139 = vrot.slane %v3138, 2
    %v3140 = vadd.f32 %v3138, %v3139
    %v3141 = vrot.slane %v3140, 1
    %v3142 = vadd.f32 %v3140, %v3141
    %v3143 = vrot.slane %v3115, 4
    %v3144 = vadd.f32 %v3115, %v3143
    %v3145 = vrot.slane %v3144, 2
    %v3146 = vadd.f32 %v3144, %v3145
    %v3147 = vrot.slane %v3146, 1
    %v3148 = vadd.f32 %v3146, %v3147
    %v3149 = vrot.slane %v3116, 4
    %v3150 = vadd.f32 %v3116, %v3149
    %v3151 = vrot.slane %v3150, 2
    %v3152 = vadd.f32 %v3150, %v3151
    %v3153 = vrot.slane %v3152, 1
    %v3154 = vadd.f32 %v3152, %v3153
    %v3155 = vrot.slane %v3117, 4
    %v3156 = vadd.f32 %v3117, %v3155
    %v3157 = vrot.slane %v3156, 2
    %v3158 = vadd.f32 %v3156, %v3157
    %v3159 = vrot.slane %v3158, 1
    %v3160 = vadd.f32 %v3158, %v3159
    %v3161 = vrot.slane %v3118, 4
    %v3162 = vadd.f32 %v3118, %v3161
    %v3163 = vrot.slane %v3162, 2
    %v3164 = vadd.f32 %v3162, %v3163
    %v3165 = vrot.slane %v3164, 1
    %v3166 = vadd.f32 %v3164, %v3165
    %v3167 = vmul.f32 %v3124, %v346
    %v3168 = vmul.f32 %v3130, %v346
    %v3169 = vmul.f32 %v3136, %v346
    %v3170 = vmul.f32 %v3142, %v346
    %v3171 = vmul.f32 %v3148, %v346
    %v3172 = vmul.f32 %v3154, %v346
    %v3173 = vmul.f32 %v3160, %v346
    %v3174 = vmul.f32 %v3166, %v346
    %v3175 = vmul.f32 %v3103, %v3103
    %v3176 = vmul.f32 %v3104, %v3104
    %v3177 = vmul.f32 %v3105, %v3105
    %v3178 = vmul.f32 %v3106, %v3106
    %v3179 = vmul.f32 %v3107, %v3107
    %v3180 = vmul.f32 %v3108, %v3108
    %v3181 = vmul.f32 %v3109, %v3109
    %v3182 = vmul.f32 %v3110, %v3110
    %v3183 = vsub.f32 %v3167, %v3175
    %v3184 = vsub.f32 %v3168, %v3176
    %v3185 = vsub.f32 %v3169, %v3177
    %v3186 = vsub.f32 %v3170, %v3178
    %v3187 = vsub.f32 %v3171, %v3179
    %v3188 = vsub.f32 %v3172, %v3180
    %v3189 = vsub.f32 %v3173, %v3181
    %v3190 = vsub.f32 %v3174, %v3182
    %v3191 = vmax.f32 %v3183, 0.0
    %v3192 = vmax.f32 %v3184, 0.0
    %v3193 = vmax.f32 %v3185, 0.0
    %v3194 = vmax.f32 %v3186, 0.0
    %v3195 = vmax.f32 %v3187, 0.0
    %v3196 = vmax.f32 %v3188, 0.0
    %v3197 = vmax.f32 %v3189, 0.0
    %v3198 = vmax.f32 %v3190, 0.0
    %v3199 = vadd.f32 %v3191, 0.8
    %v3200 = vadd.f32 %v3192, 0.8
    %v3201 = vadd.f32 %v3193, 0.8
    %v3202 = vadd.f32 %v3194, 0.8
    %v3203 = vadd.f32 %v3195, 0.8
    %v3204 = vadd.f32 %v3196, 0.8
    %v3205 = vadd.f32 %v3197, 0.8
    %v3206 = vadd.f32 %v3198, 0.8
    %v3207 = vrsqrt.pop %v3199
    %v3208 = vrsqrt.pop %v3200
    %v3209 = vrsqrt.pop %v3201
    %v3210 = vrsqrt.pop %v3202
    %v3211 = vrsqrt.pop %v3203
    %v3212 = vrsqrt.pop %v3204
    %v3213 = vrsqrt.pop %v3205
    %v3214 = vrsqrt.pop %v3206
    %v3223 = vcombine.low %v3207, %v3208
    %v3224 = vcombine.low %v3209, %v3210
    %v3225 = vcombine.low %v3211, %v3212
    %v3226 = vcombine.low %v3213, %v3214
    %v3228 = vunpack.c.l.s4 1966171168
    %v3229 = vunpack.c.0.s8 %v3228
    %v3230 = vlaneseq
    %v3231 = vshrl.u32 %v3230, 7
    %v3232 = vsub.s32 %v3229, %v3231
    %v3233 = vrot.slane %v3223, %v3232
    %v3235 = vunpack.c.l.s4 1966171168
    %v3236 = vunpack.c.0.s8 %v3235
    %v3237 = vlaneseq
    %v3238 = vshrl.u32 %v3237, 7
    %v3239 = vsub.s32 %v3236, %v3238
    %v3240 = vrot.slane %v3224, %v3239
    %v3242 = vunpack.c.l.s4 1966171168
    %v3243 = vunpack.c.0.s8 %v3242
    %v3244 = vlaneseq
    %v3245 = vshrl.u32 %v3244, 7
    %v3246 = vsub.s32 %v3243, %v3245
    %v3247 = vrot.slane %v3225, %v3246
    %v3249 = vunpack.c.l.s4 1966171168
    %v3250 = vunpack.c.0.s8 %v3249
    %v3251 = vlaneseq
    %v3252 = vshrl.u32 %v3251, 7
    %v3253 = vsub.s32 %v3250, %v3252
    %v3254 = vrot.slane %v3226, %v3253
    %v3255 = vcombine.low %v3233, %v3240
    %v3256 = vcombine.low %v3247, %v3254
    %v3258 = vunpack.c.l.s4 1966171168
    %v3259 = vunpack.c.0.s8 %v3258
    %v3260 = vlaneseq
    %v3261 = vshrl.u32 %v3260, 7
    %v3262 = vsub.s32 %v3259, %v3261
    %v3263 = vrot.slane %v3255, %v3262
    %v3265 = vunpack.c.l.s4 1966171168
    %v3266 = vunpack.c.0.s8 %v3265
    %v3267 = vlaneseq
    %v3268 = vshrl.u32 %v3267, 7
    %v3269 = vsub.s32 %v3266, %v3268
    %v3270 = vrot.slane %v3256, %v3269
    %v3271 = vcombine.low %v3263, %v3270
    %v3273 = vmul.f32 %v3053, %v3271
    %v3275 = vlaneseq
    %v3276 = vshrl.u32 %v3275, 7
    %v3277 = vsub.s32 0, %v3276
    %v3278 = vrot.slane %v3273, %v3277
    %v3279 = vlaneseq
    %v3280 = vshrl.u32 %v3279, 7
    %v3281 = vsub.s32 1, %v3280
    %v3282 = vrot.slane %v3273, %v3281
    %v3283 = vlaneseq
    %v3284 = vshrl.u32 %v3283, 7
    %v3285 = vsub.s32 2, %v3284
    %v3286 = vrot.slane %v3273, %v3285
    %v3287 = vlaneseq
    %v3288 = vshrl.u32 %v3287, 7
    %v3289 = vsub.s32 3, %v3288
    %v3290 = vrot.slane %v3273, %v3289
    %v3291 = vlaneseq
    %v3292 = vshrl.u32 %v3291, 7
    %v3293 = vsub.s32 4, %v3292
    %v3294 = vrot.slane %v3273, %v3293
    %v3295 = vlaneseq
    %v3296 = vshrl.u32 %v3295, 7
    %v3297 = vsub.s32 5, %v3296
    %v3298 = vrot.slane %v3273, %v3297
    %v3299 = vlaneseq
    %v3300 = vshrl.u32 %v3299, 7
    %v3301 = vsub.s32 6, %v3300
    %v3302 = vrot.slane %v3273, %v3301
    %v3303 = vlaneseq
    %v3304 = vshrl.u32 %v3303, 7
    %v3305 = vsub.s32 7, %v3304
    %v3306 = vrot.slane %v3273, %v3305
    %v3315 = vmul.f32 %v3103, %v3278
    %v3316 = vmul.f32 %v3104, %v3282
    %v3317 = vmul.f32 %v3105, %v3286
    %v3318 = vmul.f32 %v3106, %v3290
    %v3319 = vmul.f32 %v3107, %v3294
    %v3320 = vmul.f32 %v3108, %v3298
    %v3321 = vmul.f32 %v3109, %v3302
    %v3322 = vmul.f32 %v3110, %v3306
    %v3331 = vcombine.low %v3315, %v3316
    %v3332 = vcombine.low %v3317, %v3318
    %v3333 = vcombine.low %v3319, %v3320
    %v3334 = vcombine.low %v3321, %v3322
    %v3336 = vunpack.c.l.s4 1966171168
    %v3337 = vunpack.c.0.s8 %v3336
    %v3338 = vlaneseq
    %v3339 = vshrl.u32 %v3338, 7
    %v3340 = vsub.s32 %v3337, %v3339
    %v3341 = vrot.slane %v3331, %v3340
    %v3343 = vunpack.c.l.s4 1966171168
    %v3344 = vunpack.c.0.s8 %v3343
    %v3345 = vlaneseq
    %v3346 = vshrl.u32 %v3345, 7
    %v3347 = vsub.s32 %v3344, %v3346
    %v3348 = vrot.slane %v3332, %v3347
    %v3350 = vunpack.c.l.s4 1966171168
    %v3351 = vunpack.c.0.s8 %v3350
    %v3352 = vlaneseq
    %v3353 = vshrl.u32 %v3352, 7
    %v3354 = vsub.s32 %v3351, %v3353
    %v3355 = vrot.slane %v3333, %v3354
    %v3357 = vunpack.c.l.s4 1966171168
    %v3358 = vunpack.c.0.s8 %v3357
    %v3359 = vlaneseq
    %v3360 = vshrl.u32 %v3359, 7
    %v3361 = vsub.s32 %v3358, %v3360
    %v3362 = vrot.slane %v3334, %v3361
    %v3363 = vcombine.low %v3341, %v3348
    %v3364 = vcombine.low %v3355, %v3362
    %v3366 = vunpack.c.l.s4 1966171168
    %v3367 = vunpack.c.0.s8 %v3366
    %v3368 = vlaneseq
    %v3369 = vshrl.u32 %v3368, 7
    %v3370 = vsub.s32 %v3367, %v3369
    %v3371 = vrot.slane %v3363, %v3370
    %v3373 = vunpack.c.l.s4 1966171168
    %v3374 = vunpack.c.0.s8 %v3373
    %v3375 = vlaneseq
    %v3376 = vshrl.u32 %v3375, 7
    %v3377 = vsub.s32 %v3374, %v3376
    %v3378 = vrot.slane %v3364, %v3377
    %v3379 = vcombine.low %v3371, %v3378
    %v3381 = vsub.f32 %v3054, %v3379
    %v3382 = vmul.f32 %v2801, %v3278
    %v3383 = vmul.f32 %v2803, %v3282
    %v3384 = vmul.f32 %v2883, %v3286
    %v3385 = vmul.f32 %v2885, %v3290
    %v3386 = vmul.f32 %v2965, %v3294
    %v3387 = vmul.f32 %v2967, %v3298
    %v3388 = vmul.f32 %v3047, %v3302
    %v3389 = vmul.f32 %v3049, %v3306
    %v3391 = vlaneseq
    %v3392 = vshrl.u32 %v3391, 7
    %v3393 = vsub.s32 0, %v3392
    %v3394 = vrot.slane %v3381, %v3393
    %v3395 = vlaneseq
    %v3396 = vshrl.u32 %v3395, 7
    %v3397 = vsub.s32 1, %v3396
    %v3398 = vrot.slane %v3381, %v3397
    %v3399 = vlaneseq
    %v3400 = vshrl.u32 %v3399, 7
    %v3401 = vsub.s32 2, %v3400
    %v3402 = vrot.slane %v3381, %v3401
    %v3403 = vlaneseq
    %v3404 = vshrl.u32 %v3403, 7
    %v3405 = vsub.s32 3, %v3404
    %v3406 = vrot.slane %v3381, %v3405
    %v3407 = vlaneseq
    %v3408 = vshrl.u32 %v3407, 7
    %v3409 = vsub.s32 4, %v3408
    %v3410 = vrot.slane %v3381, %v3409
    %v3411 = vlaneseq
    %v3412 = vshrl.u32 %v3411, 7
    %v3413 = vsub.s32 5, %v3412
    %v3414 = vrot.slane %v3381, %v3413
    %v3415 = vlaneseq
    %v3416 = vshrl.u32 %v3415, 7
    %v3417 = vsub.s32 6, %v3416
    %v3418 = vrot.slane %v3381, %v3417
    %v3419 = vlaneseq
    %v3420 = vshrl.u32 %v3419, 7
    %v3421 = vsub.s32 7, %v3420
    %v3422 = vrot.slane %v3381, %v3421
    %v3431 = vadd.f32 %v3382, %v3394
    %v3432 = vadd.f32 %v3383, %v3398
    %v3433 = vadd.f32 %v3384, %v3402
    %v3434 = vadd.f32 %v3385, %v3406
    %v3435 = vadd.f32 %v3386, %v3410
    %v3436 = vadd.f32 %v3387, %v3414
    %v3437 = vadd.f32 %v3388, %v3418
    %v3438 = vadd.f32 %v3389, %v3422
    %v3439 = vmul.f32 %v3431, 0.2
    %v3440 = vmul.f32 %v3432, 0.2
    %v3441 = vmul.f32 %v3433, 0.2
    %v3442 = vmul.f32 %v3434, 0.2
    %v3443 = vmul.f32 %v3435, 0.2
    %v3444 = vmul.f32 %v3436, 0.2
    %v3445 = vmul.f32 %v3437, 0.2
    %v3446 = vmul.f32 %v3438, 0.2
    %v3447 = vmax.f32 %v3431, %v3439
    %v3448 = vmax.f32 %v3432, %v3440
    %v3449 = vmax.f32 %v3433, %v3441
    %v3450 = vmax.f32 %v3434, %v3442
    %v3451 = vmax.f32 %v3435, %v3443
    %v3452 = vmax.f32 %v3436, %v3444
    %v3453 = vmax.f32 %v3437, %v3445
    %v3454 = vmax.f32 %v3438, %v3446
    %s3455 = smul.u32 4, 128
    %s3456 = smul.u32 %s3455, 2
    %s3457 = sshll.u32 %s3456, 4
    %3458 = dma.done %s99, %s3457
    %v3459 = vld [vmem:[#allocation3] sm:$0xff]
    %v3460 = vld [vmem:[#allocation3 + $0x8] sm:$0xff]
    %v3461 = vld [vmem:[#allocation3 + $0x10] sm:$0xff]
    %v3462 = vld [vmem:[#allocation3 + $0x18] sm:$0xff]
    %v3463 = vld [vmem:[#allocation3 + $0x20] sm:$0xff]
    %v3464 = vld [vmem:[#allocation3 + $0x28] sm:$0xff]
    %v3465 = vld [vmem:[#allocation3 + $0x30] sm:$0xff]
    %v3466 = vld [vmem:[#allocation3 + $0x38] sm:$0xff]
    %v3467 = vld [vmem:[#allocation3 + $0x40] sm:$0xff]
    %v3468 = vld [vmem:[#allocation3 + $0x48] sm:$0xff]
    %v3469 = vld [vmem:[#allocation3 + $0x50] sm:$0xff]
    %v3470 = vld [vmem:[#allocation3 + $0x58] sm:$0xff]
    %v3471 = vld [vmem:[#allocation3 + $0x60] sm:$0xff]
    %v3472 = vld [vmem:[#allocation3 + $0x68] sm:$0xff]
    %v3473 = vld [vmem:[#allocation3 + $0x70] sm:$0xff]
    %v3474 = vld [vmem:[#allocation3 + $0x78] sm:$0xff]
    %v3475 = vld [vmem:[#allocation3 + $0x80] sm:$0xff]
    %v3476 = vld [vmem:[#allocation3 + $0x88] sm:$0xff]
    %v3477 = vld [vmem:[#allocation3 + $0x90] sm:$0xff]
    %v3478 = vld [vmem:[#allocation3 + $0x98] sm:$0xff]
    %v3479 = vld [vmem:[#allocation3 + $0xa0] sm:$0xff]
    %v3480 = vld [vmem:[#allocation3 + $0xa8] sm:$0xff]
    %v3481 = vld [vmem:[#allocation3 + $0xb0] sm:$0xff]
    %v3482 = vld [vmem:[#allocation3 + $0xb8] sm:$0xff]
    %v3483 = vld [vmem:[#allocation3 + $0xc0] sm:$0xff]
    %v3484 = vld [vmem:[#allocation3 + $0xc8] sm:$0xff]
    %v3485 = vld [vmem:[#allocation3 + $0xd0] sm:$0xff]
    %v3486 = vld [vmem:[#allocation3 + $0xd8] sm:$0xff]
    %v3487 = vld [vmem:[#allocation3 + $0xe0] sm:$0xff]
    %v3488 = vld [vmem:[#allocation3 + $0xe8] sm:$0xff]
    %v3489 = vld [vmem:[#allocation3 + $0xf0] sm:$0xff]
    %v3490 = vld [vmem:[#allocation3 + $0xf8] sm:$0xff]
    %v3491 = vld [vmem:[#allocation3 + $0x100] sm:$0xff]
    %v3492 = vld [vmem:[#allocation3 + $0x108] sm:$0xff]
    %v3493 = vld [vmem:[#allocation3 + $0x110] sm:$0xff]
    %v3494 = vld [vmem:[#allocation3 + $0x118] sm:$0xff]
    %v3495 = vld [vmem:[#allocation3 + $0x120] sm:$0xff]
    %v3496 = vld [vmem:[#allocation3 + $0x128] sm:$0xff]
    %v3497 = vld [vmem:[#allocation3 + $0x130] sm:$0xff]
    %v3498 = vld [vmem:[#allocation3 + $0x138] sm:$0xff]
    %v3499 = vld [vmem:[#allocation3 + $0x140] sm:$0xff]
    %v3500 = vld [vmem:[#allocation3 + $0x148] sm:$0xff]
    %v3501 = vld [vmem:[#allocation3 + $0x150] sm:$0xff]
    %v3502 = vld [vmem:[#allocation3 + $0x158] sm:$0xff]
    %v3503 = vld [vmem:[#allocation3 + $0x160] sm:$0xff]
    %v3504 = vld [vmem:[#allocation3 + $0x168] sm:$0xff]
    %v3505 = vld [vmem:[#allocation3 + $0x170] sm:$0xff]
    %v3506 = vld [vmem:[#allocation3 + $0x178] sm:$0xff]
    %v3507 = vld [vmem:[#allocation3 + $0x180] sm:$0xff]
    %v3508 = vld [vmem:[#allocation3 + $0x188] sm:$0xff]
    %v3509 = vld [vmem:[#allocation3 + $0x190] sm:$0xff]
    %v3510 = vld [vmem:[#allocation3 + $0x198] sm:$0xff]
    %v3511 = vld [vmem:[#allocation3 + $0x1a0] sm:$0xff]
    %v3512 = vld [vmem:[#allocation3 + $0x1a8] sm:$0xff]
    %v3513 = vld [vmem:[#allocation3 + $0x1b0] sm:$0xff]
    %v3514 = vld [vmem:[#allocation3 + $0x1b8] sm:$0xff]
    %v3515 = vld [vmem:[#allocation3 + $0x1c0] sm:$0xff]
    %v3516 = vld [vmem:[#allocation3 + $0x1c8] sm:$0xff]
    %v3517 = vld [vmem:[#allocation3 + $0x1d0] sm:$0xff]
    %v3518 = vld [vmem:[#allocation3 + $0x1d8] sm:$0xff]
    %v3519 = vld [vmem:[#allocation3 + $0x1e0] sm:$0xff]
    %v3520 = vld [vmem:[#allocation3 + $0x1e8] sm:$0xff]
    %v3521 = vld [vmem:[#allocation3 + $0x1f0] sm:$0xff]
    %v3522 = vld [vmem:[#allocation3 + $0x1f8] sm:$0xff]
    %v3523 = vld [vmem:[#allocation3 + $0x200] sm:$0xff]
    %v3524 = vld [vmem:[#allocation3 + $0x208] sm:$0xff]
    %v3525 = vld [vmem:[#allocation3 + $0x210] sm:$0xff]
    %v3526 = vld [vmem:[#allocation3 + $0x218] sm:$0xff]
    %v3527 = vld [vmem:[#allocation3 + $0x220] sm:$0xff]
    %v3528 = vld [vmem:[#allocation3 + $0x228] sm:$0xff]
    %v3529 = vld [vmem:[#allocation3 + $0x230] sm:$0xff]
    %v3530 = vld [vmem:[#allocation3 + $0x238] sm:$0xff]
    %v3531 = vld [vmem:[#allocation3 + $0x240] sm:$0xff]
    %v3532 = vld [vmem:[#allocation3 + $0x248] sm:$0xff]
    %v3533 = vld [vmem:[#allocation3 + $0x250] sm:$0xff]
    %v3534 = vld [vmem:[#allocation3 + $0x258] sm:$0xff]
    %v3535 = vld [vmem:[#allocation3 + $0x260] sm:$0xff]
    %v3536 = vld [vmem:[#allocation3 + $0x268] sm:$0xff]
    %v3537 = vld [vmem:[#allocation3 + $0x270] sm:$0xff]
    %v3538 = vld [vmem:[#allocation3 + $0x278] sm:$0xff]
    %v3539 = vld [vmem:[#allocation3 + $0x280] sm:$0xff]
    %v3540 = vld [vmem:[#allocation3 + $0x288] sm:$0xff]
    %v3541 = vld [vmem:[#allocation3 + $0x290] sm:$0xff]
    %v3542 = vld [vmem:[#allocation3 + $0x298] sm:$0xff]
    %v3543 = vld [vmem:[#allocation3 + $0x2a0] sm:$0xff]
    %v3544 = vld [vmem:[#allocation3 + $0x2a8] sm:$0xff]
    %v3545 = vld [vmem:[#allocation3 + $0x2b0] sm:$0xff]
    %v3546 = vld [vmem:[#allocation3 + $0x2b8] sm:$0xff]
    %v3547 = vld [vmem:[#allocation3 + $0x2c0] sm:$0xff]
    %v3548 = vld [vmem:[#allocation3 + $0x2c8] sm:$0xff]
    %v3549 = vld [vmem:[#allocation3 + $0x2d0] sm:$0xff]
    %v3550 = vld [vmem:[#allocation3 + $0x2d8] sm:$0xff]
    %v3551 = vld [vmem:[#allocation3 + $0x2e0] sm:$0xff]
    %v3552 = vld [vmem:[#allocation3 + $0x2e8] sm:$0xff]
    %v3553 = vld [vmem:[#allocation3 + $0x2f0] sm:$0xff]
    %v3554 = vld [vmem:[#allocation3 + $0x2f8] sm:$0xff]
    %v3555 = vld [vmem:[#allocation3 + $0x300] sm:$0xff]
    %v3556 = vld [vmem:[#allocation3 + $0x308] sm:$0xff]
    %v3557 = vld [vmem:[#allocation3 + $0x310] sm:$0xff]
    %v3558 = vld [vmem:[#allocation3 + $0x318] sm:$0xff]
    %v3559 = vld [vmem:[#allocation3 + $0x320] sm:$0xff]
    %v3560 = vld [vmem:[#allocation3 + $0x328] sm:$0xff]
    %v3561 = vld [vmem:[#allocation3 + $0x330] sm:$0xff]
    %v3562 = vld [vmem:[#allocation3 + $0x338] sm:$0xff]
    %v3563 = vld [vmem:[#allocation3 + $0x340] sm:$0xff]
    %v3564 = vld [vmem:[#allocation3 + $0x348] sm:$0xff]
    %v3565 = vld [vmem:[#allocation3 + $0x350] sm:$0xff]
    %v3566 = vld [vmem:[#allocation3 + $0x358] sm:$0xff]
    %v3567 = vld [vmem:[#allocation3 + $0x360] sm:$0xff]
    %v3568 = vld [vmem:[#allocation3 + $0x368] sm:$0xff]
    %v3569 = vld [vmem:[#allocation3 + $0x370] sm:$0xff]
    %v3570 = vld [vmem:[#allocation3 + $0x378] sm:$0xff]
    %v3571 = vld [vmem:[#allocation3 + $0x380] sm:$0xff]
    %v3572 = vld [vmem:[#allocation3 + $0x388] sm:$0xff]
    %v3573 = vld [vmem:[#allocation3 + $0x390] sm:$0xff]
    %v3574 = vld [vmem:[#allocation3 + $0x398] sm:$0xff]
    %v3575 = vld [vmem:[#allocation3 + $0x3a0] sm:$0xff]
    %v3576 = vld [vmem:[#allocation3 + $0x3a8] sm:$0xff]
    %v3577 = vld [vmem:[#allocation3 + $0x3b0] sm:$0xff]
    %v3578 = vld [vmem:[#allocation3 + $0x3b8] sm:$0xff]
    %v3579 = vld [vmem:[#allocation3 + $0x3c0] sm:$0xff]
    %v3580 = vld [vmem:[#allocation3 + $0x3c8] sm:$0xff]
    %v3581 = vld [vmem:[#allocation3 + $0x3d0] sm:$0xff]
    %v3582 = vld [vmem:[#allocation3 + $0x3d8] sm:$0xff]
    %v3583 = vld [vmem:[#allocation3 + $0x3e0] sm:$0xff]
    %v3584 = vld [vmem:[#allocation3 + $0x3e8] sm:$0xff]
    %v3585 = vld [vmem:[#allocation3 + $0x3f0] sm:$0xff]
    %v3586 = vld [vmem:[#allocation3 + $0x3f8] sm:$0xff]
    %v3587 = vld [vmem:[#allocation8 + $0x2b] sm:$0x3]
    %v3588 = vpack.c.bf16 %v3447, %v3447
    %v3589 = vpack.c.bf16 %v3448, %v3448
    %v3590 = vpack.c.bf16 %v3449, %v3449
    %v3591 = vpack.c.bf16 %v3450, %v3450
    %v3592 = vpack.c.bf16 %v3451, %v3451
    %v3593 = vpack.c.bf16 %v3452, %v3452
    %v3594 = vpack.c.bf16 %v3453, %v3453
    %v3595 = vpack.c.bf16 %v3454, %v3454
    %v3597 = vlaneseq
    %v3598 = vshrl.u32 %v3597, 7
    %v3599 = vsub.s32 0, %v3598
    %v3600 = vrot.slane %v3587, %v3599
    %v3601 = vlaneseq
    %v3602 = vshrl.u32 %v3601, 7
    %v3603 = vsub.s32 1, %v3602
    %v3604 = vrot.slane %v3587, %v3603
    %v3735 = vunpack.c.l.b16 %v3459
    %v3736 = vunpack.c.h.b16 %v3459
    %v3737 = vunpack.c.l.b16 %v3460
    %v3738 = vunpack.c.h.b16 %v3460
    %v3739 = vunpack.c.l.b16 %v3461
    %v3740 = vunpack.c.h.b16 %v3461
    %v3741 = vunpack.c.l.b16 %v3462
    %v3742 = vunpack.c.h.b16 %v3462
    %v3743 = vunpack.c.l.b16 %v3463
    %v3744 = vunpack.c.h.b16 %v3463
    %v3745 = vunpack.c.l.b16 %v3464
    %v3746 = vunpack.c.h.b16 %v3464
    %v3747 = vunpack.c.l.b16 %v3465
    %v3748 = vunpack.c.h.b16 %v3465
    %v3749 = vunpack.c.l.b16 %v3466
    %v3750 = vunpack.c.h.b16 %v3466
    %v3751 = vunpack.c.l.b16 %v3467
    %v3752 = vunpack.c.h.b16 %v3467
    %v3753 = vunpack.c.l.b16 %v3468
    %v3754 = vunpack.c.h.b16 %v3468
    %v3755 = vunpack.c.l.b16 %v3469
    %v3756 = vunpack.c.h.b16 %v3469
    %v3757 = vunpack.c.l.b16 %v3470
    %v3758 = vunpack.c.h.b16 %v3470
    %v3759 = vunpack.c.l.b16 %v3471
    %v3760 = vunpack.c.h.b16 %v3471
    %v3761 = vunpack.c.l.b16 %v3472
    %v3762 = vunpack.c.h.b16 %v3472
    %v3763 = vunpack.c.l.b16 %v3473
    %v3764 = vunpack.c.h.b16 %v3473
    %v3765 = vunpack.c.l.b16 %v3474
    %v3766 = vunpack.c.h.b16 %v3474
    %v3767 = vunpack.c.l.b16 %v3475
    %v3768 = vunpack.c.h.b16 %v3475
    %v3769 = vunpack.c.l.b16 %v3476
    %v3770 = vunpack.c.h.b16 %v3476
    %v3771 = vunpack.c.l.b16 %v3477
    %v3772 = vunpack.c.h.b16 %v3477
    %v3773 = vunpack.c.l.b16 %v3478
    %v3774 = vunpack.c.h.b16 %v3478
    %v3775 = vunpack.c.l.b16 %v3479
    %v3776 = vunpack.c.h.b16 %v3479
    %v3777 = vunpack.c.l.b16 %v3480
    %v3778 = vunpack.c.h.b16 %v3480
    %v3779 = vunpack.c.l.b16 %v3481
    %v3780 = vunpack.c.h.b16 %v3481
    %v3781 = vunpack.c.l.b16 %v3482
    %v3782 = vunpack.c.h.b16 %v3482
    %v3783 = vunpack.c.l.b16 %v3483
    %v3784 = vunpack.c.h.b16 %v3483
    %v3785 = vunpack.c.l.b16 %v3484
    %v3786 = vunpack.c.h.b16 %v3484
    %v3787 = vunpack.c.l.b16 %v3485
    %v3788 = vunpack.c.h.b16 %v3485
    %v3789 = vunpack.c.l.b16 %v3486
    %v3790 = vunpack.c.h.b16 %v3486
    %v3791 = vunpack.c.l.b16 %v3487
    %v3792 = vunpack.c.h.b16 %v3487
    %v3793 = vunpack.c.l.b16 %v3488
    %v3794 = vunpack.c.h.b16 %v3488
    %v3795 = vunpack.c.l.b16 %v3489
    %v3796 = vunpack.c.h.b16 %v3489
    %v3797 = vunpack.c.l.b16 %v3490
    %v3798 = vunpack.c.h.b16 %v3490
    %v3799 = vunpack.c.l.b16 %v3491
    %v3800 = vunpack.c.h.b16 %v3491
    %v3801 = vunpack.c.l.b16 %v3492
    %v3802 = vunpack.c.h.b16 %v3492
    %v3803 = vunpack.c.l.b16 %v3493
    %v3804 = vunpack.c.h.b16 %v3493
    %v3805 = vunpack.c.l.b16 %v3494
    %v3806 = vunpack.c.h.b16 %v3494
    %v3807 = vunpack.c.l.b16 %v3495
    %v3808 = vunpack.c.h.b16 %v3495
    %v3809 = vunpack.c.l.b16 %v3496
    %v3810 = vunpack.c.h.b16 %v3496
    %v3811 = vunpack.c.l.b16 %v3497
    %v3812 = vunpack.c.h.b16 %v3497
    %v3813 = vunpack.c.l.b16 %v3498
    %v3814 = vunpack.c.h.b16 %v3498
    %v3815 = vunpack.c.l.b16 %v3499
    %v3816 = vunpack.c.h.b16 %v3499
    %v3817 = vunpack.c.l.b16 %v3500
    %v3818 = vunpack.c.h.b16 %v3500
    %v3819 = vunpack.c.l.b16 %v3501
    %v3820 = vunpack.c.h.b16 %v3501
    %v3821 = vunpack.c.l.b16 %v3502
    %v3822 = vunpack.c.h.b16 %v3502
    %v3823 = vunpack.c.l.b16 %v3503
    %v3824 = vunpack.c.h.b16 %v3503
    %v3825 = vunpack.c.l.b16 %v3504
    %v3826 = vunpack.c.h.b16 %v3504
    %v3827 = vunpack.c.l.b16 %v3505
    %v3828 = vunpack.c.h.b16 %v3505
    %v3829 = vunpack.c.l.b16 %v3506
    %v3830 = vunpack.c.h.b16 %v3506
    %v3831 = vunpack.c.l.b16 %v3507
    %v3832 = vunpack.c.h.b16 %v3507
    %v3833 = vunpack.c.l.b16 %v3508
    %v3834 = vunpack.c.h.b16 %v3508
    %v3835 = vunpack.c.l.b16 %v3509
    %v3836 = vunpack.c.h.b16 %v3509
    %v3837 = vunpack.c.l.b16 %v3510
    %v3838 = vunpack.c.h.b16 %v3510
    %v3839 = vunpack.c.l.b16 %v3511
    %v3840 = vunpack.c.h.b16 %v3511
    %v3841 = vunpack.c.l.b16 %v3512
    %v3842 = vunpack.c.h.b16 %v3512
    %v3843 = vunpack.c.l.b16 %v3513
    %v3844 = vunpack.c.h.b16 %v3513
    %v3845 = vunpack.c.l.b16 %v3514
    %v3846 = vunpack.c.h.b16 %v3514
    %v3847 = vunpack.c.l.b16 %v3515
    %v3848 = vunpack.c.h.b16 %v3515
    %v3849 = vunpack.c.l.b16 %v3516
    %v3850 = vunpack.c.h.b16 %v3516
    %v3851 = vunpack.c.l.b16 %v3517
    %v3852 = vunpack.c.h.b16 %v3517
    %v3853 = vunpack.c.l.b16 %v3518
    %v3854 = vunpack.c.h.b16 %v3518
    %v3855 = vunpack.c.l.b16 %v3519
    %v3856 = vunpack.c.h.b16 %v3519
    %v3857 = vunpack.c.l.b16 %v3520
    %v3858 = vunpack.c.h.b16 %v3520
    %v3859 = vunpack.c.l.b16 %v3521
    %v3860 = vunpack.c.h.b16 %v3521
    %v3861 = vunpack.c.l.b16 %v3522
    %v3862 = vunpack.c.h.b16 %v3522
    %v3863 = vunpack.c.l.b16 %v3523
    %v3864 = vunpack.c.h.b16 %v3523
    %v3865 = vunpack.c.l.b16 %v3524
    %v3866 = vunpack.c.h.b16 %v3524
    %v3867 = vunpack.c.l.b16 %v3525
    %v3868 = vunpack.c.h.b16 %v3525
    %v3869 = vunpack.c.l.b16 %v3526
    %v3870 = vunpack.c.h.b16 %v3526
    %v3871 = vunpack.c.l.b16 %v3527
    %v3872 = vunpack.c.h.b16 %v3527
    %v3873 = vunpack.c.l.b16 %v3528
    %v3874 = vunpack.c.h.b16 %v3528
    %v3875 = vunpack.c.l.b16 %v3529
    %v3876 = vunpack.c.h.b16 %v3529
    %v3877 = vunpack.c.l.b16 %v3530
    %v3878 = vunpack.c.h.b16 %v3530
    %v3879 = vunpack.c.l.b16 %v3531
    %v3880 = vunpack.c.h.b16 %v3531
    %v3881 = vunpack.c.l.b16 %v3532
    %v3882 = vunpack.c.h.b16 %v3532
    %v3883 = vunpack.c.l.b16 %v3533
    %v3884 = vunpack.c.h.b16 %v3533
    %v3885 = vunpack.c.l.b16 %v3534
    %v3886 = vunpack.c.h.b16 %v3534
    %v3887 = vunpack.c.l.b16 %v3535
    %v3888 = vunpack.c.h.b16 %v3535
    %v3889 = vunpack.c.l.b16 %v3536
    %v3890 = vunpack.c.h.b16 %v3536
    %v3891 = vunpack.c.l.b16 %v3537
    %v3892 = vunpack.c.h.b16 %v3537
    %v3893 = vunpack.c.l.b16 %v3538
    %v3894 = vunpack.c.h.b16 %v3538
    %v3895 = vunpack.c.l.b16 %v3539
    %v3896 = vunpack.c.h.b16 %v3539
    %v3897 = vunpack.c.l.b16 %v3540
    %v3898 = vunpack.c.h.b16 %v3540
    %v3899 = vunpack.c.l.b16 %v3541
    %v3900 = vunpack.c.h.b16 %v3541
    %v3901 = vunpack.c.l.b16 %v3542
    %v3902 = vunpack.c.h.b16 %v3542
    %v3903 = vunpack.c.l.b16 %v3543
    %v3904 = vunpack.c.h.b16 %v3543
    %v3905 = vunpack.c.l.b16 %v3544
    %v3906 = vunpack.c.h.b16 %v3544
    %v3907 = vunpack.c.l.b16 %v3545
    %v3908 = vunpack.c.h.b16 %v3545
    %v3909 = vunpack.c.l.b16 %v3546
    %v3910 = vunpack.c.h.b16 %v3546
    %v3911 = vunpack.c.l.b16 %v3547
    %v3912 = vunpack.c.h.b16 %v3547
    %v3913 = vunpack.c.l.b16 %v3548
    %v3914 = vunpack.c.h.b16 %v3548
    %v3915 = vunpack.c.l.b16 %v3549
    %v3916 = vunpack.c.h.b16 %v3549
    %v3917 = vunpack.c.l.b16 %v3550
    %v3918 = vunpack.c.h.b16 %v3550
    %v3919 = vunpack.c.l.b16 %v3551
    %v3920 = vunpack.c.h.b16 %v3551
    %v3921 = vunpack.c.l.b16 %v3552
    %v3922 = vunpack.c.h.b16 %v3552
    %v3923 = vunpack.c.l.b16 %v3553
    %v3924 = vunpack.c.h.b16 %v3553
    %v3925 = vunpack.c.l.b16 %v3554
    %v3926 = vunpack.c.h.b16 %v3554
    %v3927 = vunpack.c.l.b16 %v3555
    %v3928 = vunpack.c.h.b16 %v3555
    %v3929 = vunpack.c.l.b16 %v3556
    %v3930 = vunpack.c.h.b16 %v3556
    %v3931 = vunpack.c.l.b16 %v3557
    %v3932 = vunpack.c.h.b16 %v3557
    %v3933 = vunpack.c.l.b16 %v3558
    %v3934 = vunpack.c.h.b16 %v3558
    %v3935 = vunpack.c.l.b16 %v3559
    %v3936 = vunpack.c.h.b16 %v3559
    %v3937 = vunpack.c.l.b16 %v3560
    %v3938 = vunpack.c.h.b16 %v3560
    %v3939 = vunpack.c.l.b16 %v3561
    %v3940 = vunpack.c.h.b16 %v3561
    %v3941 = vunpack.c.l.b16 %v3562
    %v3942 = vunpack.c.h.b16 %v3562
    %v3943 = vunpack.c.l.b16 %v3563
    %v3944 = vunpack.c.h.b16 %v3563
    %v3945 = vunpack.c.l.b16 %v3564
    %v3946 = vunpack.c.h.b16 %v3564
    %v3947 = vunpack.c.l.b16 %v3565
    %v3948 = vunpack.c.h.b16 %v3565
    %v3949 = vunpack.c.l.b16 %v3566
    %v3950 = vunpack.c.h.b16 %v3566
    %v3951 = vunpack.c.l.b16 %v3567
    %v3952 = vunpack.c.h.b16 %v3567
    %v3953 = vunpack.c.l.b16 %v3568
    %v3954 = vunpack.c.h.b16 %v3568
    %v3955 = vunpack.c.l.b16 %v3569
    %v3956 = vunpack.c.h.b16 %v3569
    %v3957 = vunpack.c.l.b16 %v3570
    %v3958 = vunpack.c.h.b16 %v3570
    %v3959 = vunpack.c.l.b16 %v3571
    %v3960 = vunpack.c.h.b16 %v3571
    %v3961 = vunpack.c.l.b16 %v3572
    %v3962 = vunpack.c.h.b16 %v3572
    %v3963 = vunpack.c.l.b16 %v3573
    %v3964 = vunpack.c.h.b16 %v3573
    %v3965 = vunpack.c.l.b16 %v3574
    %v3966 = vunpack.c.h.b16 %v3574
    %v3967 = vunpack.c.l.b16 %v3575
    %v3968 = vunpack.c.h.b16 %v3575
    %v3969 = vunpack.c.l.b16 %v3576
    %v3970 = vunpack.c.h.b16 %v3576
    %v3971 = vunpack.c.l.b16 %v3577
    %v3972 = vunpack.c.h.b16 %v3577
    %v3973 = vunpack.c.l.b16 %v3578
    %v3974 = vunpack.c.h.b16 %v3578
    %v3975 = vunpack.c.l.b16 %v3579
    %v3976 = vunpack.c.h.b16 %v3579
    %v3977 = vunpack.c.l.b16 %v3580
    %v3978 = vunpack.c.h.b16 %v3580
    %v3979 = vunpack.c.l.b16 %v3581
    %v3980 = vunpack.c.h.b16 %v3581
    %v3981 = vunpack.c.l.b16 %v3582
    %v3982 = vunpack.c.h.b16 %v3582
    %v3983 = vunpack.c.l.b16 %v3583
    %v3984 = vunpack.c.h.b16 %v3583
    %v3985 = vunpack.c.l.b16 %v3584
    %v3986 = vunpack.c.h.b16 %v3584
    %v3987 = vunpack.c.l.b16 %v3585
    %v3988 = vunpack.c.h.b16 %v3585
    %v3989 = vunpack.c.l.b16 %v3586
    %v3990 = vunpack.c.h.b16 %v3586
    %v3991 = vpack.c.b16 %v3737, %v3735
    %v3992 = vpack.c.b16 %v3738, %v3736
    %v3993 = vpack.c.b16 %v3741, %v3739
    %v3994 = vpack.c.b16 %v3742, %v3740
    %v3995 = vpack.c.b16 %v3745, %v3743
    %v3996 = vpack.c.b16 %v3746, %v3744
    %v3997 = vpack.c.b16 %v3749, %v3747
    %v3998 = vpack.c.b16 %v3750, %v3748
    %v3999 = vpack.c.b16 %v3753, %v3751
    %v4000 = vpack.c.b16 %v3754, %v3752
    %v4001 = vpack.c.b16 %v3757, %v3755
    %v4002 = vpack.c.b16 %v3758, %v3756
    %v4003 = vpack.c.b16 %v3761, %v3759
    %v4004 = vpack.c.b16 %v3762, %v3760
    %v4005 = vpack.c.b16 %v3765, %v3763
    %v4006 = vpack.c.b16 %v3766, %v3764
    %v4007 = vpack.c.b16 %v3769, %v3767
    %v4008 = vpack.c.b16 %v3770, %v3768
    %v4009 = vpack.c.b16 %v3773, %v3771
    %v4010 = vpack.c.b16 %v3774, %v3772
    %v4011 = vpack.c.b16 %v3777, %v3775
    %v4012 = vpack.c.b16 %v3778, %v3776
    %v4013 = vpack.c.b16 %v3781, %v3779
    %v4014 = vpack.c.b16 %v3782, %v3780
    %v4015 = vpack.c.b16 %v3785, %v3783
    %v4016 = vpack.c.b16 %v3786, %v3784
    %v4017 = vpack.c.b16 %v3789, %v3787
    %v4018 = vpack.c.b16 %v3790, %v3788
    %v4019 = vpack.c.b16 %v3793, %v3791
    %v4020 = vpack.c.b16 %v3794, %v3792
    %v4021 = vpack.c.b16 %v3797, %v3795
    %v4022 = vpack.c.b16 %v3798, %v3796
    %v4023 = vpack.c.b16 %v3801, %v3799
    %v4024 = vpack.c.b16 %v3802, %v3800
    %v4025 = vpack.c.b16 %v3805, %v3803
    %v4026 = vpack.c.b16 %v3806, %v3804
    %v4027 = vpack.c.b16 %v3809, %v3807
    %v4028 = vpack.c.b16 %v3810, %v3808
    %v4029 = vpack.c.b16 %v3813, %v3811
    %v4030 = vpack.c.b16 %v3814, %v3812
    %v4031 = vpack.c.b16 %v3817, %v3815
    %v4032 = vpack.c.b16 %v3818, %v3816
    %v4033 = vpack.c.b16 %v3821, %v3819
    %v4034 = vpack.c.b16 %v3822, %v3820
    %v4035 = vpack.c.b16 %v3825, %v3823
    %v4036 = vpack.c.b16 %v3826, %v3824
    %v4037 = vpack.c.b16 %v3829, %v3827
    %v4038 = vpack.c.b16 %v3830, %v3828
    %v4039 = vpack.c.b16 %v3833, %v3831
    %v4040 = vpack.c.b16 %v3834, %v3832
    %v4041 = vpack.c.b16 %v3837, %v3835
    %v4042 = vpack.c.b16 %v3838, %v3836
    %v4043 = vpack.c.b16 %v3841, %v3839
    %v4044 = vpack.c.b16 %v3842, %v3840
    %v4045 = vpack.c.b16 %v3845, %v3843
    %v4046 = vpack.c.b16 %v3846, %v3844
    %v4047 = vpack.c.b16 %v3849, %v3847
    %v4048 = vpack.c.b16 %v3850, %v3848
    %v4049 = vpack.c.b16 %v3853, %v3851
    %v4050 = vpack.c.b16 %v3854, %v3852
    %v4051 = vpack.c.b16 %v3857, %v3855
    %v4052 = vpack.c.b16 %v3858, %v3856
    %v4053 = vpack.c.b16 %v3861, %v3859
    %v4054 = vpack.c.b16 %v3862, %v3860
    %v4055 = vpack.c.b16 %v3865, %v3863
    %v4056 = vpack.c.b16 %v3866, %v3864
    %v4057 = vpack.c.b16 %v3869, %v3867
    %v4058 = vpack.c.b16 %v3870, %v3868
    %v4059 = vpack.c.b16 %v3873, %v3871
    %v4060 = vpack.c.b16 %v3874, %v3872
    %v4061 = vpack.c.b16 %v3877, %v3875
    %v4062 = vpack.c.b16 %v3878, %v3876
    %v4063 = vpack.c.b16 %v3881, %v3879
    %v4064 = vpack.c.b16 %v3882, %v3880
    %v4065 = vpack.c.b16 %v3885, %v3883
    %v4066 = vpack.c.b16 %v3886, %v3884
    %v4067 = vpack.c.b16 %v3889, %v3887
    %v4068 = vpack.c.b16 %v3890, %v3888
    %v4069 = vpack.c.b16 %v3893, %v3891
    %v4070 = vpack.c.b16 %v3894, %v3892
    %v4071 = vpack.c.b16 %v3897, %v3895
    %v4072 = vpack.c.b16 %v3898, %v3896
    %v4073 = vpack.c.b16 %v3901, %v3899
    %v4074 = vpack.c.b16 %v3902, %v3900
    %v4075 = vpack.c.b16 %v3905, %v3903
    %v4076 = vpack.c.b16 %v3906, %v3904
    %v4077 = vpack.c.b16 %v3909, %v3907
    %v4078 = vpack.c.b16 %v3910, %v3908
    %v4079 = vpack.c.b16 %v3913, %v3911
    %v4080 = vpack.c.b16 %v3914, %v3912
    %v4081 = vpack.c.b16 %v3917, %v3915
    %v4082 = vpack.c.b16 %v3918, %v3916
    %v4083 = vpack.c.b16 %v3921, %v3919
    %v4084 = vpack.c.b16 %v3922, %v3920
    %v4085 = vpack.c.b16 %v3925, %v3923
    %v4086 = vpack.c.b16 %v3926, %v3924
    %v4087 = vpack.c.b16 %v3929, %v3927
    %v4088 = vpack.c.b16 %v3930, %v3928
    %v4089 = vpack.c.b16 %v3933, %v3931
    %v4090 = vpack.c.b16 %v3934, %v3932
    %v4091 = vpack.c.b16 %v3937, %v3935
    %v4092 = vpack.c.b16 %v3938, %v3936
    %v4093 = vpack.c.b16 %v3941, %v3939
    %v4094 = vpack.c.b16 %v3942, %v3940
    %v4095 = vpack.c.b16 %v3945, %v3943
    %v4096 = vpack.c.b16 %v3946, %v3944
    %v4097 = vpack.c.b16 %v3949, %v3947
    %v4098 = vpack.c.b16 %v3950, %v3948
    %v4099 = vpack.c.b16 %v3953, %v3951
    %v4100 = vpack.c.b16 %v3954, %v3952
    %v4101 = vpack.c.b16 %v3957, %v3955
    %v4102 = vpack.c.b16 %v3958, %v3956
    %v4103 = vpack.c.b16 %v3961, %v3959
    %v4104 = vpack.c.b16 %v3962, %v3960
    %v4105 = vpack.c.b16 %v3965, %v3963
    %v4106 = vpack.c.b16 %v3966, %v3964
    %v4107 = vpack.c.b16 %v3969, %v3967
    %v4108 = vpack.c.b16 %v3970, %v3968
    %v4109 = vpack.c.b16 %v3973, %v3971
    %v4110 = vpack.c.b16 %v3974, %v3972
    %v4111 = vpack.c.b16 %v3977, %v3975
    %v4112 = vpack.c.b16 %v3978, %v3976
    %v4113 = vpack.c.b16 %v3981, %v3979
    %v4114 = vpack.c.b16 %v3982, %v3980
    %v4115 = vpack.c.b16 %v3985, %v3983
    %v4116 = vpack.c.b16 %v3986, %v3984
    %v4117 = vpack.c.b16 %v3989, %v3987
    %v4118 = vpack.c.b16 %v3990, %v3988
    %4247 = vmatprep.subr.bf16.mxu0 %v4006
    %4248 = vmatpush1.bf16.msra.mxu0 %v4005
    %4249 = vmatprep.subr.bf16.mxu0 %v4004
    %4250 = vmatpush1.bf16.msra.mxu0 %v4003
    %4251 = vmatprep.subr.bf16.mxu0 %v4002
    %4252 = vmatpush1.bf16.msra.mxu0 %v4001
    %4253 = vmatprep.subr.bf16.mxu0 %v4000
    %4254 = vmatpush1.bf16.msra.mxu0 %v3999
    %4255 = vmatprep.subr.bf16.mxu0 %v3998
    %4256 = vmatpush1.bf16.msra.mxu0 %v3997
    %4257 = vmatprep.subr.bf16.mxu0 %v3996
    %4258 = vmatpush1.bf16.msra.mxu0 %v3995
    %4259 = vmatprep.subr.bf16.mxu0 %v3994
    %4260 = vmatpush1.bf16.msra.mxu0 %v3993
    %4261 = vmatprep.subr.bf16.mxu0 %v3992
    %4262 = vmatpush1.bf16.msra.mxu0 %v3991
    %4263 = vmatprep.subr.bf16.mxu0 %v4022
    %4264 = vmatpush2.bf16.msra.mxu0 %v4021
    %4265 = vmatprep.subr.bf16.mxu0 %v4020
    %4266 = vmatpush2.bf16.msra.mxu0 %v4019
    %4267 = vmatprep.subr.bf16.mxu0 %v4018
    %4268 = vmatpush2.bf16.msra.mxu0 %v4017
    %4269 = vmatprep.subr.bf16.mxu0 %v4016
    %4270 = vmatpush2.bf16.msra.mxu0 %v4015
    %4271 = vmatprep.subr.bf16.mxu0 %v4014
    %4272 = vmatpush2.bf16.msra.mxu0 %v4013
    %4273 = vmatprep.subr.bf16.mxu0 %v4012
    %4274 = vmatpush2.bf16.msra.mxu0 %v4011
    %4275 = vmatprep.subr.bf16.mxu0 %v4010
    %4276 = vmatpush2.bf16.msra.mxu0 %v4009
    %4277 = vmatprep.subr.bf16.mxu0 %v4008
    %4278 = vmatpush2.bf16.msra.mxu0 %v4007
    %4279 = vmatprep.mubr.bf16.mxu0 %v3589
    %4280 = vmatmul.mubr.bf16.gmra.mxu0 %v3588
    %v4281 = vpop.f32.mrf.mxu0
    %v4282 = vadd.f32 %v3600, %v4281
    %v4283 = vpop.f32.mrf.mxu0
    %v4284 = vadd.f32 %v3604, %v4283
    %v4285 = vpop.f32.mrf.mxu0
    %v4286 = vpop.f32.mrf.mxu0
    %4287 = vdwg.mxu0
    %4288 = vmatprep.subr.bf16.mxu0 %v4038
    %4289 = vmatpush1.bf16.msra.mxu0 %v4037
    %4290 = vmatprep.subr.bf16.mxu0 %v4036
    %4291 = vmatpush1.bf16.msra.mxu0 %v4035
    %4292 = vmatprep.subr.bf16.mxu0 %v4034
    %4293 = vmatpush1.bf16.msra.mxu0 %v4033
    %4294 = vmatprep.subr.bf16.mxu0 %v4032
    %4295 = vmatpush1.bf16.msra.mxu0 %v4031
    %4296 = vmatprep.subr.bf16.mxu0 %v4030
    %4297 = vmatpush1.bf16.msra.mxu0 %v4029
    %4298 = vmatprep.subr.bf16.mxu0 %v4028
    %4299 = vmatpush1.bf16.msra.mxu0 %v4027
    %4300 = vmatprep.subr.bf16.mxu0 %v4026
    %4301 = vmatpush1.bf16.msra.mxu0 %v4025
    %4302 = vmatprep.subr.bf16.mxu0 %v4024
    %4303 = vmatpush1.bf16.msra.mxu0 %v4023
    %4304 = vmatprep.subr.bf16.mxu0 %v4054
    %4305 = vmatpush2.bf16.msra.mxu0 %v4053
    %4306 = vmatprep.subr.bf16.mxu0 %v4052
    %4307 = vmatpush2.bf16.msra.mxu0 %v4051
    %4308 = vmatprep.subr.bf16.mxu0 %v4050
    %4309 = vmatpush2.bf16.msra.mxu0 %v4049
    %4310 = vmatprep.subr.bf16.mxu0 %v4048
    %4311 = vmatpush2.bf16.msra.mxu0 %v4047
    %4312 = vmatprep.subr.bf16.mxu0 %v4046
    %4313 = vmatpush2.bf16.msra.mxu0 %v4045
    %4314 = vmatprep.subr.bf16.mxu0 %v4044
    %4315 = vmatpush2.bf16.msra.mxu0 %v4043
    %4316 = vmatprep.subr.bf16.mxu0 %v4042
    %4317 = vmatpush2.bf16.msra.mxu0 %v4041
    %4318 = vmatprep.subr.bf16.mxu0 %v4040
    %4319 = vmatpush2.bf16.msra.mxu0 %v4039
    %4320 = vmatprep.mubr.bf16.mxu0 %v3591
    %4321 = vmatmul.mubr.bf16.gmra.mxu0 %v3590
    %v4322 = vpop.f32.mrf.mxu0
    %v4323 = vadd.f32 %v4282, %v4322
    %v4324 = vpop.f32.mrf.mxu0
    %v4325 = vadd.f32 %v4284, %v4324
    %v4326 = vpop.f32.mrf.mxu0
    %v4327 = vpop.f32.mrf.mxu0
    %4328 = vdwg.mxu0
    %4329 = vmatprep.subr.bf16.mxu0 %v4070
    %4330 = vmatpush1.bf16.msra.mxu0 %v4069
    %4331 = vmatprep.subr.bf16.mxu0 %v4068
    %4332 = vmatpush1.bf16.msra.mxu0 %v4067
    %4333 = vmatprep.subr.bf16.mxu0 %v4066
    %4334 = vmatpush1.bf16.msra.mxu0 %v4065
    %4335 = vmatprep.subr.bf16.mxu0 %v4064
    %4336 = vmatpush1.bf16.msra.mxu0 %v4063
    %4337 = vmatprep.subr.bf16.mxu0 %v4062
    %4338 = vmatpush1.bf16.msra.mxu0 %v4061
    %4339 = vmatprep.subr.bf16.mxu0 %v4060
    %4340 = vmatpush1.bf16.msra.mxu0 %v4059
    %4341 = vmatprep.subr.bf16.mxu0 %v4058
    %4342 = vmatpush1.bf16.msra.mxu0 %v4057
    %4343 = vmatprep.subr.bf16.mxu0 %v4056
    %4344 = vmatpush1.bf16.msra.mxu0 %v4055
    %4345 = vmatprep.subr.bf16.mxu0 %v4086
    %4346 = vmatpush2.bf16.msra.mxu0 %v4085
    %4347 = vmatprep.subr.bf16.mxu0 %v4084
    %4348 = vmatpush2.bf16.msra.mxu0 %v4083
    %4349 = vmatprep.subr.bf16.mxu0 %v4082
    %4350 = vmatpush2.bf16.msra.mxu0 %v4081
    %4351 = vmatprep.subr.bf16.mxu0 %v4080
    %4352 = vmatpush2.bf16.msra.mxu0 %v4079
    %4353 = vmatprep.subr.bf16.mxu0 %v4078
    %4354 = vmatpush2.bf16.msra.mxu0 %v4077
    %4355 = vmatprep.subr.bf16.mxu0 %v4076
    %4356 = vmatpush2.bf16.msra.mxu0 %v4075
    %4357 = vmatprep.subr.bf16.mxu0 %v4074
    %4358 = vmatpush2.bf16.msra.mxu0 %v4073
    %4359 = vmatprep.subr.bf16.mxu0 %v4072
    %4360 = vmatpush2.bf16.msra.mxu0 %v4071
    %4361 = vmatprep.mubr.bf16.mxu0 %v3593
    %4362 = vmatmul.mubr.bf16.gmra.mxu0 %v3592
    %v4363 = vpop.f32.mrf.mxu0
    %v4364 = vadd.f32 %v4323, %v4363
    %v4365 = vpop.f32.mrf.mxu0
    %v4366 = vadd.f32 %v4325, %v4365
    %v4367 = vpop.f32.mrf.mxu0
    %v4368 = vpop.f32.mrf.mxu0
    %4369 = vdwg.mxu0
    %4370 = vmatprep.subr.bf16.mxu0 %v4102
    %4371 = vmatpush1.bf16.msra.mxu0 %v4101
    %4372 = vmatprep.subr.bf16.mxu0 %v4100
    %4373 = vmatpush1.bf16.msra.mxu0 %v4099
    %4374 = vmatprep.subr.bf16.mxu0 %v4098
    %4375 = vmatpush1.bf16.msra.mxu0 %v4097
    %4376 = vmatprep.subr.bf16.mxu0 %v4096
    %4377 = vmatpush1.bf16.msra.mxu0 %v4095
    %4378 = vmatprep.subr.bf16.mxu0 %v4094
    %4379 = vmatpush1.bf16.msra.mxu0 %v4093
    %4380 = vmatprep.subr.bf16.mxu0 %v4092
    %4381 = vmatpush1.bf16.msra.mxu0 %v4091
    %4382 = vmatprep.subr.bf16.mxu0 %v4090
    %4383 = vmatpush1.bf16.msra.mxu0 %v4089
    %4384 = vmatprep.subr.bf16.mxu0 %v4088
    %4385 = vmatpush1.bf16.msra.mxu0 %v4087
    %4386 = vmatprep.subr.bf16.mxu0 %v4118
    %4387 = vmatpush2.bf16.msra.mxu0 %v4117
    %4388 = vmatprep.subr.bf16.mxu0 %v4116
    %4389 = vmatpush2.bf16.msra.mxu0 %v4115
    %4390 = vmatprep.subr.bf16.mxu0 %v4114
    %4391 = vmatpush2.bf16.msra.mxu0 %v4113
    %4392 = vmatprep.subr.bf16.mxu0 %v4112
    %4393 = vmatpush2.bf16.msra.mxu0 %v4111
    %4394 = vmatprep.subr.bf16.mxu0 %v4110
    %4395 = vmatpush2.bf16.msra.mxu0 %v4109
    %4396 = vmatprep.subr.bf16.mxu0 %v4108
    %4397 = vmatpush2.bf16.msra.mxu0 %v4107
    %4398 = vmatprep.subr.bf16.mxu0 %v4106
    %4399 = vmatpush2.bf16.msra.mxu0 %v4105
    %4400 = vmatprep.subr.bf16.mxu0 %v4104
    %4401 = vmatpush2.bf16.msra.mxu0 %v4103
    %4402 = vmatprep.mubr.bf16.mxu0 %v3595
    %4403 = vmatmul.mubr.bf16.gmra.mxu0 %v3594
    %v4404 = vpop.f32.mrf.mxu0
    %v4405 = vadd.f32 %v4364, %v4404
    %v4406 = vpop.f32.mrf.mxu0
    %v4407 = vadd.f32 %v4366, %v4406
    %v4408 = vpop.f32.mrf.mxu0
    %v4409 = vpop.f32.mrf.mxu0
    %4410 = vdwg.mxu0
    %v4411 = vtanh.pop %v4405
    %v4412 = vtanh.pop %v4407
    %4413 = vst [vmem:[#allocation14] sm:$0xff] %v4411
    %4414 = vst [vmem:[#allocation14 + $0x8] sm:$0xff] %v4412
    // Predicated region
    $region50: #{tpu_custom_call.1} parent=1 // pred_check
      _
    $region51: #{tpu_custom_call.1} parent=1 // pred_check_branch
      %4416 = sbr.rel (0) target = $region53
    $region52: #{tpu_custom_call.1} parent=1 // pred_region
      %s4418 = ssub.s32 256, 256
      %4419 = vsyncadd [#allocation7], %s4418
      %s4421 = sshll.u32 [#allocation14], 4
      %s4422 = int_to_ptr.vmem [resolvable:$true] %s4421
      %4424 = dma.vmem_to_hbm [thread:$0]  %s4422, 256, %s7, [#allocation7]
    $region53: #{tpu_custom_call.1} parent=1 // pred_fallthru
      _
    // Predicated region
    $region54: #{tpu_custom_call.1} parent=1 // pred_check
      _
    $region55: #{tpu_custom_call.1} parent=1 // pred_check_branch
      %4426 = sbr.rel (0) target = $region57
    $region56: #{tpu_custom_call.1} parent=1 // pred_region
      %4427 = dma.done [#allocation7], 256
    $region57: #{tpu_custom_call.1} parent=1 // pred_fallthru
      _
    %4428 = vsyncpa [#allocation6], 1
    %4429 = vsyncpa [#allocation9], 1
    %4430 = vsyncpa [#allocation12], 1
    %4431 = vsyncpa [#allocation7], 1
  %4432 = vsyncmov [#allocation4]
  %s4433 = vpop.sfrf %4432
  %p4434 = scmp.eq.s32.totalorder %s4433, 0
  %p4435 = pneg %p4434
  %4437 = shalt.err (%p4435)
  %s4438 = scalar_lea.sflag [#allocation4], 1
  %4439 = vsyncmov %s4438
  %s4440 = vpop.sfrf %4439
  %p4441 = scmp.eq.s32.totalorder %s4440, 0
  %p4442 = pneg %p4441
  %4444 = shalt.err (%p4442)

</llo_original>
